<compile_context>
chip_gen: v6e
topology: v6e:2x2x1
jax: 0.10.0
libtpu: 0.0.40
codegen_flags: <defaults>
</compile_context>

<pallas_src>
import functools

import jax
import jax.numpy as jnp
from jax import lax
from jax.experimental import pallas as pl
from jax.experimental.pallas import tpu as pltpu

_EPS = 1e-5


def _fold_bn(gamma, beta, mean, var):
    """Fold eval-mode BatchNorm into per-channel (scale, bias)."""
    scale = gamma / jnp.sqrt(var + _EPS)
    bias = beta - mean * scale
    return scale, bias


# --------------------------- fused Pallas kernel -----------------------------

def _fused_block_kernel(x_ref, w1_ref, b1_ref, w2_ref, b2_ref, *rest,
                        stride, has_downsample):
    """Fused BasicBlock: conv3x3+BN1+ReLU -> conv3x3+BN2 -> +residual -> ReLU.

    x_ref : (1, Hp, Wp, Cin)        zero-padded NHWC input (one batch element)
    w1_ref: (3, 3*Cin, Cout)        conv1 weights, BN1 scale folded; row = kh,
                                    column = kw*Cin + ci
    b1_ref: (1, Cout)               BN1 folded bias
    w2_ref: (3, 3*Cout, Cout)       conv2 weights, BN2 scale folded
    b2_ref: (1, Cout)               BN2 folded bias
    wd_ref: (Cin, Cout)             [optional] 1x1 downsample weights, BN scale folded
    bd_ref: (1, Cout)               [optional] downsample BN folded bias
    o_ref : (1, Ho, Wo, Cout)       output tile
    h1_ref: (Ho+2, Wo+2, Cout) f32  VMEM scratch holding conv1 output (+1-px zero halo)
    """
    if has_downsample:
        wd_ref, bd_ref, o_ref, h1_ref = rest
    else:
        o_ref, h1_ref = rest

    _, Hp, Wp, Cin = x_ref.shape
    _, Ho, Wo, Cout = o_ref.shape

    def in_win(kh, kw):
        # Window of the padded input feeding tap (kh, kw); stride folded into the read.
        if stride == 1:
            return x_ref[0, pl.ds(kh, Ho), pl.ds(kw, Wo), :]
        return x_ref[0, pl.ds(kh, Ho, stride=stride),
                     pl.ds(kw, Wo, stride=stride), :]

    # ---- conv1 (3x3, stride) + BN1 (scale folded into w1) + ReLU ------------
    # kw taps folded into the contraction dim: 3 matmuls with K = 3*Cin.
    acc1 = jnp.zeros((Ho * Wo, Cout), jnp.float32)
    for kh in range(3):
        patch = jnp.concatenate([in_win(kh, kw) for kw in range(3)], axis=-1)
        acc1 = acc1 + jnp.dot(patch.reshape(Ho * Wo, 3 * Cin), w1_ref[kh],
                              preferred_element_type=jnp.float32)
    h1 = jnp.maximum(acc1 + b1_ref[...], 0.0)

    # conv1 result stays on-chip in VMEM scratch (never written to HBM); the
    # 1-pixel zero halo provides conv2's padding.
    h1_ref[...] = jnp.zeros_like(h1_ref)
    h1_ref[pl.ds(1, Ho), pl.ds(1, Wo), :] = h1.reshape(Ho, Wo, Cout)

    # ---- conv2 (3x3, stride 1) + BN2 (scale folded into w2) -----------------
    acc2 = jnp.zeros((Ho * Wo, Cout), jnp.float32)
    for kh in range(3):
        patch = jnp.concatenate(
            [h1_ref[pl.ds(kh, Ho), pl.ds(kw, Wo), :] for kw in range(3)],
            axis=-1)
        acc2 = acc2 + jnp.dot(patch.reshape(Ho * Wo, 3 * Cout), w2_ref[kh],
                              preferred_element_type=jnp.float32)

    # ---- residual (1x1 conv + BN downsample, or identity) -------------------
    if has_downsample:
        if stride == 1:
            xc = x_ref[0, pl.ds(1, Ho), pl.ds(1, Wo), :]
        else:
            xc = x_ref[0, pl.ds(1, Ho, stride=stride),
                       pl.ds(1, Wo, stride=stride), :]
        res = jnp.dot(xc.reshape(Ho * Wo, Cin), wd_ref[...],
                      preferred_element_type=jnp.float32) + bd_ref[...]
    else:
        res = x_ref[0, pl.ds(1, Ho), pl.ds(1, Wo), :]
        res = res.reshape(Ho * Wo, Cout).astype(jnp.float32)

    # attention = PluginRF(planes, genotype=...) with default kwargs
    # (spatial=False, channel=False) is the identity map.
    # TODO(synk): PluginRF's spatial NAS-cell (OPS/genotype) and channel (SE)
    # branches are not exercised by the default kwargs and are not implemented.
    out = jnp.maximum(acc2 + b2_ref[...] + res, 0.0)
    o_ref[0] = out.reshape(Ho, Wo, Cout).astype(o_ref.dtype)


# --------------------------- wrapper ------------------------------------------

def plugin_basic_block_forward(x_nchw, params, *, stride=1):
    """PluginBasicBlock forward (NCHW in/out) as one fused Pallas call."""
    x = jnp.transpose(x_nchw, (0, 2, 3, 1))  # NCHW -> NHWC
    N, H, W, Cin = x.shape
    Cout = params["w1"].shape[-1]
    has_downsample = params["down_w"] is not None
    if not has_downsample:
        assert stride == 1 and Cin == Cout, (
            "identity residual requires stride == 1 and inplanes == planes")

    Ho = (H + 2 - 3) // stride + 1
    Wo = (W + 2 - 3) // stride + 1
    Hp, Wp = H + 2, W + 2

    # Single host-side pad of the activation (conv2's padding is the zero halo
    # of the in-kernel VMEM scratch).
    x_pad = jnp.pad(x, ((0, 0), (1, 1), (1, 1), (0, 0)))

    in_specs = [
        pl.BlockSpec((1, Hp, Wp, Cin), lambda n: (n, 0, 0, 0)),
        pl.BlockSpec((3, 3 * Cin, Cout), lambda n: (0, 0, 0)),
        pl.BlockSpec((1, Cout), lambda n: (0, 0)),
        pl.BlockSpec((3, 3 * Cout, Cout), lambda n: (0, 0, 0)),
        pl.BlockSpec((1, Cout), lambda n: (0, 0)),
    ]
    args = [x_pad, params["w1"], params["b1"], params["w2"], params["b2"]]
    if has_downsample:
        in_specs += [pl.BlockSpec((Cin, Cout), lambda n: (0, 0)),
                     pl.BlockSpec((1, Cout), lambda n: (0, 0))]
        args += [params["down_w"], params["down_b"]]

    kernel = functools.partial(_fused_block_kernel, stride=stride,
                               has_downsample=has_downsample)
    # TODO(synk): for large spatial extents on v7x (64 MiB VMEM) add a second,
    # parallel row-tile grid axis with a 1-row halo instead of whole images.
    out = pl.pallas_call(
        kernel,
        out_shape=jax.ShapeDtypeStruct((N, Ho, Wo, Cout), x.dtype),
        grid=(N,),
        in_specs=in_specs,
        out_specs=pl.BlockSpec((1, Ho, Wo, Cout), lambda n: (n, 0, 0, 0)),
        scratch_shapes=[pltpu.VMEM((Ho + 2, Wo + 2, Cout), jnp.float32)],
        compiler_params=pltpu.CompilerParams(
            dimension_semantics=("parallel",)),
    )(*args)
    return jnp.transpose(out, (0, 3, 1, 2))  # NHWC -> NCHW


# --------------------------- params & reference ------------------------------

def make_params(key, inplanes, planes):
    ks = jax.random.split(key, 6)

    def conv_w(k, cout, cin, kh, kw):
        fan_in = cin * kh * kw
        return jax.random.normal(k, (cout, cin, kh, kw), jnp.float32) / jnp.sqrt(fan_in)

    def bn_stats(k, c):
        k1, k2, k3, k4 = jax.random.split(k, 4)
        gamma = 1.0 + 0.1 * jax.random.normal(k1, (c,), jnp.float32)
        beta = 0.1 * jax.random.normal(k2, (c,), jnp.float32)
        mean = 0.1 * jax.random.normal(k3, (c,), jnp.float32)
        var = jnp.abs(jax.random.normal(k4, (c,), jnp.float32)) + 0.5
        return gamma, beta, mean, var

    w1_oihw = conv_w(ks[0], planes, inplanes, 3, 3)
    w2_oihw = conv_w(ks[1], planes, planes, 3, 3)
    bn1 = bn_stats(ks[2], planes)
    bn2 = bn_stats(ks[3], planes)

    raw = {"w1": w1_oihw, "w2": w2_oihw, "bn1": bn1, "bn2": bn2,
           "down_w": None, "down_bn": None}

    def fold3x3(w_oihw, bn):
        # OIHW -> HWIO, BN scale folded into output channels, taps grouped as
        # (kh, kw*Cin + ci, co) for the K-folded matmuls.
        s, b = _fold_bn(*bn)
        w_hwio = jnp.transpose(w_oihw, (2, 3, 1, 0)) * s[None, None, None, :]
        kh, kw, cin, cout = w_hwio.shape
        return w_hwio.reshape(kh, kw * cin, cout), b.reshape(1, cout)

    w1k, b1k = fold3x3(w1_oihw, bn1)
    w2k, b2k = fold3x3(w2_oihw, bn2)
    params = {"w1": w1k, "b1": b1k, "w2": w2k, "b2": b2k,
              "down_w": None, "down_b": None}

    if inplanes != planes:
        dw_oihw = conv_w(ks[4], planes, inplanes, 1, 1)
        bnd = bn_stats(ks[5], planes)
        raw["down_w"] = dw_oihw
        raw["down_bn"] = bnd
        sd, bd = _fold_bn(*bnd)
        params["down_w"] = (jnp.transpose(dw_oihw, (2, 3, 1, 0))
                            .reshape(inplanes, planes) * sd[None, :])
        params["down_b"] = bd.reshape(1, planes)

    return raw, params


def reference_forward(x_nchw, raw, *, stride=1):
    """Plain-JAX (XLA) reference of the same forward pass, for verification."""
    def conv(x, w, s, pad):
        return lax.conv_general_dilated(
            x, w, (s, s), ((pad, pad), (pad, pad)),
            dimension_numbers=("NCHW", "OIHW", "NCHW"))

    def bn(x, gb):
        gamma, beta, mean, var = gb
        sc = gamma / jnp.sqrt(var + _EPS)
        bi = beta - mean * sc
        return x * sc[None, :, None, None] + bi[None, :, None, None]

    if raw["down_w"] is not None:
        residual = bn(conv(x_nchw, raw["down_w"], stride, 0), raw["down_bn"])
    else:
        residual = x_nchw
    out = jax.nn.relu(bn(conv(x_nchw, raw["w1"], stride, 1), raw["bn1"]))
    out = bn(conv(out, raw["w2"], 1, 1), raw["bn2"])
    out = out + residual          # attention is identity for default kwargs
    return jax.nn.relu(out)


# --------------------------- main --------------------------------------------

if __name__ == "__main__":
    key = jax.random.PRNGKey(0)

    configs = [
        # (N, inplanes, planes, H, W, stride)
        (2, 4, 8, 16, 16, 1),   # downsample (1x1 conv + BN) residual path
        (2, 8, 8, 16, 16, 1),   # identity residual path
    ]
    for idx, (N, inplanes, planes, H, W, stride) in enumerate(configs):
        k_in, k_par = jax.random.split(jax.random.fold_in(key, idx))
        x = jax.random.normal(k_in, (N, inplanes, H, W), jnp.float32)
        raw, params = make_params(k_par, inplanes, planes)

        out = plugin_basic_block_forward(x, params, stride=stride)
        out = jax.block_until_ready(out)

        ref = reference_forward(x, raw, stride=stride)
        assert out.shape == ref.shape == (N, planes, H // stride, W // stride)
        max_err = float(jnp.max(jnp.abs(out - ref)))
        assert max_err < 1e-4, f"config {idx}: max abs err {max_err}"

    print("KERNEL_OK")
</pallas_src>

<mosaic_0001>
module attributes {stable_mosaic.version = 11 : i64} {
  func.func @_fused_block_kernel(%arg0: i32, %arg1: memref<1x18x18x4xf32, #tpu.memory_space<vmem>>, %arg2: memref<3x12x8xf32, #tpu.memory_space<vmem>>, %arg3: memref<1x8xf32, #tpu.memory_space<vmem>>, %arg4: memref<3x24x8xf32, #tpu.memory_space<vmem>>, %arg5: memref<1x8xf32, #tpu.memory_space<vmem>>, %arg6: memref<4x8xf32, #tpu.memory_space<vmem>>, %arg7: memref<1x8xf32, #tpu.memory_space<vmem>>, %arg8: memref<1x16x16x8xf32, #tpu.memory_space<vmem>>, %arg9: memref<18x18x8xf32, #tpu.memory_space<vmem>>) attributes {dimension_semantics = [#tpu.dimension_semantics<parallel>], iteration_bounds = array<i64: 2>, scalar_prefetch = 0 : i64, scratch_operands = 1 : i64, tpu.core_type = #tpu.core_type<tc>, window_params = [{transform_indices = @transform_0, window_bounds = array<i64: 1, 18, 18, 4>}, {pipeline_mode = #tpu.pipeline_mode<synchronous>, transform_indices = @transform_1, window_bounds = array<i64: 3, 12, 8>}, {pipeline_mode = #tpu.pipeline_mode<synchronous>, transform_indices = @transform_2, window_bounds = array<i64: 1, 8>}, {pipeline_mode = #tpu.pipeline_mode<synchronous>, transform_indices = @transform_3, window_bounds = array<i64: 3, 24, 8>}, {pipeline_mode = #tpu.pipeline_mode<synchronous>, transform_indices = @transform_4, window_bounds = array<i64: 1, 8>}, {pipeline_mode = #tpu.pipeline_mode<synchronous>, transform_indices = @transform_5, window_bounds = array<i64: 4, 8>}, {pipeline_mode = #tpu.pipeline_mode<synchronous>, transform_indices = @transform_6, window_bounds = array<i64: 1, 8>}, {transform_indices = @transform_7, window_bounds = array<i64: 1, 16, 16, 8>}]} {
    %cst = arith.constant 0.000000e+00 : f32
    %0 = vector.broadcast %cst : f32 to vector<256x8xf32>
    %c0 = arith.constant 0 : index
    %c0_0 = arith.constant 0 : index
    %c0_1 = arith.constant 0 : index
    %c0_2 = arith.constant 0 : index
    %1 = vector.load %arg1[%c0, %c0_0, %c0_1, %c0_2] : memref<1x18x18x4xf32, #tpu.memory_space<vmem>>, vector<1x16x16x4xf32>
    %2 = vector.shape_cast %1 : vector<1x16x16x4xf32> to vector<16x16x4xf32>
    %c0_3 = arith.constant 0 : index
    %c0_4 = arith.constant 0 : index
    %c1 = arith.constant 1 : index
    %c0_5 = arith.constant 0 : index
    %3 = vector.load %arg1[%c0_3, %c0_4, %c1, %c0_5] : memref<1x18x18x4xf32, #tpu.memory_space<vmem>>, vector<1x16x16x4xf32>
    %4 = vector.shape_cast %3 : vector<1x16x16x4xf32> to vector<16x16x4xf32>
    %c0_6 = arith.constant 0 : index
    %c0_7 = arith.constant 0 : index
    %c2 = arith.constant 2 : index
    %c0_8 = arith.constant 0 : index
    %5 = vector.load %arg1[%c0_6, %c0_7, %c2, %c0_8] : memref<1x18x18x4xf32, #tpu.memory_space<vmem>>, vector<1x16x16x4xf32>
    %6 = vector.shape_cast %5 : vector<1x16x16x4xf32> to vector<16x16x4xf32>
    %7 = tpu.concatenate %2, %4, %6 in 2 : vector<16x16x4xf32>, vector<16x16x4xf32>, vector<16x16x4xf32> -> vector<16x16x12xf32>
    %8 = vector.shape_cast %7 : vector<16x16x12xf32> to vector<256x12xf32>
    %c0_9 = arith.constant 0 : index
    %c0_10 = arith.constant 0 : index
    %c0_11 = arith.constant 0 : index
    %9 = vector.load %arg2[%c0_9, %c0_10, %c0_11] : memref<3x12x8xf32, #tpu.memory_space<vmem>>, vector<1x12x8xf32>
    %10 = vector.shape_cast %9 : vector<1x12x8xf32> to vector<12x8xf32>
    %cst_12 = arith.constant dense<0.000000e+00> : vector<256x8xf32>
    %11 = tpu.matmul %8, %10, %cst_12 {dimension_numbers = #tpu.dot_dimension_numbers<[1], [0], [0], [1], [0, 0, 1, 1], [], []>} : vector<256x12xf32>, vector<12x8xf32>, vector<256x8xf32> -> vector<256x8xf32>
    %12 = arith.addf %0, %11 : vector<256x8xf32>
    %c0_13 = arith.constant 0 : index
    %c1_14 = arith.constant 1 : index
    %c0_15 = arith.constant 0 : index
    %c0_16 = arith.constant 0 : index
    %13 = vector.load %arg1[%c0_13, %c1_14, %c0_15, %c0_16] : memref<1x18x18x4xf32, #tpu.memory_space<vmem>>, vector<1x16x16x4xf32>
    %14 = vector.shape_cast %13 : vector<1x16x16x4xf32> to vector<16x16x4xf32>
    %c0_17 = arith.constant 0 : index
    %c1_18 = arith.constant 1 : index
    %c1_19 = arith.constant 1 : index
    %c0_20 = arith.constant 0 : index
    %15 = vector.load %arg1[%c0_17, %c1_18, %c1_19, %c0_20] : memref<1x18x18x4xf32, #tpu.memory_space<vmem>>, vector<1x16x16x4xf32>
    %16 = vector.shape_cast %15 : vector<1x16x16x4xf32> to vector<16x16x4xf32>
    %c0_21 = arith.constant 0 : index
    %c1_22 = arith.constant 1 : index
    %c2_23 = arith.constant 2 : index
    %c0_24 = arith.constant 0 : index
    %17 = vector.load %arg1[%c0_21, %c1_22, %c2_23, %c0_24] : memref<1x18x18x4xf32, #tpu.memory_space<vmem>>, vector<1x16x16x4xf32>
    %18 = vector.shape_cast %17 : vector<1x16x16x4xf32> to vector<16x16x4xf32>
    %19 = tpu.concatenate %14, %16, %18 in 2 : vector<16x16x4xf32>, vector<16x16x4xf32>, vector<16x16x4xf32> -> vector<16x16x12xf32>
    %20 = vector.shape_cast %19 : vector<16x16x12xf32> to vector<256x12xf32>
    %c1_25 = arith.constant 1 : index
    %c0_26 = arith.constant 0 : index
    %c0_27 = arith.constant 0 : index
    %21 = vector.load %arg2[%c1_25, %c0_26, %c0_27] : memref<3x12x8xf32, #tpu.memory_space<vmem>>, vector<1x12x8xf32>
    %22 = vector.shape_cast %21 : vector<1x12x8xf32> to vector<12x8xf32>
    %cst_28 = arith.constant dense<0.000000e+00> : vector<256x8xf32>
    %23 = tpu.matmul %20, %22, %cst_28 {dimension_numbers = #tpu.dot_dimension_numbers<[1], [0], [0], [1], [0, 0, 1, 1], [], []>} : vector<256x12xf32>, vector<12x8xf32>, vector<256x8xf32> -> vector<256x8xf32>
    %24 = arith.addf %12, %23 : vector<256x8xf32>
    %c0_29 = arith.constant 0 : index
    %c2_30 = arith.constant 2 : index
    %c0_31 = arith.constant 0 : index
    %c0_32 = arith.constant 0 : index
    %25 = vector.load %arg1[%c0_29, %c2_30, %c0_31, %c0_32] : memref<1x18x18x4xf32, #tpu.memory_space<vmem>>, vector<1x16x16x4xf32>
    %26 = vector.shape_cast %25 : vector<1x16x16x4xf32> to vector<16x16x4xf32>
    %c0_33 = arith.constant 0 : index
    %c2_34 = arith.constant 2 : index
    %c1_35 = arith.constant 1 : index
    %c0_36 = arith.constant 0 : index
    %27 = vector.load %arg1[%c0_33, %c2_34, %c1_35, %c0_36] : memref<1x18x18x4xf32, #tpu.memory_space<vmem>>, vector<1x16x16x4xf32>
    %28 = vector.shape_cast %27 : vector<1x16x16x4xf32> to vector<16x16x4xf32>
    %c0_37 = arith.constant 0 : index
    %c2_38 = arith.constant 2 : index
    %c2_39 = arith.constant 2 : index
    %c0_40 = arith.constant 0 : index
    %29 = vector.load %arg1[%c0_37, %c2_38, %c2_39, %c0_40] : memref<1x18x18x4xf32, #tpu.memory_space<vmem>>, vector<1x16x16x4xf32>
    %30 = vector.shape_cast %29 : vector<1x16x16x4xf32> to vector<16x16x4xf32>
    %31 = tpu.concatenate %26, %28, %30 in 2 : vector<16x16x4xf32>, vector<16x16x4xf32>, vector<16x16x4xf32> -> vector<16x16x12xf32>
    %32 = vector.shape_cast %31 : vector<16x16x12xf32> to vector<256x12xf32>
    %c2_41 = arith.constant 2 : index
    %c0_42 = arith.constant 0 : index
    %c0_43 = arith.constant 0 : index
    %33 = vector.load %arg2[%c2_41, %c0_42, %c0_43] : memref<3x12x8xf32, #tpu.memory_space<vmem>>, vector<1x12x8xf32>
    %34 = vector.shape_cast %33 : vector<1x12x8xf32> to vector<12x8xf32>
    %cst_44 = arith.constant dense<0.000000e+00> : vector<256x8xf32>
    %35 = tpu.matmul %32, %34, %cst_44 {dimension_numbers = #tpu.dot_dimension_numbers<[1], [0], [0], [1], [0, 0, 1, 1], [], []>} : vector<256x12xf32>, vector<12x8xf32>, vector<256x8xf32> -> vector<256x8xf32>
    %36 = arith.addf %24, %35 : vector<256x8xf32>
    %c0_45 = arith.constant 0 : index
    %c0_46 = arith.constant 0 : index
    %37 = vector.load %arg3[%c0_45, %c0_46] : memref<1x8xf32, #tpu.memory_space<vmem>>, vector<1x8xf32>
    %38 = vector.broadcast %37 : vector<1x8xf32> to vector<256x8xf32>
    %39 = arith.addf %36, %38 : vector<256x8xf32>
    %cst_47 = arith.constant 0.000000e+00 : f32
    %40 = vector.broadcast %cst_47 : f32 to vector<256x8xf32>
    %41 = arith.maximumf %39, %40 : vector<256x8xf32>
    %cst_48 = arith.constant 0.000000e+00 : f32
    %42 = vector.broadcast %cst_48 : f32 to vector<18x18x8xf32>
    %c0_49 = arith.constant 0 : index
    %c0_50 = arith.constant 0 : index
    %c0_51 = arith.constant 0 : index
    %43 = vector.load %arg9[%c0_49, %c0_50, %c0_51] : memref<18x18x8xf32, #tpu.memory_space<vmem>>, vector<18x18x8xf32>
    tpu.vector_store %arg9[%c0_49, %c0_50, %c0_51], %42 {strides = array<i32>} : memref<18x18x8xf32, #tpu.memory_space<vmem>>, vector<18x18x8xf32>,
    %44 = vector.shape_cast %41 : vector<256x8xf32> to vector<16x16x8xf32>
    %c1_52 = arith.constant 1 : index
    %c1_53 = arith.constant 1 : index
    %c0_54 = arith.constant 0 : index
    %45 = vector.load %arg9[%c1_52, %c1_53, %c0_54] : memref<18x18x8xf32, #tpu.memory_space<vmem>>, vector<16x16x8xf32>
    tpu.vector_store %arg9[%c1_52, %c1_53, %c0_54], %44 {strides = array<i32>} : memref<18x18x8xf32, #tpu.memory_space<vmem>>, vector<16x16x8xf32>,
    %cst_55 = arith.constant 0.000000e+00 : f32
    %46 = vector.broadcast %cst_55 : f32 to vector<256x8xf32>
    %c0_56 = arith.constant 0 : index
    %c0_57 = arith.constant 0 : index
    %c0_58 = arith.constant 0 : index
    %47 = vector.load %arg9[%c0_56, %c0_57, %c0_58] : memref<18x18x8xf32, #tpu.memory_space<vmem>>, vector<16x16x8xf32>
    %c0_59 = arith.constant 0 : index
    %c1_60 = arith.constant 1 : index
    %c0_61 = arith.constant 0 : index
    %48 = vector.load %arg9[%c0_59, %c1_60, %c0_61] : memref<18x18x8xf32, #tpu.memory_space<vmem>>, vector<16x16x8xf32>
    %c0_62 = arith.constant 0 : index
    %c2_63 = arith.constant 2 : index
    %c0_64 = arith.constant 0 : index
    %49 = vector.load %arg9[%c0_62, %c2_63, %c0_64] : memref<18x18x8xf32, #tpu.memory_space<vmem>>, vector<16x16x8xf32>
    %50 = tpu.concatenate %47, %48, %49 in 2 : vector<16x16x8xf32>, vector<16x16x8xf32>, vector<16x16x8xf32> -> vector<16x16x24xf32>
    %51 = vector.shape_cast %50 : vector<16x16x24xf32> to vector<256x24xf32>
    %c0_65 = arith.constant 0 : index
    %c0_66 = arith.constant 0 : index
    %c0_67 = arith.constant 0 : index
    %52 = vector.load %arg4[%c0_65, %c0_66, %c0_67] : memref<3x24x8xf32, #tpu.memory_space<vmem>>, vector<1x24x8xf32>
    %53 = vector.shape_cast %52 : vector<1x24x8xf32> to vector<24x8xf32>
    %cst_68 = arith.constant dense<0.000000e+00> : vector<256x8xf32>
    %54 = tpu.matmul %51, %53, %cst_68 {dimension_numbers = #tpu.dot_dimension_numbers<[1], [0], [0], [1], [0, 0, 1, 1], [], []>} : vector<256x24xf32>, vector<24x8xf32>, vector<256x8xf32> -> vector<256x8xf32>
    %55 = arith.addf %46, %54 : vector<256x8xf32>
    %c1_69 = arith.constant 1 : index
    %c0_70 = arith.constant 0 : index
    %c0_71 = arith.constant 0 : index
    %56 = vector.load %arg9[%c1_69, %c0_70, %c0_71] : memref<18x18x8xf32, #tpu.memory_space<vmem>>, vector<16x16x8xf32>
    %c1_72 = arith.constant 1 : index
    %c1_73 = arith.constant 1 : index
    %c0_74 = arith.constant 0 : index
    %57 = vector.load %arg9[%c1_72, %c1_73, %c0_74] : memref<18x18x8xf32, #tpu.memory_space<vmem>>, vector<16x16x8xf32>
    %c1_75 = arith.constant 1 : index
    %c2_76 = arith.constant 2 : index
    %c0_77 = arith.constant 0 : index
    %58 = vector.load %arg9[%c1_75, %c2_76, %c0_77] : memref<18x18x8xf32, #tpu.memory_space<vmem>>, vector<16x16x8xf32>
    %59 = tpu.concatenate %56, %57, %58 in 2 : vector<16x16x8xf32>, vector<16x16x8xf32>, vector<16x16x8xf32> -> vector<16x16x24xf32>
    %60 = vector.shape_cast %59 : vector<16x16x24xf32> to vector<256x24xf32>
    %c1_78 = arith.constant 1 : index
    %c0_79 = arith.constant 0 : index
    %c0_80 = arith.constant 0 : index
    %61 = vector.load %arg4[%c1_78, %c0_79, %c0_80] : memref<3x24x8xf32, #tpu.memory_space<vmem>>, vector<1x24x8xf32>
    %62 = vector.shape_cast %61 : vector<1x24x8xf32> to vector<24x8xf32>
    %cst_81 = arith.constant dense<0.000000e+00> : vector<256x8xf32>
    %63 = tpu.matmul %60, %62, %cst_81 {dimension_numbers = #tpu.dot_dimension_numbers<[1], [0], [0], [1], [0, 0, 1, 1], [], []>} : vector<256x24xf32>, vector<24x8xf32>, vector<256x8xf32> -> vector<256x8xf32>
    %64 = arith.addf %55, %63 : vector<256x8xf32>
    %c2_82 = arith.constant 2 : index
    %c0_83 = arith.constant 0 : index
    %c0_84 = arith.constant 0 : index
    %65 = vector.load %arg9[%c2_82, %c0_83, %c0_84] : memref<18x18x8xf32, #tpu.memory_space<vmem>>, vector<16x16x8xf32>
    %c2_85 = arith.constant 2 : index
    %c1_86 = arith.constant 1 : index
    %c0_87 = arith.constant 0 : index
    %66 = vector.load %arg9[%c2_85, %c1_86, %c0_87] : memref<18x18x8xf32, #tpu.memory_space<vmem>>, vector<16x16x8xf32>
    %c2_88 = arith.constant 2 : index
    %c2_89 = arith.constant 2 : index
    %c0_90 = arith.constant 0 : index
    %67 = vector.load %arg9[%c2_88, %c2_89, %c0_90] : memref<18x18x8xf32, #tpu.memory_space<vmem>>, vector<16x16x8xf32>
    %68 = tpu.concatenate %65, %66, %67 in 2 : vector<16x16x8xf32>, vector<16x16x8xf32>, vector<16x16x8xf32> -> vector<16x16x24xf32>
    %69 = vector.shape_cast %68 : vector<16x16x24xf32> to vector<256x24xf32>
    %c2_91 = arith.constant 2 : index
    %c0_92 = arith.constant 0 : index
    %c0_93 = arith.constant 0 : index
    %70 = vector.load %arg4[%c2_91, %c0_92, %c0_93] : memref<3x24x8xf32, #tpu.memory_space<vmem>>, vector<1x24x8xf32>
    %71 = vector.shape_cast %70 : vector<1x24x8xf32> to vector<24x8xf32>
    %cst_94 = arith.constant dense<0.000000e+00> : vector<256x8xf32>
    %72 = tpu.matmul %69, %71, %cst_94 {dimension_numbers = #tpu.dot_dimension_numbers<[1], [0], [0], [1], [0, 0, 1, 1], [], []>} : vector<256x24xf32>, vector<24x8xf32>, vector<256x8xf32> -> vector<256x8xf32>
    %73 = arith.addf %64, %72 : vector<256x8xf32>
    %c0_95 = arith.constant 0 : index
    %c1_96 = arith.constant 1 : index
    %c1_97 = arith.constant 1 : index
    %c0_98 = arith.constant 0 : index
    %74 = vector.load %arg1[%c0_95, %c1_96, %c1_97, %c0_98] : memref<1x18x18x4xf32, #tpu.memory_space<vmem>>, vector<1x16x16x4xf32>
    %75 = vector.shape_cast %74 : vector<1x16x16x4xf32> to vector<16x16x4xf32>
    %76 = vector.shape_cast %75 : vector<16x16x4xf32> to vector<256x4xf32>
    %c0_99 = arith.constant 0 : index
    %c0_100 = arith.constant 0 : index
    %77 = vector.load %arg6[%c0_99, %c0_100] : memref<4x8xf32, #tpu.memory_space<vmem>>, vector<4x8xf32>
    %cst_101 = arith.constant dense<0.000000e+00> : vector<256x8xf32>
    %78 = tpu.matmul %76, %77, %cst_101 {dimension_numbers = #tpu.dot_dimension_numbers<[1], [0], [0], [1], [0, 0, 1, 1], [], []>} : vector<256x4xf32>, vector<4x8xf32>, vector<256x8xf32> -> vector<256x8xf32>
    %c0_102 = arith.constant 0 : index
    %c0_103 = arith.constant 0 : index
    %79 = vector.load %arg7[%c0_102, %c0_103] : memref<1x8xf32, #tpu.memory_space<vmem>>, vector<1x8xf32>
    %80 = vector.broadcast %79 : vector<1x8xf32> to vector<256x8xf32>
    %81 = arith.addf %78, %80 : vector<256x8xf32>
    %c0_104 = arith.constant 0 : index
    %c0_105 = arith.constant 0 : index
    %82 = vector.load %arg5[%c0_104, %c0_105] : memref<1x8xf32, #tpu.memory_space<vmem>>, vector<1x8xf32>
    %83 = vector.broadcast %82 : vector<1x8xf32> to vector<256x8xf32>
    %84 = arith.addf %73, %83 : vector<256x8xf32>
    %85 = arith.addf %84, %81 : vector<256x8xf32>
    %cst_106 = arith.constant 0.000000e+00 : f32
    %86 = vector.broadcast %cst_106 : f32 to vector<256x8xf32>
    %87 = arith.maximumf %85, %86 : vector<256x8xf32>
    %88 = vector.shape_cast %87 : vector<256x8xf32> to vector<16x16x8xf32>
    %c0_107 = arith.constant 0 : index
    %c0_108 = arith.constant 0 : index
    %c0_109 = arith.constant 0 : index
    %c0_110 = arith.constant 0 : index
    %89 = vector.load %arg8[%c0_107, %c0_108, %c0_109, %c0_110] : memref<1x16x16x8xf32, #tpu.memory_space<vmem>>, vector<1x16x16x8xf32>
    %90 = vector.shape_cast %89 : vector<1x16x16x8xf32> to vector<16x16x8xf32>
    %91 = vector.shape_cast %88 : vector<16x16x8xf32> to vector<1x16x16x8xf32>
    tpu.vector_store %arg8[%c0_107, %c0_108, %c0_109, %c0_110], %91 {strides = array<i32>} : memref<1x16x16x8xf32, #tpu.memory_space<vmem>>, vector<1x16x16x8xf32>,
    return
  }
  func.func @transform_0(%arg0: i32) -> (i32, i32, i32, i32) {
    %c0_i32 = arith.constant 0 : i32
    %c0_i32_0 = arith.constant 0 : i32
    %c0_i32_1 = arith.constant 0 : i32
    %c0_i32_2 = arith.constant 0 : i32
    return %arg0, %c0_i32, %c0_i32_0, %c0_i32_1 : i32, i32, i32, i32
  }
  func.func @transform_1(%arg0: i32) -> (i32, i32, i32) {
    %c0_i32 = arith.constant 0 : i32
    %c0_i32_0 = arith.constant 0 : i32
    %c0_i32_1 = arith.constant 0 : i32
    %c0_i32_2 = arith.constant 0 : i32
    return %c0_i32, %c0_i32_0, %c0_i32_1 : i32, i32, i32
  }
  func.func @transform_2(%arg0: i32) -> (i32, i32) {
    %c0_i32 = arith.constant 0 : i32
    %c0_i32_0 = arith.constant 0 : i32
    %c0_i32_1 = arith.constant 0 : i32
    return %c0_i32, %c0_i32_0 : i32, i32
  }
  func.func @transform_3(%arg0: i32) -> (i32, i32, i32) {
    %c0_i32 = arith.constant 0 : i32
    %c0_i32_0 = arith.constant 0 : i32
    %c0_i32_1 = arith.constant 0 : i32
    %c0_i32_2 = arith.constant 0 : i32
    return %c0_i32, %c0_i32_0, %c0_i32_1 : i32, i32, i32
  }
  func.func @transform_4(%arg0: i32) -> (i32, i32) {
    %c0_i32 = arith.constant 0 : i32
    %c0_i32_0 = arith.constant 0 : i32
    %c0_i32_1 = arith.constant 0 : i32
    return %c0_i32, %c0_i32_0 : i32, i32
  }
  func.func @transform_5(%arg0: i32) -> (i32, i32) {
    %c0_i32 = arith.constant 0 : i32
    %c0_i32_0 = arith.constant 0 : i32
    %c0_i32_1 = arith.constant 0 : i32
    return %c0_i32, %c0_i32_0 : i32, i32
  }
  func.func @transform_6(%arg0: i32) -> (i32, i32) {
    %c0_i32 = arith.constant 0 : i32
    %c0_i32_0 = arith.constant 0 : i32
    %c0_i32_1 = arith.constant 0 : i32
    return %c0_i32, %c0_i32_0 : i32, i32
  }
  func.func @transform_7(%arg0: i32) -> (i32, i32, i32, i32) {
    %c0_i32 = arith.constant 0 : i32
    %c0_i32_0 = arith.constant 0 : i32
    %c0_i32_1 = arith.constant 0 : i32
    %c0_i32_2 = arith.constant 0 : i32
    return %arg0, %c0_i32, %c0_i32_0, %c0_i32_1 : i32, i32, i32, i32
  }
}

</mosaic_0001>

<llo_original>
// kernel: tpu_custom_call.1
$region0: #{tpu_custom_call.1}
  #allocation0 [shape = 'u32[]', space=smem, size = 0x4, offset = 0x4, fixed_abs, tag = 'smem constant byte address 0x4 - core index']
  #allocation1 [shape = 'u32[144,128]{1,0:T(1,128)}', space=vmem, size = 0x12000, scoped, tag = 'internal scratch']
  #allocation2 [shape = 'f32[18,18,8]{2,1,0:T(8,128)}', space=vmem, size = 0x36000, scoped, tag = 'scratch operand']
  %s0 = inlined_call_operand.vmem [shape: f32[2,18,18,4], index: 0, kind: input, shape index: {}]
  %s1 = inlined_call_operand.vmem [shape: f32[3,12,8], index: 1, kind: input, shape index: {}]
  %s2 = inlined_call_operand.vmem [shape: f32[1,8], index: 2, kind: input, shape index: {}]
  %s3 = inlined_call_operand.vmem [shape: f32[3,24,8], index: 3, kind: input, shape index: {}]
  %s4 = inlined_call_operand.vmem [shape: f32[1,8], index: 4, kind: input, shape index: {}]
  %s5 = inlined_call_operand.vmem [shape: f32[4,8], index: 5, kind: input, shape index: {}]
  %s6 = inlined_call_operand.vmem [shape: f32[1,8], index: 6, kind: input, shape index: {}]
  %s7 = inlined_call_operand.vmem [shape: f32[2,16,16,8], index: 7, kind: output, shape index: {}]
  %s8 = sld [smem:[#allocation0]]
  $region61: #{tpu_custom_call.1} parent=0
    _
  %s10 = ssub.s32 1, %s8
  %s11 = scalar_select 0, %s10, %s8
  loop: start=0, step=1, limit=4
  $region2: #{tpu_custom_call.1} parent=0 // loop_pre_header
    _
  $region3: #{tpu_custom_call.1} parent=0 // loop_header
    %s13 = sphi 0, %s17
    %p14 = scmp.ge.s32.totalorder %s13, 4
    %s23 = sphi 0, %s25
    %s26 = sphi 0, %s23
    %s27 = sphi 0, %s26
    %s43 = sphi 0, %s27
    %s47 = sphi 0, %s47
    %s49 = sphi 0, %s47
    %s50 = sphi 0, %s49
    %s64 = sphi 0, %s50
    %s68 = sphi 0, %s68
    %s70 = sphi 0, %s68
    %s71 = sphi 0, %s70
    %s85 = sphi 0, %s71
    %s89 = sphi 0, %s89
    %s91 = sphi 0, %s89
    %s92 = sphi 0, %s91
    %s106 = sphi 0, %s92
    %s110 = sphi 0, %s110
    %s112 = sphi 0, %s110
    %s113 = sphi 0, %s112
    %s127 = sphi 0, %s113
    %s131 = sphi 0, %s131
    %s133 = sphi 0, %s131
    %s134 = sphi 0, %s133
    %s148 = sphi 0, %s134
    %s152 = sphi 0, %s152
    %s154 = sphi 0, %s152
    %s155 = sphi 0, %s154
    %s169 = sphi 0, %s155
    %s175 = sphi 0, %s177
    %s178 = sphi 0, %s175
    %s179 = sphi 0, %s178
    %s195 = sphi 0, %s179
  $region4: #{tpu_custom_call.1} parent=0 // loop_header_branch
    %16 = sbr.rel (%p14) target = $region8
  $region5: #{tpu_custom_call.1} parent=0 // loop_body
    %s18 = ssub.s32 %s13, 1
    %s19 = ssub.s32 %s13, 2
    %s20 = sadd.s32 %s13, 1
    %s21 = ssub.s32 %s13, %s20
    %p22 = scmp.eq.s32.totalorder %s21, 0
    %s24 = sadd.s32 %s23, 1
    %s25 = scalar_select %p22, %s23, %s24
    %p28 = pneg %p22
    %p29 = scmp.eq.s32.totalorder %s13, 1
    %p30 = por %p28, %p29
    %p31 = scmp.ne.s32.totalorder %s23, %s26
    %p32 = scmp.eq.s32.totalorder %s13, 0
    %p33 = por %p31, %p32
    %p34 = scmp.ne.s32.totalorder %s23, %s26
    %p35 = scmp.eq.s32.totalorder %s18, 1
    %p36 = por %p34, %p35
    %p37 = scmp.ne.s32.totalorder %s26, %s27
    %p38 = scmp.eq.s32.totalorder %s18, 0
    %p39 = por %p37, %p38
    %p40 = scmp.ne.s32.totalorder %s26, %s27
    %p41 = scmp.eq.s32.totalorder %s19, 1
    %p42 = por %p40, %p41
    %p44 = scmp.ne.s32.totalorder %s27, %s43
    %p45 = scmp.eq.s32.totalorder %s19, 0
    %p46 = por %p44, %p45
    %s48 = sadd.s32 %s47, 1
    %p51 = scmp.eq.s32.totalorder %s13, 1
    %p52 = scmp.ne.s32.totalorder %s47, %s49
    %p53 = scmp.eq.s32.totalorder %s13, 0
    %p54 = por %p52, %p53
    %p55 = scmp.ne.s32.totalorder %s47, %s49
    %p56 = scmp.eq.s32.totalorder %s18, 1
    %p57 = por %p55, %p56
    %p58 = scmp.ne.s32.totalorder %s49, %s50
    %p59 = scmp.eq.s32.totalorder %s18, 0
    %p60 = por %p58, %p59
    %p61 = scmp.ne.s32.totalorder %s49, %s50
    %p62 = scmp.eq.s32.totalorder %s19, 1
    %p63 = por %p61, %p62
    %p65 = scmp.ne.s32.totalorder %s50, %s64
    %p66 = scmp.eq.s32.totalorder %s19, 0
    %p67 = por %p65, %p66
    %s69 = sadd.s32 %s68, 1
    %p72 = scmp.eq.s32.totalorder %s13, 1
    %p73 = scmp.ne.s32.totalorder %s68, %s70
    %p74 = scmp.eq.s32.totalorder %s13, 0
    %p75 = por %p73, %p74
    %p76 = scmp.ne.s32.totalorder %s68, %s70
    %p77 = scmp.eq.s32.totalorder %s18, 1
    %p78 = por %p76, %p77
    %p79 = scmp.ne.s32.totalorder %s70, %s71
    %p80 = scmp.eq.s32.totalorder %s18, 0
    %p81 = por %p79, %p80
    %p82 = scmp.ne.s32.totalorder %s70, %s71
    %p83 = scmp.eq.s32.totalorder %s19, 1
    %p84 = por %p82, %p83
    %p86 = scmp.ne.s32.totalorder %s71, %s85
    %p87 = scmp.eq.s32.totalorder %s19, 0
    %p88 = por %p86, %p87
    %s90 = sadd.s32 %s89, 1
    %p93 = scmp.eq.s32.totalorder %s13, 1
    %p94 = scmp.ne.s32.totalorder %s89, %s91
    %p95 = scmp.eq.s32.totalorder %s13, 0
    %p96 = por %p94, %p95
    %p97 = scmp.ne.s32.totalorder %s89, %s91
    %p98 = scmp.eq.s32.totalorder %s18, 1
    %p99 = por %p97, %p98
    %p100 = scmp.ne.s32.totalorder %s91, %s92
    %p101 = scmp.eq.s32.totalorder %s18, 0
    %p102 = por %p100, %p101
    %p103 = scmp.ne.s32.totalorder %s91, %s92
    %p104 = scmp.eq.s32.totalorder %s19, 1
    %p105 = por %p103, %p104
    %p107 = scmp.ne.s32.totalorder %s92, %s106
    %p108 = scmp.eq.s32.totalorder %s19, 0
    %p109 = por %p107, %p108
    %s111 = sadd.s32 %s110, 1
    %p114 = scmp.eq.s32.totalorder %s13, 1
    %p115 = scmp.ne.s32.totalorder %s110, %s112
    %p116 = scmp.eq.s32.totalorder %s13, 0
    %p117 = por %p115, %p116
    %p118 = scmp.ne.s32.totalorder %s110, %s112
    %p119 = scmp.eq.s32.totalorder %s18, 1
    %p120 = por %p118, %p119
    %p121 = scmp.ne.s32.totalorder %s112, %s113
    %p122 = scmp.eq.s32.totalorder %s18, 0
    %p123 = por %p121, %p122
    %p124 = scmp.ne.s32.totalorder %s112, %s113
    %p125 = scmp.eq.s32.totalorder %s19, 1
    %p126 = por %p124, %p125
    %p128 = scmp.ne.s32.totalorder %s113, %s127
    %p129 = scmp.eq.s32.totalorder %s19, 0
    %p130 = por %p128, %p129
    %s132 = sadd.s32 %s131, 1
    %p135 = scmp.eq.s32.totalorder %s13, 1
    %p136 = scmp.ne.s32.totalorder %s131, %s133
    %p137 = scmp.eq.s32.totalorder %s13, 0
    %p138 = por %p136, %p137
    %p139 = scmp.ne.s32.totalorder %s131, %s133
    %p140 = scmp.eq.s32.totalorder %s18, 1
    %p141 = por %p139, %p140
    %p142 = scmp.ne.s32.totalorder %s133, %s134
    %p143 = scmp.eq.s32.totalorder %s18, 0
    %p144 = por %p142, %p143
    %p145 = scmp.ne.s32.totalorder %s133, %s134
    %p146 = scmp.eq.s32.totalorder %s19, 1
    %p147 = por %p145, %p146
    %p149 = scmp.ne.s32.totalorder %s134, %s148
    %p150 = scmp.eq.s32.totalorder %s19, 0
    %p151 = por %p149, %p150
    %s153 = sadd.s32 %s152, 1
    %p156 = scmp.eq.s32.totalorder %s13, 1
    %p157 = scmp.ne.s32.totalorder %s152, %s154
    %p158 = scmp.eq.s32.totalorder %s13, 0
    %p159 = por %p157, %p158
    %p160 = scmp.ne.s32.totalorder %s152, %s154
    %p161 = scmp.eq.s32.totalorder %s18, 1
    %p162 = por %p160, %p161
    %p163 = scmp.ne.s32.totalorder %s154, %s155
    %p164 = scmp.eq.s32.totalorder %s18, 0
    %p165 = por %p163, %p164
    %p166 = scmp.ne.s32.totalorder %s154, %s155
    %p167 = scmp.eq.s32.totalorder %s19, 1
    %p168 = por %p166, %p167
    %p170 = scmp.ne.s32.totalorder %s155, %s169
    %p171 = scmp.eq.s32.totalorder %s19, 0
    %p172 = por %p170, %p171
    %s173 = ssub.s32 %s13, %s20
    %p174 = scmp.eq.s32.totalorder %s173, 0
    %s176 = sadd.s32 %s175, 1
    %s177 = scalar_select %p174, %s175, %s176
    %p180 = pneg %p174
    %p181 = scmp.eq.s32.totalorder %s13, 1
    %p182 = por %p180, %p181
    %p183 = scmp.ne.s32.totalorder %s175, %s178
    %p184 = scmp.eq.s32.totalorder %s13, 0
    %p185 = por %p183, %p184
    %p186 = scmp.ne.s32.totalorder %s175, %s178
    %p187 = scmp.eq.s32.totalorder %s18, 1
    %p188 = por %p186, %p187
    %p189 = scmp.ne.s32.totalorder %s178, %s179
    %p190 = scmp.eq.s32.totalorder %s18, 0
    %p191 = por %p189, %p190
    %p192 = scmp.ne.s32.totalorder %s178, %s179
    %p193 = scmp.eq.s32.totalorder %s19, 1
    %p194 = por %p192, %p193
    %p196 = scmp.ne.s32.totalorder %s179, %s195
    %p197 = scmp.eq.s32.totalorder %s19, 0
    %p198 = por %p196, %p197
    %p199 = scmp.le.s32.totalorder 1, %s13
    %p200 = scmp.lt.s32.totalorder %s13, 3
    %p201 = pnand %p199, %p200
    %p202 = pneg %p201
    // Predicated region
    $region9: #{tpu_custom_call.1} parent=5 // pred_check
      _
    $region10: #{tpu_custom_call.1} parent=5 // pred_check_branch
      %204 = sbr.rel (%p201) target = $region12
    $region11: #{tpu_custom_call.1} parent=5 // pred_region
      %s205 = ssub.s32 %s13, 1
      // Predicated region
      $region13: #{tpu_custom_call.1} parent=11 // pred_check
        %p206 = pneg %p60
      $region14: #{tpu_custom_call.1} parent=11 // pred_check_branch
        %208 = sbr.rel (%p206) target = $region16
      $region15: #{tpu_custom_call.1} parent=11 // pred_region
        _
      $region16: #{tpu_custom_call.1} parent=11 // pred_fallthru
        _
      // Predicated region
      $region17: #{tpu_custom_call.1} parent=11 // pred_check
        %p209 = pneg %p81
      $region18: #{tpu_custom_call.1} parent=11 // pred_check_branch
        %211 = sbr.rel (%p209) target = $region20
      $region19: #{tpu_custom_call.1} parent=11 // pred_region
        _
      $region20: #{tpu_custom_call.1} parent=11 // pred_fallthru
        _
      // Predicated region
      $region21: #{tpu_custom_call.1} parent=11 // pred_check
        %p212 = pneg %p102
      $region22: #{tpu_custom_call.1} parent=11 // pred_check_branch
        %214 = sbr.rel (%p212) target = $region24
      $region23: #{tpu_custom_call.1} parent=11 // pred_region
        _
      $region24: #{tpu_custom_call.1} parent=11 // pred_fallthru
        _
      // Predicated region
      $region25: #{tpu_custom_call.1} parent=11 // pred_check
        %p215 = pneg %p123
      $region26: #{tpu_custom_call.1} parent=11 // pred_check_branch
        %217 = sbr.rel (%p215) target = $region28
      $region27: #{tpu_custom_call.1} parent=11 // pred_region
        _
      $region28: #{tpu_custom_call.1} parent=11 // pred_fallthru
        _
      // Predicated region
      $region29: #{tpu_custom_call.1} parent=11 // pred_check
        %p218 = pneg %p144
      $region30: #{tpu_custom_call.1} parent=11 // pred_check_branch
        %220 = sbr.rel (%p218) target = $region32
      $region31: #{tpu_custom_call.1} parent=11 // pred_region
        _
      $region32: #{tpu_custom_call.1} parent=11 // pred_fallthru
        _
      // Predicated region
      $region33: #{tpu_custom_call.1} parent=11 // pred_check
        %p221 = pneg %p165
      $region34: #{tpu_custom_call.1} parent=11 // pred_check_branch
        %223 = sbr.rel (%p221) target = $region36
      $region35: #{tpu_custom_call.1} parent=11 // pred_region
        _
      $region36: #{tpu_custom_call.1} parent=11 // pred_fallthru
        _
    $region12: #{tpu_custom_call.1} parent=5 // pred_fallthru
      _
    %p224 = scmp.lt.s32.totalorder %s13, 2
    // Predicated region
    $region37: #{tpu_custom_call.1} parent=5 // pred_check
      %p225 = pneg %p224
    $region38: #{tpu_custom_call.1} parent=5 // pred_check_branch
      %227 = sbr.rel (%p225) target = $region40
    $region39: #{tpu_custom_call.1} parent=5 // pred_region
      // Predicated region
      $region41: #{tpu_custom_call.1} parent=39 // pred_check
        %p228 = pneg %p33
      $region42: #{tpu_custom_call.1} parent=39 // pred_check_branch
        %230 = sbr.rel (%p228) target = $region44
      $region43: #{tpu_custom_call.1} parent=39 // pred_region
        %p231 = scmp.lt.s32.totalorder %s13, 1
        %s232 = scalar_select %p231, %s13, 1
        %s233 = smul.addr %s232, 54
        %s234 = smul.addr %s233, 8
        %s235 = scalar_lea.vmem %s0, %s234
      $region44: #{tpu_custom_call.1} parent=39 // pred_fallthru
        _
    $region40: #{tpu_custom_call.1} parent=5 // pred_fallthru
      _
    %p236 = scmp.le.s32.totalorder 1, %s13
    %p237 = scmp.lt.s32.totalorder %s13, 3
    %p238 = pnand %p236, %p237
    %p239 = pneg %p238
    // Predicated region
    $region45: #{tpu_custom_call.1} parent=5 // pred_check
      _
    $region46: #{tpu_custom_call.1} parent=5 // pred_check_branch
      %241 = sbr.rel (%p238) target = $region48
    $region47: #{tpu_custom_call.1} parent=5 // pred_region
      %s242 = ssub.s32 %s13, 1
      %p243 = scmp.lt.s32.totalorder %s18, 1
      %s244 = scalar_select %p243, %s18, 1
      %s245 = smul.addr %s244, 54
      %s246 = smul.addr %s245, 8
      %s247 = scalar_lea.vmem %s0, %s246
      %p248 = pneg %p39
      %p249 = pneg %p36
      %p250 = pneg %p60
      %p251 = pneg %p57
      %p252 = pneg %p81
      %p253 = pneg %p78
      %p254 = pneg %p102
      %p255 = pneg %p99
      %p256 = pneg %p123
      %p257 = pneg %p120
      %p258 = pneg %p144
      %p259 = pneg %p141
      %p260 = pneg %p165
      %p261 = pneg %p162
      %p262 = pneg %p191
      %p263 = pneg %p188
      %p264 = scmp.lt.s32.totalorder %s18, 1
      %s265 = scalar_select %p264, %s18, 1
      %s266 = smul.addr %s265, 32
      %s267 = smul.addr %s266, 8
      %s268 = scalar_lea.vmem %s7, %s267
      %p269 = scmp.lt.s32.totalorder %s18, 1
      %s270 = scalar_select %p269, %s18, 1
      %s271 = smul.addr %s270, 54
      %s272 = smul.addr %s271, 8
      %s273 = scalar_lea.vmem %s0, %s272
      %p274 = scmp.lt.s32.totalorder %s18, 1
      %s275 = scalar_select %p274, %s18, 1
      %s276 = smul.addr %s275, 32
      %s277 = smul.addr %s276, 8
      %s278 = scalar_lea.vmem %s7, %s277
      %v279 = vld [vmem:[%s273] sm:$0xff]
      %v280 = vld [vmem:[%s273 + $0x8] sm:$0xff]
      %v281 = vld [vmem:[%s273 + $0x18] sm:$0xff]
      %v282 = vld [vmem:[%s273 + $0x20] sm:$0xff]
      %v283 = vld [vmem:[%s273 + $0x30] sm:$0xff]
      %v284 = vld [vmem:[%s273 + $0x38] sm:$0xff]
      %v285 = vld [vmem:[%s273 + $0x48] sm:$0xff]
      %v286 = vld [vmem:[%s273 + $0x50] sm:$0xff]
      %v287 = vld [vmem:[%s273 + $0x60] sm:$0xff]
      %v288 = vld [vmem:[%s273 + $0x68] sm:$0xff]
      %v289 = vld [vmem:[%s273 + $0x78] sm:$0xff]
      %v290 = vld [vmem:[%s273 + $0x80] sm:$0xff]
      %v291 = vld [vmem:[%s273 + $0x90] sm:$0xff]
      %v292 = vld [vmem:[%s273 + $0x98] sm:$0xff]
      %v293 = vld [vmem:[%s273 + $0xa8] sm:$0xff]
      %v294 = vld [vmem:[%s273 + $0xb0] sm:$0xff]
      %v295 = vld [vmem:[%s273 + $0xc0] sm:$0xff]
      %v296 = vld [vmem:[%s273 + $0xc8] sm:$0xff]
      %v297 = vld [vmem:[%s273 + $0xd8] sm:$0xff]
      %v298 = vld [vmem:[%s273 + $0xe0] sm:$0xff]
      %v299 = vld [vmem:[%s273 + $0xf0] sm:$0xff]
      %v300 = vld [vmem:[%s273 + $0xf8] sm:$0xff]
      %v301 = vld [vmem:[%s273 + $0x108] sm:$0xff]
      %v302 = vld [vmem:[%s273 + $0x110] sm:$0xff]
      %v303 = vld [vmem:[%s273 + $0x120] sm:$0xff]
      %v304 = vld [vmem:[%s273 + $0x128] sm:$0xff]
      %v305 = vld [vmem:[%s273 + $0x138] sm:$0xff]
      %v306 = vld [vmem:[%s273 + $0x140] sm:$0xff]
      %v307 = vld [vmem:[%s273 + $0x150] sm:$0xff]
      %v308 = vld [vmem:[%s273 + $0x158] sm:$0xff]
      %v309 = vld [vmem:[%s273 + $0x168] sm:$0xff]
      %v310 = vld [vmem:[%s273 + $0x170] sm:$0xff]
      %v311 = vld [vmem:[%s273 + $0x1] sm:$0xff]
      %v312 = vld [vmem:[%s273 + $0x9] sm:$0xff]
      %v313 = vld [vmem:[%s273 + $0x19] sm:$0xff]
      %v314 = vld [vmem:[%s273 + $0x21] sm:$0xff]
      %v315 = vld [vmem:[%s273 + $0x31] sm:$0xff]
      %v316 = vld [vmem:[%s273 + $0x39] sm:$0xff]
      %v317 = vld [vmem:[%s273 + $0x49] sm:$0xff]
      %v318 = vld [vmem:[%s273 + $0x51] sm:$0xff]
      %v319 = vld [vmem:[%s273 + $0x61] sm:$0xff]
      %v320 = vld [vmem:[%s273 + $0x69] sm:$0xff]
      %v321 = vld [vmem:[%s273 + $0x79] sm:$0xff]
      %v322 = vld [vmem:[%s273 + $0x81] sm:$0xff]
      %v323 = vld [vmem:[%s273 + $0x91] sm:$0xff]
      %v324 = vld [vmem:[%s273 + $0x99] sm:$0xff]
      %v325 = vld [vmem:[%s273 + $0xa9] sm:$0xff]
      %v326 = vld [vmem:[%s273 + $0xb1] sm:$0xff]
      %v327 = vld [vmem:[%s273 + $0xc1] sm:$0xff]
      %v328 = vld [vmem:[%s273 + $0xc9] sm:$0xff]
      %v329 = vld [vmem:[%s273 + $0xd9] sm:$0xff]
      %v330 = vld [vmem:[%s273 + $0xe1] sm:$0xff]
      %v331 = vld [vmem:[%s273 + $0xf1] sm:$0xff]
      %v332 = vld [vmem:[%s273 + $0xf9] sm:$0xff]
      %v333 = vld [vmem:[%s273 + $0x109] sm:$0xff]
      %v334 = vld [vmem:[%s273 + $0x111] sm:$0xff]
      %v335 = vld [vmem:[%s273 + $0x121] sm:$0xff]
      %v336 = vld [vmem:[%s273 + $0x129] sm:$0xff]
      %v337 = vld [vmem:[%s273 + $0x139] sm:$0xff]
      %v338 = vld [vmem:[%s273 + $0x141] sm:$0xff]
      %v339 = vld [vmem:[%s273 + $0x151] sm:$0xff]
      %v340 = vld [vmem:[%s273 + $0x159] sm:$0xff]
      %v341 = vld [vmem:[%s273 + $0x169] sm:$0xff]
      %v342 = vld [vmem:[%s273 + $0x171] sm:$0xff]
      %v343 = vld [vmem:[%s273 + $0x2] sm:$0xff]
      %v344 = vld [vmem:[%s273 + $0xa] sm:$0xff]
      %v345 = vld [vmem:[%s273 + $0x1a] sm:$0xff]
      %v346 = vld [vmem:[%s273 + $0x22] sm:$0xff]
      %v347 = vld [vmem:[%s273 + $0x32] sm:$0xff]
      %v348 = vld [vmem:[%s273 + $0x3a] sm:$0xff]
      %v349 = vld [vmem:[%s273 + $0x4a] sm:$0xff]
      %v350 = vld [vmem:[%s273 + $0x52] sm:$0xff]
      %v351 = vld [vmem:[%s273 + $0x62] sm:$0xff]
      %v352 = vld [vmem:[%s273 + $0x6a] sm:$0xff]
      %v353 = vld [vmem:[%s273 + $0x7a] sm:$0xff]
      %v354 = vld [vmem:[%s273 + $0x82] sm:$0xff]
      %v355 = vld [vmem:[%s273 + $0x92] sm:$0xff]
      %v356 = vld [vmem:[%s273 + $0x9a] sm:$0xff]
      %v357 = vld [vmem:[%s273 + $0xaa] sm:$0xff]
      %v358 = vld [vmem:[%s273 + $0xb2] sm:$0xff]
      %v359 = vld [vmem:[%s273 + $0xc2] sm:$0xff]
      %v360 = vld [vmem:[%s273 + $0xca] sm:$0xff]
      %v361 = vld [vmem:[%s273 + $0xda] sm:$0xff]
      %v362 = vld [vmem:[%s273 + $0xe2] sm:$0xff]
      %v363 = vld [vmem:[%s273 + $0xf2] sm:$0xff]
      %v364 = vld [vmem:[%s273 + $0xfa] sm:$0xff]
      %v365 = vld [vmem:[%s273 + $0x10a] sm:$0xff]
      %v366 = vld [vmem:[%s273 + $0x112] sm:$0xff]
      %v367 = vld [vmem:[%s273 + $0x122] sm:$0xff]
      %v368 = vld [vmem:[%s273 + $0x12a] sm:$0xff]
      %v369 = vld [vmem:[%s273 + $0x13a] sm:$0xff]
      %v370 = vld [vmem:[%s273 + $0x142] sm:$0xff]
      %v371 = vld [vmem:[%s273 + $0x152] sm:$0xff]
      %v372 = vld [vmem:[%s273 + $0x15a] sm:$0xff]
      %v373 = vld [vmem:[%s273 + $0x16a] sm:$0xff]
      %v374 = vld [vmem:[%s273 + $0x172] sm:$0xff]
      %407 = vrot.lane.b32.xlu0 %v311, 4
      %v408 = vpop.permute.xlu0 %407
      %409 = vrot.lane.b32.xlu0 %v312, 4
      %v410 = vpop.permute.xlu0 %409
      %411 = vrot.lane.b32.xlu0 %v313, 4
      %v412 = vpop.permute.xlu0 %411
      %413 = vrot.lane.b32.xlu0 %v314, 4
      %v414 = vpop.permute.xlu0 %413
      %415 = vrot.lane.b32.xlu0 %v315, 4
      %v416 = vpop.permute.xlu0 %415
      %417 = vrot.lane.b32.xlu0 %v316, 4
      %v418 = vpop.permute.xlu0 %417
      %419 = vrot.lane.b32.xlu0 %v317, 4
      %v420 = vpop.permute.xlu0 %419
      %421 = vrot.lane.b32.xlu0 %v318, 4
      %v422 = vpop.permute.xlu0 %421
      %423 = vrot.lane.b32.xlu0 %v319, 4
      %v424 = vpop.permute.xlu0 %423
      %425 = vrot.lane.b32.xlu0 %v320, 4
      %v426 = vpop.permute.xlu0 %425
      %427 = vrot.lane.b32.xlu0 %v321, 4
      %v428 = vpop.permute.xlu0 %427
      %429 = vrot.lane.b32.xlu0 %v322, 4
      %v430 = vpop.permute.xlu0 %429
      %431 = vrot.lane.b32.xlu0 %v323, 4
      %v432 = vpop.permute.xlu0 %431
      %433 = vrot.lane.b32.xlu0 %v324, 4
      %v434 = vpop.permute.xlu0 %433
      %435 = vrot.lane.b32.xlu0 %v325, 4
      %v436 = vpop.permute.xlu0 %435
      %437 = vrot.lane.b32.xlu0 %v326, 4
      %v438 = vpop.permute.xlu0 %437
      %439 = vrot.lane.b32.xlu0 %v327, 4
      %v440 = vpop.permute.xlu0 %439
      %441 = vrot.lane.b32.xlu0 %v328, 4
      %v442 = vpop.permute.xlu0 %441
      %443 = vrot.lane.b32.xlu0 %v329, 4
      %v444 = vpop.permute.xlu0 %443
      %445 = vrot.lane.b32.xlu0 %v330, 4
      %v446 = vpop.permute.xlu0 %445
      %447 = vrot.lane.b32.xlu0 %v331, 4
      %v448 = vpop.permute.xlu0 %447
      %449 = vrot.lane.b32.xlu0 %v332, 4
      %v450 = vpop.permute.xlu0 %449
      %451 = vrot.lane.b32.xlu0 %v333, 4
      %v452 = vpop.permute.xlu0 %451
      %453 = vrot.lane.b32.xlu0 %v334, 4
      %v454 = vpop.permute.xlu0 %453
      %455 = vrot.lane.b32.xlu0 %v335, 4
      %v456 = vpop.permute.xlu0 %455
      %457 = vrot.lane.b32.xlu0 %v336, 4
      %v458 = vpop.permute.xlu0 %457
      %459 = vrot.lane.b32.xlu0 %v337, 4
      %v460 = vpop.permute.xlu0 %459
      %461 = vrot.lane.b32.xlu0 %v338, 4
      %v462 = vpop.permute.xlu0 %461
      %463 = vrot.lane.b32.xlu0 %v339, 4
      %v464 = vpop.permute.xlu0 %463
      %465 = vrot.lane.b32.xlu0 %v340, 4
      %v466 = vpop.permute.xlu0 %465
      %467 = vrot.lane.b32.xlu0 %v341, 4
      %v468 = vpop.permute.xlu0 %467
      %469 = vrot.lane.b32.xlu0 %v342, 4
      %v470 = vpop.permute.xlu0 %469
      %535 = vrot.lane.b32.xlu0 %v343, 8
      %v536 = vpop.permute.xlu0 %535
      %537 = vrot.lane.b32.xlu0 %v344, 8
      %v538 = vpop.permute.xlu0 %537
      %539 = vrot.lane.b32.xlu0 %v345, 8
      %v540 = vpop.permute.xlu0 %539
      %541 = vrot.lane.b32.xlu0 %v346, 8
      %v542 = vpop.permute.xlu0 %541
      %543 = vrot.lane.b32.xlu0 %v347, 8
      %v544 = vpop.permute.xlu0 %543
      %545 = vrot.lane.b32.xlu0 %v348, 8
      %v546 = vpop.permute.xlu0 %545
      %547 = vrot.lane.b32.xlu0 %v349, 8
      %v548 = vpop.permute.xlu0 %547
      %549 = vrot.lane.b32.xlu0 %v350, 8
      %v550 = vpop.permute.xlu0 %549
      %551 = vrot.lane.b32.xlu0 %v351, 8
      %v552 = vpop.permute.xlu0 %551
      %553 = vrot.lane.b32.xlu0 %v352, 8
      %v554 = vpop.permute.xlu0 %553
      %555 = vrot.lane.b32.xlu0 %v353, 8
      %v556 = vpop.permute.xlu0 %555
      %557 = vrot.lane.b32.xlu0 %v354, 8
      %v558 = vpop.permute.xlu0 %557
      %559 = vrot.lane.b32.xlu0 %v355, 8
      %v560 = vpop.permute.xlu0 %559
      %561 = vrot.lane.b32.xlu0 %v356, 8
      %v562 = vpop.permute.xlu0 %561
      %563 = vrot.lane.b32.xlu0 %v357, 8
      %v564 = vpop.permute.xlu0 %563
      %565 = vrot.lane.b32.xlu0 %v358, 8
      %v566 = vpop.permute.xlu0 %565
      %567 = vrot.lane.b32.xlu0 %v359, 8
      %v568 = vpop.permute.xlu0 %567
      %569 = vrot.lane.b32.xlu0 %v360, 8
      %v570 = vpop.permute.xlu0 %569
      %571 = vrot.lane.b32.xlu0 %v361, 8
      %v572 = vpop.permute.xlu0 %571
      %573 = vrot.lane.b32.xlu0 %v362, 8
      %v574 = vpop.permute.xlu0 %573
      %575 = vrot.lane.b32.xlu0 %v363, 8
      %v576 = vpop.permute.xlu0 %575
      %577 = vrot.lane.b32.xlu0 %v364, 8
      %v578 = vpop.permute.xlu0 %577
      %579 = vrot.lane.b32.xlu0 %v365, 8
      %v580 = vpop.permute.xlu0 %579
      %581 = vrot.lane.b32.xlu0 %v366, 8
      %v582 = vpop.permute.xlu0 %581
      %583 = vrot.lane.b32.xlu0 %v367, 8
      %v584 = vpop.permute.xlu0 %583
      %585 = vrot.lane.b32.xlu0 %v368, 8
      %v586 = vpop.permute.xlu0 %585
      %587 = vrot.lane.b32.xlu0 %v369, 8
      %v588 = vpop.permute.xlu0 %587
      %589 = vrot.lane.b32.xlu0 %v370, 8
      %v590 = vpop.permute.xlu0 %589
      %591 = vrot.lane.b32.xlu0 %v371, 8
      %v592 = vpop.permute.xlu0 %591
      %593 = vrot.lane.b32.xlu0 %v372, 8
      %v594 = vpop.permute.xlu0 %593
      %595 = vrot.lane.b32.xlu0 %v373, 8
      %v596 = vpop.permute.xlu0 %595
      %597 = vrot.lane.b32.xlu0 %v374, 8
      %v598 = vpop.permute.xlu0 %597
      %vm631 = vcmask 31744
      %v632 = vsel %vm631, %v279, %v408
      %v633 = vsel %vm631, %v280, %v410
      %v634 = vsel %vm631, %v281, %v412
      %v635 = vsel %vm631, %v282, %v414
      %v636 = vsel %vm631, %v283, %v416
      %v637 = vsel %vm631, %v284, %v418
      %v638 = vsel %vm631, %v285, %v420
      %v639 = vsel %vm631, %v286, %v422
      %v640 = vsel %vm631, %v287, %v424
      %v641 = vsel %vm631, %v288, %v426
      %v642 = vsel %vm631, %v289, %v428
      %v643 = vsel %vm631, %v290, %v430
      %v644 = vsel %vm631, %v291, %v432
      %v645 = vsel %vm631, %v292, %v434
      %v646 = vsel %vm631, %v293, %v436
      %v647 = vsel %vm631, %v294, %v438
      %v648 = vsel %vm631, %v295, %v440
      %v649 = vsel %vm631, %v296, %v442
      %v650 = vsel %vm631, %v297, %v444
      %v651 = vsel %vm631, %v298, %v446
      %v652 = vsel %vm631, %v299, %v448
      %v653 = vsel %vm631, %v300, %v450
      %v654 = vsel %vm631, %v301, %v452
      %v655 = vsel %vm631, %v302, %v454
      %v656 = vsel %vm631, %v303, %v456
      %v657 = vsel %vm631, %v304, %v458
      %v658 = vsel %vm631, %v305, %v460
      %v659 = vsel %vm631, %v306, %v462
      %v660 = vsel %vm631, %v307, %v464
      %v661 = vsel %vm631, %v308, %v466
      %v662 = vsel %vm631, %v309, %v468
      %v663 = vsel %vm631, %v310, %v470
      %vm664 = vcmask 64512
      %v665 = vsel %vm664, %v632, %v536
      %v666 = vsel %vm664, %v633, %v538
      %v667 = vsel %vm664, %v634, %v540
      %v668 = vsel %vm664, %v635, %v542
      %v669 = vsel %vm664, %v636, %v544
      %v670 = vsel %vm664, %v637, %v546
      %v671 = vsel %vm664, %v638, %v548
      %v672 = vsel %vm664, %v639, %v550
      %v673 = vsel %vm664, %v640, %v552
      %v674 = vsel %vm664, %v641, %v554
      %v675 = vsel %vm664, %v642, %v556
      %v676 = vsel %vm664, %v643, %v558
      %v677 = vsel %vm664, %v644, %v560
      %v678 = vsel %vm664, %v645, %v562
      %v679 = vsel %vm664, %v646, %v564
      %v680 = vsel %vm664, %v647, %v566
      %v681 = vsel %vm664, %v648, %v568
      %v682 = vsel %vm664, %v649, %v570
      %v683 = vsel %vm664, %v650, %v572
      %v684 = vsel %vm664, %v651, %v574
      %v685 = vsel %vm664, %v652, %v576
      %v686 = vsel %vm664, %v653, %v578
      %v687 = vsel %vm664, %v654, %v580
      %v688 = vsel %vm664, %v655, %v582
      %v689 = vsel %vm664, %v656, %v584
      %v690 = vsel %vm664, %v657, %v586
      %v691 = vsel %vm664, %v658, %v588
      %v692 = vsel %vm664, %v659, %v590
      %v693 = vsel %vm664, %v660, %v592
      %v694 = vsel %vm664, %v661, %v594
      %v695 = vsel %vm664, %v662, %v596
      %v696 = vsel %vm664, %v663, %v598
      %v697 = vld [vmem:[%s1] sm:$0xff]
      %v698 = vld [vmem:[%s1 + $0x8] sm:$0xf]
      %s699 = scalar_lea.vmem %s273, 24
      %v700 = vld [vmem:[%s699] sm:$0xff]
      %v701 = vld [vmem:[%s699 + $0x8] sm:$0xff]
      %v702 = vld [vmem:[%s699 + $0x18] sm:$0xff]
      %v703 = vld [vmem:[%s699 + $0x20] sm:$0xff]
      %v704 = vld [vmem:[%s699 + $0x30] sm:$0xff]
      %v705 = vld [vmem:[%s699 + $0x38] sm:$0xff]
      %v706 = vld [vmem:[%s699 + $0x48] sm:$0xff]
      %v707 = vld [vmem:[%s699 + $0x50] sm:$0xff]
      %v708 = vld [vmem:[%s699 + $0x60] sm:$0xff]
      %v709 = vld [vmem:[%s699 + $0x68] sm:$0xff]
      %v710 = vld [vmem:[%s699 + $0x78] sm:$0xff]
      %v711 = vld [vmem:[%s699 + $0x80] sm:$0xff]
      %v712 = vld [vmem:[%s699 + $0x90] sm:$0xff]
      %v713 = vld [vmem:[%s699 + $0x98] sm:$0xff]
      %v714 = vld [vmem:[%s699 + $0xa8] sm:$0xff]
      %v715 = vld [vmem:[%s699 + $0xb0] sm:$0xff]
      %v716 = vld [vmem:[%s699 + $0xc0] sm:$0xff]
      %v717 = vld [vmem:[%s699 + $0xc8] sm:$0xff]
      %v718 = vld [vmem:[%s699 + $0xd8] sm:$0xff]
      %v719 = vld [vmem:[%s699 + $0xe0] sm:$0xff]
      %v720 = vld [vmem:[%s699 + $0xf0] sm:$0xff]
      %v721 = vld [vmem:[%s699 + $0xf8] sm:$0xff]
      %v722 = vld [vmem:[%s699 + $0x108] sm:$0xff]
      %v723 = vld [vmem:[%s699 + $0x110] sm:$0xff]
      %v724 = vld [vmem:[%s699 + $0x120] sm:$0xff]
      %v725 = vld [vmem:[%s699 + $0x128] sm:$0xff]
      %v726 = vld [vmem:[%s699 + $0x138] sm:$0xff]
      %v727 = vld [vmem:[%s699 + $0x140] sm:$0xff]
      %v728 = vld [vmem:[%s699 + $0x150] sm:$0xff]
      %v729 = vld [vmem:[%s699 + $0x158] sm:$0xff]
      %v730 = vld [vmem:[%s699 + $0x168] sm:$0xff]
      %v731 = vld [vmem:[%s699 + $0x170] sm:$0xff]
      %v732 = vld [vmem:[%s699 + $0x1] sm:$0xff]
      %v733 = vld [vmem:[%s699 + $0x9] sm:$0xff]
      %v734 = vld [vmem:[%s699 + $0x19] sm:$0xff]
      %v735 = vld [vmem:[%s699 + $0x21] sm:$0xff]
      %v736 = vld [vmem:[%s699 + $0x31] sm:$0xff]
      %v737 = vld [vmem:[%s699 + $0x39] sm:$0xff]
      %v738 = vld [vmem:[%s699 + $0x49] sm:$0xff]
      %v739 = vld [vmem:[%s699 + $0x51] sm:$0xff]
      %v740 = vld [vmem:[%s699 + $0x61] sm:$0xff]
      %v741 = vld [vmem:[%s699 + $0x69] sm:$0xff]
      %v742 = vld [vmem:[%s699 + $0x79] sm:$0xff]
      %v743 = vld [vmem:[%s699 + $0x81] sm:$0xff]
      %v744 = vld [vmem:[%s699 + $0x91] sm:$0xff]
      %v745 = vld [vmem:[%s699 + $0x99] sm:$0xff]
      %v746 = vld [vmem:[%s699 + $0xa9] sm:$0xff]
      %v747 = vld [vmem:[%s699 + $0xb1] sm:$0xff]
      %v748 = vld [vmem:[%s699 + $0xc1] sm:$0xff]
      %v749 = vld [vmem:[%s699 + $0xc9] sm:$0xff]
      %v750 = vld [vmem:[%s699 + $0xd9] sm:$0xff]
      %v751 = vld [vmem:[%s699 + $0xe1] sm:$0xff]
      %v752 = vld [vmem:[%s699 + $0xf1] sm:$0xff]
      %v753 = vld [vmem:[%s699 + $0xf9] sm:$0xff]
      %v754 = vld [vmem:[%s699 + $0x109] sm:$0xff]
      %v755 = vld [vmem:[%s699 + $0x111] sm:$0xff]
      %v756 = vld [vmem:[%s699 + $0x121] sm:$0xff]
      %v757 = vld [vmem:[%s699 + $0x129] sm:$0xff]
      %v758 = vld [vmem:[%s699 + $0x139] sm:$0xff]
      %v759 = vld [vmem:[%s699 + $0x141] sm:$0xff]
      %v760 = vld [vmem:[%s699 + $0x151] sm:$0xff]
      %v761 = vld [vmem:[%s699 + $0x159] sm:$0xff]
      %v762 = vld [vmem:[%s699 + $0x169] sm:$0xff]
      %v763 = vld [vmem:[%s699 + $0x171] sm:$0xff]
      %v764 = vld [vmem:[%s699 + $0x2] sm:$0xff]
      %v765 = vld [vmem:[%s699 + $0xa] sm:$0xff]
      %v766 = vld [vmem:[%s699 + $0x1a] sm:$0xff]
      %v767 = vld [vmem:[%s699 + $0x22] sm:$0xff]
      %v768 = vld [vmem:[%s699 + $0x32] sm:$0xff]
      %v769 = vld [vmem:[%s699 + $0x3a] sm:$0xff]
      %v770 = vld [vmem:[%s699 + $0x4a] sm:$0xff]
      %v771 = vld [vmem:[%s699 + $0x52] sm:$0xff]
      %v772 = vld [vmem:[%s699 + $0x62] sm:$0xff]
      %v773 = vld [vmem:[%s699 + $0x6a] sm:$0xff]
      %v774 = vld [vmem:[%s699 + $0x7a] sm:$0xff]
      %v775 = vld [vmem:[%s699 + $0x82] sm:$0xff]
      %v776 = vld [vmem:[%s699 + $0x92] sm:$0xff]
      %v777 = vld [vmem:[%s699 + $0x9a] sm:$0xff]
      %v778 = vld [vmem:[%s699 + $0xaa] sm:$0xff]
      %v779 = vld [vmem:[%s699 + $0xb2] sm:$0xff]
      %v780 = vld [vmem:[%s699 + $0xc2] sm:$0xff]
      %v781 = vld [vmem:[%s699 + $0xca] sm:$0xff]
      %v782 = vld [vmem:[%s699 + $0xda] sm:$0xff]
      %v783 = vld [vmem:[%s699 + $0xe2] sm:$0xff]
      %v784 = vld [vmem:[%s699 + $0xf2] sm:$0xff]
      %v785 = vld [vmem:[%s699 + $0xfa] sm:$0xff]
      %v786 = vld [vmem:[%s699 + $0x10a] sm:$0xff]
      %v787 = vld [vmem:[%s699 + $0x112] sm:$0xff]
      %v788 = vld [vmem:[%s699 + $0x122] sm:$0xff]
      %v789 = vld [vmem:[%s699 + $0x12a] sm:$0xff]
      %v790 = vld [vmem:[%s699 + $0x13a] sm:$0xff]
      %v791 = vld [vmem:[%s699 + $0x142] sm:$0xff]
      %v792 = vld [vmem:[%s699 + $0x152] sm:$0xff]
      %v793 = vld [vmem:[%s699 + $0x15a] sm:$0xff]
      %v794 = vld [vmem:[%s699 + $0x16a] sm:$0xff]
      %v795 = vld [vmem:[%s699 + $0x172] sm:$0xff]
      %828 = vrot.lane.b32.xlu0 %v732, 4
      %v829 = vpop.permute.xlu0 %828
      %830 = vrot.lane.b32.xlu0 %v733, 4
      %v831 = vpop.permute.xlu0 %830
      %832 = vrot.lane.b32.xlu0 %v734, 4
      %v833 = vpop.permute.xlu0 %832
      %834 = vrot.lane.b32.xlu0 %v735, 4
      %v835 = vpop.permute.xlu0 %834
      %836 = vrot.lane.b32.xlu0 %v736, 4
      %v837 = vpop.permute.xlu0 %836
      %838 = vrot.lane.b32.xlu0 %v737, 4
      %v839 = vpop.permute.xlu0 %838
      %840 = vrot.lane.b32.xlu0 %v738, 4
      %v841 = vpop.permute.xlu0 %840
      %842 = vrot.lane.b32.xlu0 %v739, 4
      %v843 = vpop.permute.xlu0 %842
      %844 = vrot.lane.b32.xlu0 %v740, 4
      %v845 = vpop.permute.xlu0 %844
      %846 = vrot.lane.b32.xlu0 %v741, 4
      %v847 = vpop.permute.xlu0 %846
      %848 = vrot.lane.b32.xlu0 %v742, 4
      %v849 = vpop.permute.xlu0 %848
      %850 = vrot.lane.b32.xlu0 %v743, 4
      %v851 = vpop.permute.xlu0 %850
      %852 = vrot.lane.b32.xlu0 %v744, 4
      %v853 = vpop.permute.xlu0 %852
      %854 = vrot.lane.b32.xlu0 %v745, 4
      %v855 = vpop.permute.xlu0 %854
      %856 = vrot.lane.b32.xlu0 %v746, 4
      %v857 = vpop.permute.xlu0 %856
      %858 = vrot.lane.b32.xlu0 %v747, 4
      %v859 = vpop.permute.xlu0 %858
      %860 = vrot.lane.b32.xlu0 %v748, 4
      %v861 = vpop.permute.xlu0 %860
      %862 = vrot.lane.b32.xlu0 %v749, 4
      %v863 = vpop.permute.xlu0 %862
      %864 = vrot.lane.b32.xlu0 %v750, 4
      %v865 = vpop.permute.xlu0 %864
      %866 = vrot.lane.b32.xlu0 %v751, 4
      %v867 = vpop.permute.xlu0 %866
      %868 = vrot.lane.b32.xlu0 %v752, 4
      %v869 = vpop.permute.xlu0 %868
      %870 = vrot.lane.b32.xlu0 %v753, 4
      %v871 = vpop.permute.xlu0 %870
      %872 = vrot.lane.b32.xlu0 %v754, 4
      %v873 = vpop.permute.xlu0 %872
      %874 = vrot.lane.b32.xlu0 %v755, 4
      %v875 = vpop.permute.xlu0 %874
      %876 = vrot.lane.b32.xlu0 %v756, 4
      %v877 = vpop.permute.xlu0 %876
      %878 = vrot.lane.b32.xlu0 %v757, 4
      %v879 = vpop.permute.xlu0 %878
      %880 = vrot.lane.b32.xlu0 %v758, 4
      %v881 = vpop.permute.xlu0 %880
      %882 = vrot.lane.b32.xlu0 %v759, 4
      %v883 = vpop.permute.xlu0 %882
      %884 = vrot.lane.b32.xlu0 %v760, 4
      %v885 = vpop.permute.xlu0 %884
      %886 = vrot.lane.b32.xlu0 %v761, 4
      %v887 = vpop.permute.xlu0 %886
      %888 = vrot.lane.b32.xlu0 %v762, 4
      %v889 = vpop.permute.xlu0 %888
      %890 = vrot.lane.b32.xlu0 %v763, 4
      %v891 = vpop.permute.xlu0 %890
      %956 = vrot.lane.b32.xlu0 %v764, 8
      %v957 = vpop.permute.xlu0 %956
      %958 = vrot.lane.b32.xlu0 %v765, 8
      %v959 = vpop.permute.xlu0 %958
      %960 = vrot.lane.b32.xlu0 %v766, 8
      %v961 = vpop.permute.xlu0 %960
      %962 = vrot.lane.b32.xlu0 %v767, 8
      %v963 = vpop.permute.xlu0 %962
      %964 = vrot.lane.b32.xlu0 %v768, 8
      %v965 = vpop.permute.xlu0 %964
      %966 = vrot.lane.b32.xlu0 %v769, 8
      %v967 = vpop.permute.xlu0 %966
      %968 = vrot.lane.b32.xlu0 %v770, 8
      %v969 = vpop.permute.xlu0 %968
      %970 = vrot.lane.b32.xlu0 %v771, 8
      %v971 = vpop.permute.xlu0 %970
      %972 = vrot.lane.b32.xlu0 %v772, 8
      %v973 = vpop.permute.xlu0 %972
      %974 = vrot.lane.b32.xlu0 %v773, 8
      %v975 = vpop.permute.xlu0 %974
      %976 = vrot.lane.b32.xlu0 %v774, 8
      %v977 = vpop.permute.xlu0 %976
      %978 = vrot.lane.b32.xlu0 %v775, 8
      %v979 = vpop.permute.xlu0 %978
      %980 = vrot.lane.b32.xlu0 %v776, 8
      %v981 = vpop.permute.xlu0 %980
      %982 = vrot.lane.b32.xlu0 %v777, 8
      %v983 = vpop.permute.xlu0 %982
      %984 = vrot.lane.b32.xlu0 %v778, 8
      %v985 = vpop.permute.xlu0 %984
      %986 = vrot.lane.b32.xlu0 %v779, 8
      %v987 = vpop.permute.xlu0 %986
      %988 = vrot.lane.b32.xlu0 %v780, 8
      %v989 = vpop.permute.xlu0 %988
      %990 = vrot.lane.b32.xlu0 %v781, 8
      %v991 = vpop.permute.xlu0 %990
      %992 = vrot.lane.b32.xlu0 %v782, 8
      %v993 = vpop.permute.xlu0 %992
      %994 = vrot.lane.b32.xlu0 %v783, 8
      %v995 = vpop.permute.xlu0 %994
      %996 = vrot.lane.b32.xlu0 %v784, 8
      %v997 = vpop.permute.xlu0 %996
      %998 = vrot.lane.b32.xlu0 %v785, 8
      %v999 = vpop.permute.xlu0 %998
      %1000 = vrot.lane.b32.xlu0 %v786, 8
      %v1001 = vpop.permute.xlu0 %1000
      %1002 = vrot.lane.b32.xlu0 %v787, 8
      %v1003 = vpop.permute.xlu0 %1002
      %1004 = vrot.lane.b32.xlu0 %v788, 8
      %v1005 = vpop.permute.xlu0 %1004
      %1006 = vrot.lane.b32.xlu0 %v789, 8
      %v1007 = vpop.permute.xlu0 %1006
      %1008 = vrot.lane.b32.xlu0 %v790, 8
      %v1009 = vpop.permute.xlu0 %1008
      %1010 = vrot.lane.b32.xlu0 %v791, 8
      %v1011 = vpop.permute.xlu0 %1010
      %1012 = vrot.lane.b32.xlu0 %v792, 8
      %v1013 = vpop.permute.xlu0 %1012
      %1014 = vrot.lane.b32.xlu0 %v793, 8
      %v1015 = vpop.permute.xlu0 %1014
      %1016 = vrot.lane.b32.xlu0 %v794, 8
      %v1017 = vpop.permute.xlu0 %1016
      %1018 = vrot.lane.b32.xlu0 %v795, 8
      %v1019 = vpop.permute.xlu0 %1018
      %v1052 = vsel %vm631, %v700, %v829
      %v1053 = vsel %vm631, %v701, %v831
      %v1054 = vsel %vm631, %v702, %v833
      %v1055 = vsel %vm631, %v703, %v835
      %v1056 = vsel %vm631, %v704, %v837
      %v1057 = vsel %vm631, %v705, %v839
      %v1058 = vsel %vm631, %v706, %v841
      %v1059 = vsel %vm631, %v707, %v843
      %v1060 = vsel %vm631, %v708, %v845
      %v1061 = vsel %vm631, %v709, %v847
      %v1062 = vsel %vm631, %v710, %v849
      %v1063 = vsel %vm631, %v711, %v851
      %v1064 = vsel %vm631, %v712, %v853
      %v1065 = vsel %vm631, %v713, %v855
      %v1066 = vsel %vm631, %v714, %v857
      %v1067 = vsel %vm631, %v715, %v859
      %v1068 = vsel %vm631, %v716, %v861
      %v1069 = vsel %vm631, %v717, %v863
      %v1070 = vsel %vm631, %v718, %v865
      %v1071 = vsel %vm631, %v719, %v867
      %v1072 = vsel %vm631, %v720, %v869
      %v1073 = vsel %vm631, %v721, %v871
      %v1074 = vsel %vm631, %v722, %v873
      %v1075 = vsel %vm631, %v723, %v875
      %v1076 = vsel %vm631, %v724, %v877
      %v1077 = vsel %vm631, %v725, %v879
      %v1078 = vsel %vm631, %v726, %v881
      %v1079 = vsel %vm631, %v727, %v883
      %v1080 = vsel %vm631, %v728, %v885
      %v1081 = vsel %vm631, %v729, %v887
      %v1082 = vsel %vm631, %v730, %v889
      %v1083 = vsel %vm631, %v731, %v891
      %v1084 = vsel %vm664, %v1052, %v957
      %v1085 = vsel %vm664, %v1053, %v959
      %v1086 = vsel %vm664, %v1054, %v961
      %v1087 = vsel %vm664, %v1055, %v963
      %v1088 = vsel %vm664, %v1056, %v965
      %v1089 = vsel %vm664, %v1057, %v967
      %v1090 = vsel %vm664, %v1058, %v969
      %v1091 = vsel %vm664, %v1059, %v971
      %v1092 = vsel %vm664, %v1060, %v973
      %v1093 = vsel %vm664, %v1061, %v975
      %v1094 = vsel %vm664, %v1062, %v977
      %v1095 = vsel %vm664, %v1063, %v979
      %v1096 = vsel %vm664, %v1064, %v981
      %v1097 = vsel %vm664, %v1065, %v983
      %v1098 = vsel %vm664, %v1066, %v985
      %v1099 = vsel %vm664, %v1067, %v987
      %v1100 = vsel %vm664, %v1068, %v989
      %v1101 = vsel %vm664, %v1069, %v991
      %v1102 = vsel %vm664, %v1070, %v993
      %v1103 = vsel %vm664, %v1071, %v995
      %v1104 = vsel %vm664, %v1072, %v997
      %v1105 = vsel %vm664, %v1073, %v999
      %v1106 = vsel %vm664, %v1074, %v1001
      %v1107 = vsel %vm664, %v1075, %v1003
      %v1108 = vsel %vm664, %v1076, %v1005
      %v1109 = vsel %vm664, %v1077, %v1007
      %v1110 = vsel %vm664, %v1078, %v1009
      %v1111 = vsel %vm664, %v1079, %v1011
      %v1112 = vsel %vm664, %v1080, %v1013
      %v1113 = vsel %vm664, %v1081, %v1015
      %v1114 = vsel %vm664, %v1082, %v1017
      %v1115 = vsel %vm664, %v1083, %v1019
      %s1116 = scalar_lea.vmem %s1, 16
      %v1117 = vld [vmem:[%s1116] sm:$0xff]
      %v1118 = vld [vmem:[%s1116 + $0x8] sm:$0xf]
      %vm1119 = vcmask 97280
      %v1121 = vsel %vm1119, %v1084, 0
      %v1124 = vsel %vm1119, %v1085, 0
      %v1127 = vsel %vm1119, %v1086, 0
      %v1130 = vsel %vm1119, %v1087, 0
      %v1133 = vsel %vm1119, %v1088, 0
      %v1136 = vsel %vm1119, %v1089, 0
      %v1139 = vsel %vm1119, %v1090, 0
      %v1142 = vsel %vm1119, %v1091, 0
      %v1145 = vsel %vm1119, %v1092, 0
      %v1148 = vsel %vm1119, %v1093, 0
      %v1151 = vsel %vm1119, %v1094, 0
      %v1154 = vsel %vm1119, %v1095, 0
      %v1157 = vsel %vm1119, %v1096, 0
      %v1160 = vsel %vm1119, %v1097, 0
      %v1163 = vsel %vm1119, %v1098, 0
      %v1166 = vsel %vm1119, %v1099, 0
      %v1169 = vsel %vm1119, %v1100, 0
      %v1172 = vsel %vm1119, %v1101, 0
      %v1175 = vsel %vm1119, %v1102, 0
      %v1178 = vsel %vm1119, %v1103, 0
      %v1181 = vsel %vm1119, %v1104, 0
      %v1184 = vsel %vm1119, %v1105, 0
      %v1187 = vsel %vm1119, %v1106, 0
      %v1190 = vsel %vm1119, %v1107, 0
      %v1193 = vsel %vm1119, %v1108, 0
      %v1196 = vsel %vm1119, %v1109, 0
      %v1199 = vsel %vm1119, %v1110, 0
      %v1202 = vsel %vm1119, %v1111, 0
      %v1205 = vsel %vm1119, %v1112, 0
      %v1208 = vsel %vm1119, %v1113, 0
      %v1211 = vsel %vm1119, %v1114, 0
      %v1214 = vsel %vm1119, %v1115, 0
      %vm1216 = vcmask 1043456
      %v1218 = vsel %vm1216, %v1118, 0
      %1220 = vmatprep.subr.mxu0 0.0
      %1221 = vmatpush1.msra.mxu0 0.0
      %1222 = vmatprep.subr.mxu0 0.0
      %1223 = vmatpush1.msra.mxu0 0.0
      %1224 = vmatprep.subr.mxu0 0.0
      %1225 = vmatpush1.msra.mxu0 0.0
      %1226 = vmatprep.subr.mxu0 0.0
      %1227 = vmatpush1.msra.mxu0 0.0
      %1228 = vmatprep.subr.mxu0 0.0
      %1229 = vmatpush1.msra.mxu0 0.0
      %1230 = vmatprep.subr.mxu0 0.0
      %1231 = vmatpush1.msra.mxu0 0.0
      %1232 = vmatprep.subr.mxu0 0.0
      %1233 = vmatpush1.msra.mxu0 0.0
      %1234 = vmatprep.subr.mxu0 0.0
      %1235 = vmatpush1.msra.mxu0 0.0
      %1236 = vmatprep.subr.mxu0 0.0
      %1237 = vmatpush1.msra.mxu0 0.0
      %1238 = vmatprep.subr.mxu0 0.0
      %1239 = vmatpush1.msra.mxu0 0.0
      %1240 = vmatprep.subr.mxu0 0.0
      %1241 = vmatpush1.msra.mxu0 0.0
      %1242 = vmatprep.subr.mxu0 0.0
      %1243 = vmatpush1.msra.mxu0 0.0
      %1244 = vmatprep.subr.mxu0 0.0
      %1245 = vmatpush1.msra.mxu0 0.0
      %1246 = vmatprep.subr.mxu0 0.0
      %1247 = vmatpush1.msra.mxu0 0.0
      %1248 = vmatprep.subr.mxu0 0.0
      %1249 = vmatpush1.msra.mxu0 %v1218
      %1250 = vmatprep.subr.mxu0 0.0
      %1251 = vmatpush1.msra.mxu0 %v1117
      %1252 = vmatprep.subr.mxu0 0.0
      %1253 = vmatpush2.msra.mxu0 0.0
      %1254 = vmatprep.subr.mxu0 0.0
      %1255 = vmatpush2.msra.mxu0 0.0
      %1256 = vmatprep.subr.mxu0 0.0
      %1257 = vmatpush2.msra.mxu0 0.0
      %1258 = vmatprep.subr.mxu0 0.0
      %1259 = vmatpush2.msra.mxu0 0.0
      %1260 = vmatprep.subr.mxu0 0.0
      %1261 = vmatpush2.msra.mxu0 0.0
      %1262 = vmatprep.subr.mxu0 0.0
      %1263 = vmatpush2.msra.mxu0 0.0
      %1264 = vmatprep.subr.mxu0 0.0
      %1265 = vmatpush2.msra.mxu0 0.0
      %1266 = vmatprep.subr.mxu0 0.0
      %1267 = vmatpush2.msra.mxu0 0.0
      %1268 = vmatprep.subr.mxu0 0.0
      %1269 = vmatpush2.msra.mxu0 0.0
      %1270 = vmatprep.subr.mxu0 0.0
      %1271 = vmatpush2.msra.mxu0 0.0
      %1272 = vmatprep.subr.mxu0 0.0
      %1273 = vmatpush2.msra.mxu0 0.0
      %1274 = vmatprep.subr.mxu0 0.0
      %1275 = vmatpush2.msra.mxu0 0.0
      %1276 = vmatprep.subr.mxu0 0.0
      %1277 = vmatpush2.msra.mxu0 0.0
      %1278 = vmatprep.subr.mxu0 0.0
      %1279 = vmatpush2.msra.mxu0 0.0
      %1280 = vmatprep.subr.mxu0 0.0
      %1281 = vmatpush2.msra.mxu0 0.0
      %1282 = vmatprep.subr.mxu0 0.0
      %1283 = vmatpush2.msra.mxu0 0.0
      %1284 = vmatprep.mubr.f32.mxu0 0.0
      %1285 = vmatmul.mubr.f32.gmra.mxu0 %v1121
      %v1286 = vpop.f32.mrf.mxu0
      %v1287 = vadd.f32 0.0, %v1286
      %v1288 = vpop.f32.mrf.mxu0
      %1289 = vmatprep.mubr.f32.mxu0 0.0
      %1290 = vmatmul.mubr.f32.gmra.mxu0 %v1124
      %v1291 = vpop.f32.mrf.mxu0
      %v1292 = vadd.f32 0.0, %v1291
      %v1293 = vpop.f32.mrf.mxu0
      %1294 = vmatprep.mubr.f32.mxu0 0.0
      %1295 = vmatmul.mubr.f32.gmra.mxu0 %v1127
      %v1296 = vpop.f32.mrf.mxu0
      %v1297 = vadd.f32 0.0, %v1296
      %v1298 = vpop.f32.mrf.mxu0
      %1299 = vmatprep.mubr.f32.mxu0 0.0
      %1300 = vmatmul.mubr.f32.gmra.mxu0 %v1130
      %v1301 = vpop.f32.mrf.mxu0
      %v1302 = vadd.f32 0.0, %v1301
      %v1303 = vpop.f32.mrf.mxu0
      %1304 = vmatprep.mubr.f32.mxu0 0.0
      %1305 = vmatmul.mubr.f32.gmra.mxu0 %v1133
      %v1306 = vpop.f32.mrf.mxu0
      %v1307 = vadd.f32 0.0, %v1306
      %v1308 = vpop.f32.mrf.mxu0
      %1309 = vmatprep.mubr.f32.mxu0 0.0
      %1310 = vmatmul.mubr.f32.gmra.mxu0 %v1136
      %v1311 = vpop.f32.mrf.mxu0
      %v1312 = vadd.f32 0.0, %v1311
      %v1313 = vpop.f32.mrf.mxu0
      %1314 = vmatprep.mubr.f32.mxu0 0.0
      %1315 = vmatmul.mubr.f32.gmra.mxu0 %v1139
      %v1316 = vpop.f32.mrf.mxu0
      %v1317 = vadd.f32 0.0, %v1316
      %v1318 = vpop.f32.mrf.mxu0
      %1319 = vmatprep.mubr.f32.mxu0 0.0
      %1320 = vmatmul.mubr.f32.gmra.mxu0 %v1142
      %v1321 = vpop.f32.mrf.mxu0
      %v1322 = vadd.f32 0.0, %v1321
      %v1323 = vpop.f32.mrf.mxu0
      %1324 = vmatprep.mubr.f32.mxu0 0.0
      %1325 = vmatmul.mubr.f32.gmra.mxu0 %v1145
      %v1326 = vpop.f32.mrf.mxu0
      %v1327 = vadd.f32 0.0, %v1326
      %v1328 = vpop.f32.mrf.mxu0
      %1329 = vmatprep.mubr.f32.mxu0 0.0
      %1330 = vmatmul.mubr.f32.gmra.mxu0 %v1148
      %v1331 = vpop.f32.mrf.mxu0
      %v1332 = vadd.f32 0.0, %v1331
      %v1333 = vpop.f32.mrf.mxu0
      %1334 = vmatprep.mubr.f32.mxu0 0.0
      %1335 = vmatmul.mubr.f32.gmra.mxu0 %v1151
      %v1336 = vpop.f32.mrf.mxu0
      %v1337 = vadd.f32 0.0, %v1336
      %v1338 = vpop.f32.mrf.mxu0
      %1339 = vmatprep.mubr.f32.mxu0 0.0
      %1340 = vmatmul.mubr.f32.gmra.mxu0 %v1154
      %v1341 = vpop.f32.mrf.mxu0
      %v1342 = vadd.f32 0.0, %v1341
      %v1343 = vpop.f32.mrf.mxu0
      %1344 = vmatprep.mubr.f32.mxu0 0.0
      %1345 = vmatmul.mubr.f32.gmra.mxu0 %v1157
      %v1346 = vpop.f32.mrf.mxu0
      %v1347 = vadd.f32 0.0, %v1346
      %v1348 = vpop.f32.mrf.mxu0
      %1349 = vmatprep.mubr.f32.mxu0 0.0
      %1350 = vmatmul.mubr.f32.gmra.mxu0 %v1160
      %v1351 = vpop.f32.mrf.mxu0
      %v1352 = vadd.f32 0.0, %v1351
      %v1353 = vpop.f32.mrf.mxu0
      %1354 = vmatprep.mubr.f32.mxu0 0.0
      %1355 = vmatmul.mubr.f32.gmra.mxu0 %v1163
      %v1356 = vpop.f32.mrf.mxu0
      %v1357 = vadd.f32 0.0, %v1356
      %v1358 = vpop.f32.mrf.mxu0
      %1359 = vmatprep.mubr.f32.mxu0 0.0
      %1360 = vmatmul.mubr.f32.gmra.mxu0 %v1166
      %v1361 = vpop.f32.mrf.mxu0
      %v1362 = vadd.f32 0.0, %v1361
      %v1363 = vpop.f32.mrf.mxu0
      %1364 = vmatprep.mubr.f32.mxu0 0.0
      %1365 = vmatmul.mubr.f32.gmra.mxu0 %v1169
      %v1366 = vpop.f32.mrf.mxu0
      %v1367 = vadd.f32 0.0, %v1366
      %v1368 = vpop.f32.mrf.mxu0
      %1369 = vmatprep.mubr.f32.mxu0 0.0
      %1370 = vmatmul.mubr.f32.gmra.mxu0 %v1172
      %v1371 = vpop.f32.mrf.mxu0
      %v1372 = vadd.f32 0.0, %v1371
      %v1373 = vpop.f32.mrf.mxu0
      %1374 = vmatprep.mubr.f32.mxu0 0.0
      %1375 = vmatmul.mubr.f32.gmra.mxu0 %v1175
      %v1376 = vpop.f32.mrf.mxu0
      %v1377 = vadd.f32 0.0, %v1376
      %v1378 = vpop.f32.mrf.mxu0
      %1379 = vmatprep.mubr.f32.mxu0 0.0
      %1380 = vmatmul.mubr.f32.gmra.mxu0 %v1178
      %v1381 = vpop.f32.mrf.mxu0
      %v1382 = vadd.f32 0.0, %v1381
      %v1383 = vpop.f32.mrf.mxu0
      %1384 = vmatprep.mubr.f32.mxu0 0.0
      %1385 = vmatmul.mubr.f32.gmra.mxu0 %v1181
      %v1386 = vpop.f32.mrf.mxu0
      %v1387 = vadd.f32 0.0, %v1386
      %v1388 = vpop.f32.mrf.mxu0
      %1389 = vmatprep.mubr.f32.mxu0 0.0
      %1390 = vmatmul.mubr.f32.gmra.mxu0 %v1184
      %v1391 = vpop.f32.mrf.mxu0
      %v1392 = vadd.f32 0.0, %v1391
      %v1393 = vpop.f32.mrf.mxu0
      %1394 = vmatprep.mubr.f32.mxu0 0.0
      %1395 = vmatmul.mubr.f32.gmra.mxu0 %v1187
      %v1396 = vpop.f32.mrf.mxu0
      %v1397 = vadd.f32 0.0, %v1396
      %v1398 = vpop.f32.mrf.mxu0
      %1399 = vmatprep.mubr.f32.mxu0 0.0
      %1400 = vmatmul.mubr.f32.gmra.mxu0 %v1190
      %v1401 = vpop.f32.mrf.mxu0
      %v1402 = vadd.f32 0.0, %v1401
      %v1403 = vpop.f32.mrf.mxu0
      %1404 = vmatprep.mubr.f32.mxu0 0.0
      %1405 = vmatmul.mubr.f32.gmra.mxu0 %v1193
      %v1406 = vpop.f32.mrf.mxu0
      %v1407 = vadd.f32 0.0, %v1406
      %v1408 = vpop.f32.mrf.mxu0
      %1409 = vmatprep.mubr.f32.mxu0 0.0
      %1410 = vmatmul.mubr.f32.gmra.mxu0 %v1196
      %v1411 = vpop.f32.mrf.mxu0
      %v1412 = vadd.f32 0.0, %v1411
      %v1413 = vpop.f32.mrf.mxu0
      %1414 = vmatprep.mubr.f32.mxu0 0.0
      %1415 = vmatmul.mubr.f32.gmra.mxu0 %v1199
      %v1416 = vpop.f32.mrf.mxu0
      %v1417 = vadd.f32 0.0, %v1416
      %v1418 = vpop.f32.mrf.mxu0
      %1419 = vmatprep.mubr.f32.mxu0 0.0
      %1420 = vmatmul.mubr.f32.gmra.mxu0 %v1202
      %v1421 = vpop.f32.mrf.mxu0
      %v1422 = vadd.f32 0.0, %v1421
      %v1423 = vpop.f32.mrf.mxu0
      %1424 = vmatprep.mubr.f32.mxu0 0.0
      %1425 = vmatmul.mubr.f32.gmra.mxu0 %v1205
      %v1426 = vpop.f32.mrf.mxu0
      %v1427 = vadd.f32 0.0, %v1426
      %v1428 = vpop.f32.mrf.mxu0
      %1429 = vmatprep.mubr.f32.mxu0 0.0
      %1430 = vmatmul.mubr.f32.gmra.mxu0 %v1208
      %v1431 = vpop.f32.mrf.mxu0
      %v1432 = vadd.f32 0.0, %v1431
      %v1433 = vpop.f32.mrf.mxu0
      %1434 = vmatprep.mubr.f32.mxu0 0.0
      %1435 = vmatmul.mubr.f32.gmra.mxu0 %v1211
      %v1436 = vpop.f32.mrf.mxu0
      %v1437 = vadd.f32 0.0, %v1436
      %v1438 = vpop.f32.mrf.mxu0
      %1439 = vmatprep.mubr.f32.mxu0 0.0
      %1440 = vmatmul.mubr.f32.gmra.mxu0 %v1214
      %v1441 = vpop.f32.mrf.mxu0
      %v1442 = vadd.f32 0.0, %v1441
      %v1443 = vpop.f32.mrf.mxu0
      %1444 = vdwg.mxu0
      %v1446 = vsel %vm1119, %v665, 0
      %v1449 = vsel %vm1119, %v666, 0
      %v1452 = vsel %vm1119, %v667, 0
      %v1455 = vsel %vm1119, %v668, 0
      %v1458 = vsel %vm1119, %v669, 0
      %v1461 = vsel %vm1119, %v670, 0
      %v1464 = vsel %vm1119, %v671, 0
      %v1467 = vsel %vm1119, %v672, 0
      %v1470 = vsel %vm1119, %v673, 0
      %v1473 = vsel %vm1119, %v674, 0
      %v1476 = vsel %vm1119, %v675, 0
      %v1479 = vsel %vm1119, %v676, 0
      %v1482 = vsel %vm1119, %v677, 0
      %v1485 = vsel %vm1119, %v678, 0
      %v1488 = vsel %vm1119, %v679, 0
      %v1491 = vsel %vm1119, %v680, 0
      %v1494 = vsel %vm1119, %v681, 0
      %v1497 = vsel %vm1119, %v682, 0
      %v1500 = vsel %vm1119, %v683, 0
      %v1503 = vsel %vm1119, %v684, 0
      %v1506 = vsel %vm1119, %v685, 0
      %v1509 = vsel %vm1119, %v686, 0
      %v1512 = vsel %vm1119, %v687, 0
      %v1515 = vsel %vm1119, %v688, 0
      %v1518 = vsel %vm1119, %v689, 0
      %v1521 = vsel %vm1119, %v690, 0
      %v1524 = vsel %vm1119, %v691, 0
      %v1527 = vsel %vm1119, %v692, 0
      %v1530 = vsel %vm1119, %v693, 0
      %v1533 = vsel %vm1119, %v694, 0
      %v1536 = vsel %vm1119, %v695, 0
      %v1539 = vsel %vm1119, %v696, 0
      %v1542 = vsel %vm1216, %v698, 0
      %1544 = vmatprep.subr.mxu0 0.0
      %1545 = vmatpush1.msra.mxu0 0.0
      %1546 = vmatprep.subr.mxu0 0.0
      %1547 = vmatpush1.msra.mxu0 0.0
      %1548 = vmatprep.subr.mxu0 0.0
      %1549 = vmatpush1.msra.mxu0 0.0
      %1550 = vmatprep.subr.mxu0 0.0
      %1551 = vmatpush1.msra.mxu0 0.0
      %1552 = vmatprep.subr.mxu0 0.0
      %1553 = vmatpush1.msra.mxu0 0.0
      %1554 = vmatprep.subr.mxu0 0.0
      %1555 = vmatpush1.msra.mxu0 0.0
      %1556 = vmatprep.subr.mxu0 0.0
      %1557 = vmatpush1.msra.mxu0 0.0
      %1558 = vmatprep.subr.mxu0 0.0
      %1559 = vmatpush1.msra.mxu0 0.0
      %1560 = vmatprep.subr.mxu0 0.0
      %1561 = vmatpush1.msra.mxu0 0.0
      %1562 = vmatprep.subr.mxu0 0.0
      %1563 = vmatpush1.msra.mxu0 0.0
      %1564 = vmatprep.subr.mxu0 0.0
      %1565 = vmatpush1.msra.mxu0 0.0
      %1566 = vmatprep.subr.mxu0 0.0
      %1567 = vmatpush1.msra.mxu0 0.0
      %1568 = vmatprep.subr.mxu0 0.0
      %1569 = vmatpush1.msra.mxu0 0.0
      %1570 = vmatprep.subr.mxu0 0.0
      %1571 = vmatpush1.msra.mxu0 0.0
      %1572 = vmatprep.subr.mxu0 0.0
      %1573 = vmatpush1.msra.mxu0 %v1542
      %1574 = vmatprep.subr.mxu0 0.0
      %1575 = vmatpush1.msra.mxu0 %v697
      %1576 = vmatprep.subr.mxu0 0.0
      %1577 = vmatpush2.msra.mxu0 0.0
      %1578 = vmatprep.subr.mxu0 0.0
      %1579 = vmatpush2.msra.mxu0 0.0
      %1580 = vmatprep.subr.mxu0 0.0
      %1581 = vmatpush2.msra.mxu0 0.0
      %1582 = vmatprep.subr.mxu0 0.0
      %1583 = vmatpush2.msra.mxu0 0.0
      %1584 = vmatprep.subr.mxu0 0.0
      %1585 = vmatpush2.msra.mxu0 0.0
      %1586 = vmatprep.subr.mxu0 0.0
      %1587 = vmatpush2.msra.mxu0 0.0
      %1588 = vmatprep.subr.mxu0 0.0
      %1589 = vmatpush2.msra.mxu0 0.0
      %1590 = vmatprep.subr.mxu0 0.0
      %1591 = vmatpush2.msra.mxu0 0.0
      %1592 = vmatprep.subr.mxu0 0.0
      %1593 = vmatpush2.msra.mxu0 0.0
      %1594 = vmatprep.subr.mxu0 0.0
      %1595 = vmatpush2.msra.mxu0 0.0
      %1596 = vmatprep.subr.mxu0 0.0
      %1597 = vmatpush2.msra.mxu0 0.0
      %1598 = vmatprep.subr.mxu0 0.0
      %1599 = vmatpush2.msra.mxu0 0.0
      %1600 = vmatprep.subr.mxu0 0.0
      %1601 = vmatpush2.msra.mxu0 0.0
      %1602 = vmatprep.subr.mxu0 0.0
      %1603 = vmatpush2.msra.mxu0 0.0
      %1604 = vmatprep.subr.mxu0 0.0
      %1605 = vmatpush2.msra.mxu0 0.0
      %1606 = vmatprep.subr.mxu0 0.0
      %1607 = vmatpush2.msra.mxu0 0.0
      %1608 = vmatprep.mubr.f32.mxu0 0.0
      %1609 = vmatmul.mubr.f32.gmra.mxu0 %v1446
      %v1610 = vpop.f32.mrf.mxu0
      %v1611 = vadd.f32 %v1287, %v1610
      %v1612 = vpop.f32.mrf.mxu0
      %1613 = vmatprep.mubr.f32.mxu0 0.0
      %1614 = vmatmul.mubr.f32.gmra.mxu0 %v1449
      %v1615 = vpop.f32.mrf.mxu0
      %v1616 = vadd.f32 %v1292, %v1615
      %v1617 = vpop.f32.mrf.mxu0
      %1618 = vmatprep.mubr.f32.mxu0 0.0
      %1619 = vmatmul.mubr.f32.gmra.mxu0 %v1452
      %v1620 = vpop.f32.mrf.mxu0
      %v1621 = vadd.f32 %v1297, %v1620
      %v1622 = vpop.f32.mrf.mxu0
      %1623 = vmatprep.mubr.f32.mxu0 0.0
      %1624 = vmatmul.mubr.f32.gmra.mxu0 %v1455
      %v1625 = vpop.f32.mrf.mxu0
      %v1626 = vadd.f32 %v1302, %v1625
      %v1627 = vpop.f32.mrf.mxu0
      %1628 = vmatprep.mubr.f32.mxu0 0.0
      %1629 = vmatmul.mubr.f32.gmra.mxu0 %v1458
      %v1630 = vpop.f32.mrf.mxu0
      %v1631 = vadd.f32 %v1307, %v1630
      %v1632 = vpop.f32.mrf.mxu0
      %1633 = vmatprep.mubr.f32.mxu0 0.0
      %1634 = vmatmul.mubr.f32.gmra.mxu0 %v1461
      %v1635 = vpop.f32.mrf.mxu0
      %v1636 = vadd.f32 %v1312, %v1635
      %v1637 = vpop.f32.mrf.mxu0
      %1638 = vmatprep.mubr.f32.mxu0 0.0
      %1639 = vmatmul.mubr.f32.gmra.mxu0 %v1464
      %v1640 = vpop.f32.mrf.mxu0
      %v1641 = vadd.f32 %v1317, %v1640
      %v1642 = vpop.f32.mrf.mxu0
      %1643 = vmatprep.mubr.f32.mxu0 0.0
      %1644 = vmatmul.mubr.f32.gmra.mxu0 %v1467
      %v1645 = vpop.f32.mrf.mxu0
      %v1646 = vadd.f32 %v1322, %v1645
      %v1647 = vpop.f32.mrf.mxu0
      %1648 = vmatprep.mubr.f32.mxu0 0.0
      %1649 = vmatmul.mubr.f32.gmra.mxu0 %v1470
      %v1650 = vpop.f32.mrf.mxu0
      %v1651 = vadd.f32 %v1327, %v1650
      %v1652 = vpop.f32.mrf.mxu0
      %1653 = vmatprep.mubr.f32.mxu0 0.0
      %1654 = vmatmul.mubr.f32.gmra.mxu0 %v1473
      %v1655 = vpop.f32.mrf.mxu0
      %v1656 = vadd.f32 %v1332, %v1655
      %v1657 = vpop.f32.mrf.mxu0
      %1658 = vmatprep.mubr.f32.mxu0 0.0
      %1659 = vmatmul.mubr.f32.gmra.mxu0 %v1476
      %v1660 = vpop.f32.mrf.mxu0
      %v1661 = vadd.f32 %v1337, %v1660
      %v1662 = vpop.f32.mrf.mxu0
      %1663 = vmatprep.mubr.f32.mxu0 0.0
      %1664 = vmatmul.mubr.f32.gmra.mxu0 %v1479
      %v1665 = vpop.f32.mrf.mxu0
      %v1666 = vadd.f32 %v1342, %v1665
      %v1667 = vpop.f32.mrf.mxu0
      %1668 = vmatprep.mubr.f32.mxu0 0.0
      %1669 = vmatmul.mubr.f32.gmra.mxu0 %v1482
      %v1670 = vpop.f32.mrf.mxu0
      %v1671 = vadd.f32 %v1347, %v1670
      %v1672 = vpop.f32.mrf.mxu0
      %1673 = vmatprep.mubr.f32.mxu0 0.0
      %1674 = vmatmul.mubr.f32.gmra.mxu0 %v1485
      %v1675 = vpop.f32.mrf.mxu0
      %v1676 = vadd.f32 %v1352, %v1675
      %v1677 = vpop.f32.mrf.mxu0
      %1678 = vmatprep.mubr.f32.mxu0 0.0
      %1679 = vmatmul.mubr.f32.gmra.mxu0 %v1488
      %v1680 = vpop.f32.mrf.mxu0
      %v1681 = vadd.f32 %v1357, %v1680
      %v1682 = vpop.f32.mrf.mxu0
      %1683 = vmatprep.mubr.f32.mxu0 0.0
      %1684 = vmatmul.mubr.f32.gmra.mxu0 %v1491
      %v1685 = vpop.f32.mrf.mxu0
      %v1686 = vadd.f32 %v1362, %v1685
      %v1687 = vpop.f32.mrf.mxu0
      %1688 = vmatprep.mubr.f32.mxu0 0.0
      %1689 = vmatmul.mubr.f32.gmra.mxu0 %v1494
      %v1690 = vpop.f32.mrf.mxu0
      %v1691 = vadd.f32 %v1367, %v1690
      %v1692 = vpop.f32.mrf.mxu0
      %1693 = vmatprep.mubr.f32.mxu0 0.0
      %1694 = vmatmul.mubr.f32.gmra.mxu0 %v1497
      %v1695 = vpop.f32.mrf.mxu0
      %v1696 = vadd.f32 %v1372, %v1695
      %v1697 = vpop.f32.mrf.mxu0
      %1698 = vmatprep.mubr.f32.mxu0 0.0
      %1699 = vmatmul.mubr.f32.gmra.mxu0 %v1500
      %v1700 = vpop.f32.mrf.mxu0
      %v1701 = vadd.f32 %v1377, %v1700
      %v1702 = vpop.f32.mrf.mxu0
      %1703 = vmatprep.mubr.f32.mxu0 0.0
      %1704 = vmatmul.mubr.f32.gmra.mxu0 %v1503
      %v1705 = vpop.f32.mrf.mxu0
      %v1706 = vadd.f32 %v1382, %v1705
      %v1707 = vpop.f32.mrf.mxu0
      %1708 = vmatprep.mubr.f32.mxu0 0.0
      %1709 = vmatmul.mubr.f32.gmra.mxu0 %v1506
      %v1710 = vpop.f32.mrf.mxu0
      %v1711 = vadd.f32 %v1387, %v1710
      %v1712 = vpop.f32.mrf.mxu0
      %1713 = vmatprep.mubr.f32.mxu0 0.0
      %1714 = vmatmul.mubr.f32.gmra.mxu0 %v1509
      %v1715 = vpop.f32.mrf.mxu0
      %v1716 = vadd.f32 %v1392, %v1715
      %v1717 = vpop.f32.mrf.mxu0
      %1718 = vmatprep.mubr.f32.mxu0 0.0
      %1719 = vmatmul.mubr.f32.gmra.mxu0 %v1512
      %v1720 = vpop.f32.mrf.mxu0
      %v1721 = vadd.f32 %v1397, %v1720
      %v1722 = vpop.f32.mrf.mxu0
      %1723 = vmatprep.mubr.f32.mxu0 0.0
      %1724 = vmatmul.mubr.f32.gmra.mxu0 %v1515
      %v1725 = vpop.f32.mrf.mxu0
      %v1726 = vadd.f32 %v1402, %v1725
      %v1727 = vpop.f32.mrf.mxu0
      %1728 = vmatprep.mubr.f32.mxu0 0.0
      %1729 = vmatmul.mubr.f32.gmra.mxu0 %v1518
      %v1730 = vpop.f32.mrf.mxu0
      %v1731 = vadd.f32 %v1407, %v1730
      %v1732 = vpop.f32.mrf.mxu0
      %1733 = vmatprep.mubr.f32.mxu0 0.0
      %1734 = vmatmul.mubr.f32.gmra.mxu0 %v1521
      %v1735 = vpop.f32.mrf.mxu0
      %v1736 = vadd.f32 %v1412, %v1735
      %v1737 = vpop.f32.mrf.mxu0
      %1738 = vmatprep.mubr.f32.mxu0 0.0
      %1739 = vmatmul.mubr.f32.gmra.mxu0 %v1524
      %v1740 = vpop.f32.mrf.mxu0
      %v1741 = vadd.f32 %v1417, %v1740
      %v1742 = vpop.f32.mrf.mxu0
      %1743 = vmatprep.mubr.f32.mxu0 0.0
      %1744 = vmatmul.mubr.f32.gmra.mxu0 %v1527
      %v1745 = vpop.f32.mrf.mxu0
      %v1746 = vadd.f32 %v1422, %v1745
      %v1747 = vpop.f32.mrf.mxu0
      %1748 = vmatprep.mubr.f32.mxu0 0.0
      %1749 = vmatmul.mubr.f32.gmra.mxu0 %v1530
      %v1750 = vpop.f32.mrf.mxu0
      %v1751 = vadd.f32 %v1427, %v1750
      %v1752 = vpop.f32.mrf.mxu0
      %1753 = vmatprep.mubr.f32.mxu0 0.0
      %1754 = vmatmul.mubr.f32.gmra.mxu0 %v1533
      %v1755 = vpop.f32.mrf.mxu0
      %v1756 = vadd.f32 %v1432, %v1755
      %v1757 = vpop.f32.mrf.mxu0
      %1758 = vmatprep.mubr.f32.mxu0 0.0
      %1759 = vmatmul.mubr.f32.gmra.mxu0 %v1536
      %v1760 = vpop.f32.mrf.mxu0
      %v1761 = vadd.f32 %v1437, %v1760
      %v1762 = vpop.f32.mrf.mxu0
      %1763 = vmatprep.mubr.f32.mxu0 0.0
      %1764 = vmatmul.mubr.f32.gmra.mxu0 %v1539
      %v1765 = vpop.f32.mrf.mxu0
      %v1766 = vadd.f32 %v1442, %v1765
      %v1767 = vpop.f32.mrf.mxu0
      %1768 = vdwg.mxu0
      %s1769 = scalar_lea.vmem %s273, 48
      %v1770 = vld [vmem:[%s1769] sm:$0xff]
      %v1771 = vld [vmem:[%s1769 + $0x8] sm:$0xff]
      %v1772 = vld [vmem:[%s1769 + $0x18] sm:$0xff]
      %v1773 = vld [vmem:[%s1769 + $0x20] sm:$0xff]
      %v1774 = vld [vmem:[%s1769 + $0x30] sm:$0xff]
      %v1775 = vld [vmem:[%s1769 + $0x38] sm:$0xff]
      %v1776 = vld [vmem:[%s1769 + $0x48] sm:$0xff]
      %v1777 = vld [vmem:[%s1769 + $0x50] sm:$0xff]
      %v1778 = vld [vmem:[%s1769 + $0x60] sm:$0xff]
      %v1779 = vld [vmem:[%s1769 + $0x68] sm:$0xff]
      %v1780 = vld [vmem:[%s1769 + $0x78] sm:$0xff]
      %v1781 = vld [vmem:[%s1769 + $0x80] sm:$0xff]
      %v1782 = vld [vmem:[%s1769 + $0x90] sm:$0xff]
      %v1783 = vld [vmem:[%s1769 + $0x98] sm:$0xff]
      %v1784 = vld [vmem:[%s1769 + $0xa8] sm:$0xff]
      %v1785 = vld [vmem:[%s1769 + $0xb0] sm:$0xff]
      %v1786 = vld [vmem:[%s1769 + $0xc0] sm:$0xff]
      %v1787 = vld [vmem:[%s1769 + $0xc8] sm:$0xff]
      %v1788 = vld [vmem:[%s1769 + $0xd8] sm:$0xff]
      %v1789 = vld [vmem:[%s1769 + $0xe0] sm:$0xff]
      %v1790 = vld [vmem:[%s1769 + $0xf0] sm:$0xff]
      %v1791 = vld [vmem:[%s1769 + $0xf8] sm:$0xff]
      %v1792 = vld [vmem:[%s1769 + $0x108] sm:$0xff]
      %v1793 = vld [vmem:[%s1769 + $0x110] sm:$0xff]
      %v1794 = vld [vmem:[%s1769 + $0x120] sm:$0xff]
      %v1795 = vld [vmem:[%s1769 + $0x128] sm:$0xff]
      %v1796 = vld [vmem:[%s1769 + $0x138] sm:$0xff]
      %v1797 = vld [vmem:[%s1769 + $0x140] sm:$0xff]
      %v1798 = vld [vmem:[%s1769 + $0x150] sm:$0xff]
      %v1799 = vld [vmem:[%s1769 + $0x158] sm:$0xff]
      %v1800 = vld [vmem:[%s1769 + $0x168] sm:$0xff]
      %v1801 = vld [vmem:[%s1769 + $0x170] sm:$0xff]
      %v1802 = vld [vmem:[%s1769 + $0x1] sm:$0xff]
      %v1803 = vld [vmem:[%s1769 + $0x9] sm:$0xff]
      %v1804 = vld [vmem:[%s1769 + $0x19] sm:$0xff]
      %v1805 = vld [vmem:[%s1769 + $0x21] sm:$0xff]
      %v1806 = vld [vmem:[%s1769 + $0x31] sm:$0xff]
      %v1807 = vld [vmem:[%s1769 + $0x39] sm:$0xff]
      %v1808 = vld [vmem:[%s1769 + $0x49] sm:$0xff]
      %v1809 = vld [vmem:[%s1769 + $0x51] sm:$0xff]
      %v1810 = vld [vmem:[%s1769 + $0x61] sm:$0xff]
      %v1811 = vld [vmem:[%s1769 + $0x69] sm:$0xff]
      %v1812 = vld [vmem:[%s1769 + $0x79] sm:$0xff]
      %v1813 = vld [vmem:[%s1769 + $0x81] sm:$0xff]
      %v1814 = vld [vmem:[%s1769 + $0x91] sm:$0xff]
      %v1815 = vld [vmem:[%s1769 + $0x99] sm:$0xff]
      %v1816 = vld [vmem:[%s1769 + $0xa9] sm:$0xff]
      %v1817 = vld [vmem:[%s1769 + $0xb1] sm:$0xff]
      %v1818 = vld [vmem:[%s1769 + $0xc1] sm:$0xff]
      %v1819 = vld [vmem:[%s1769 + $0xc9] sm:$0xff]
      %v1820 = vld [vmem:[%s1769 + $0xd9] sm:$0xff]
      %v1821 = vld [vmem:[%s1769 + $0xe1] sm:$0xff]
      %v1822 = vld [vmem:[%s1769 + $0xf1] sm:$0xff]
      %v1823 = vld [vmem:[%s1769 + $0xf9] sm:$0xff]
      %v1824 = vld [vmem:[%s1769 + $0x109] sm:$0xff]
      %v1825 = vld [vmem:[%s1769 + $0x111] sm:$0xff]
      %v1826 = vld [vmem:[%s1769 + $0x121] sm:$0xff]
      %v1827 = vld [vmem:[%s1769 + $0x129] sm:$0xff]
      %v1828 = vld [vmem:[%s1769 + $0x139] sm:$0xff]
      %v1829 = vld [vmem:[%s1769 + $0x141] sm:$0xff]
      %v1830 = vld [vmem:[%s1769 + $0x151] sm:$0xff]
      %v1831 = vld [vmem:[%s1769 + $0x159] sm:$0xff]
      %v1832 = vld [vmem:[%s1769 + $0x169] sm:$0xff]
      %v1833 = vld [vmem:[%s1769 + $0x171] sm:$0xff]
      %v1834 = vld [vmem:[%s1769 + $0x2] sm:$0xff]
      %v1835 = vld [vmem:[%s1769 + $0xa] sm:$0xff]
      %v1836 = vld [vmem:[%s1769 + $0x1a] sm:$0xff]
      %v1837 = vld [vmem:[%s1769 + $0x22] sm:$0xff]
      %v1838 = vld [vmem:[%s1769 + $0x32] sm:$0xff]
      %v1839 = vld [vmem:[%s1769 + $0x3a] sm:$0xff]
      %v1840 = vld [vmem:[%s1769 + $0x4a] sm:$0xff]
      %v1841 = vld [vmem:[%s1769 + $0x52] sm:$0xff]
      %v1842 = vld [vmem:[%s1769 + $0x62] sm:$0xff]
      %v1843 = vld [vmem:[%s1769 + $0x6a] sm:$0xff]
      %v1844 = vld [vmem:[%s1769 + $0x7a] sm:$0xff]
      %v1845 = vld [vmem:[%s1769 + $0x82] sm:$0xff]
      %v1846 = vld [vmem:[%s1769 + $0x92] sm:$0xff]
      %v1847 = vld [vmem:[%s1769 + $0x9a] sm:$0xff]
      %v1848 = vld [vmem:[%s1769 + $0xaa] sm:$0xff]
      %v1849 = vld [vmem:[%s1769 + $0xb2] sm:$0xff]
      %v1850 = vld [vmem:[%s1769 + $0xc2] sm:$0xff]
      %v1851 = vld [vmem:[%s1769 + $0xca] sm:$0xff]
      %v1852 = vld [vmem:[%s1769 + $0xda] sm:$0xff]
      %v1853 = vld [vmem:[%s1769 + $0xe2] sm:$0xff]
      %v1854 = vld [vmem:[%s1769 + $0xf2] sm:$0xff]
      %v1855 = vld [vmem:[%s1769 + $0xfa] sm:$0xff]
      %v1856 = vld [vmem:[%s1769 + $0x10a] sm:$0xff]
      %v1857 = vld [vmem:[%s1769 + $0x112] sm:$0xff]
      %v1858 = vld [vmem:[%s1769 + $0x122] sm:$0xff]
      %v1859 = vld [vmem:[%s1769 + $0x12a] sm:$0xff]
      %v1860 = vld [vmem:[%s1769 + $0x13a] sm:$0xff]
      %v1861 = vld [vmem:[%s1769 + $0x142] sm:$0xff]
      %v1862 = vld [vmem:[%s1769 + $0x152] sm:$0xff]
      %v1863 = vld [vmem:[%s1769 + $0x15a] sm:$0xff]
      %v1864 = vld [vmem:[%s1769 + $0x16a] sm:$0xff]
      %v1865 = vld [vmem:[%s1769 + $0x172] sm:$0xff]
      %1898 = vrot.lane.b32.xlu0 %v1802, 4
      %v1899 = vpop.permute.xlu0 %1898
      %1900 = vrot.lane.b32.xlu0 %v1803, 4
      %v1901 = vpop.permute.xlu0 %1900
      %1902 = vrot.lane.b32.xlu0 %v1804, 4
      %v1903 = vpop.permute.xlu0 %1902
      %1904 = vrot.lane.b32.xlu0 %v1805, 4
      %v1905 = vpop.permute.xlu0 %1904
      %1906 = vrot.lane.b32.xlu0 %v1806, 4
      %v1907 = vpop.permute.xlu0 %1906
      %1908 = vrot.lane.b32.xlu0 %v1807, 4
      %v1909 = vpop.permute.xlu0 %1908
      %1910 = vrot.lane.b32.xlu0 %v1808, 4
      %v1911 = vpop.permute.xlu0 %1910
      %1912 = vrot.lane.b32.xlu0 %v1809, 4
      %v1913 = vpop.permute.xlu0 %1912
      %1914 = vrot.lane.b32.xlu0 %v1810, 4
      %v1915 = vpop.permute.xlu0 %1914
      %1916 = vrot.lane.b32.xlu0 %v1811, 4
      %v1917 = vpop.permute.xlu0 %1916
      %1918 = vrot.lane.b32.xlu0 %v1812, 4
      %v1919 = vpop.permute.xlu0 %1918
      %1920 = vrot.lane.b32.xlu0 %v1813, 4
      %v1921 = vpop.permute.xlu0 %1920
      %1922 = vrot.lane.b32.xlu0 %v1814, 4
      %v1923 = vpop.permute.xlu0 %1922
      %1924 = vrot.lane.b32.xlu0 %v1815, 4
      %v1925 = vpop.permute.xlu0 %1924
      %1926 = vrot.lane.b32.xlu0 %v1816, 4
      %v1927 = vpop.permute.xlu0 %1926
      %1928 = vrot.lane.b32.xlu0 %v1817, 4
      %v1929 = vpop.permute.xlu0 %1928
      %1930 = vrot.lane.b32.xlu0 %v1818, 4
      %v1931 = vpop.permute.xlu0 %1930
      %1932 = vrot.lane.b32.xlu0 %v1819, 4
      %v1933 = vpop.permute.xlu0 %1932
      %1934 = vrot.lane.b32.xlu0 %v1820, 4
      %v1935 = vpop.permute.xlu0 %1934
      %1936 = vrot.lane.b32.xlu0 %v1821, 4
      %v1937 = vpop.permute.xlu0 %1936
      %1938 = vrot.lane.b32.xlu0 %v1822, 4
      %v1939 = vpop.permute.xlu0 %1938
      %1940 = vrot.lane.b32.xlu0 %v1823, 4
      %v1941 = vpop.permute.xlu0 %1940
      %1942 = vrot.lane.b32.xlu0 %v1824, 4
      %v1943 = vpop.permute.xlu0 %1942
      %1944 = vrot.lane.b32.xlu0 %v1825, 4
      %v1945 = vpop.permute.xlu0 %1944
      %1946 = vrot.lane.b32.xlu0 %v1826, 4
      %v1947 = vpop.permute.xlu0 %1946
      %1948 = vrot.lane.b32.xlu0 %v1827, 4
      %v1949 = vpop.permute.xlu0 %1948
      %1950 = vrot.lane.b32.xlu0 %v1828, 4
      %v1951 = vpop.permute.xlu0 %1950
      %1952 = vrot.lane.b32.xlu0 %v1829, 4
      %v1953 = vpop.permute.xlu0 %1952
      %1954 = vrot.lane.b32.xlu0 %v1830, 4
      %v1955 = vpop.permute.xlu0 %1954
      %1956 = vrot.lane.b32.xlu0 %v1831, 4
      %v1957 = vpop.permute.xlu0 %1956
      %1958 = vrot.lane.b32.xlu0 %v1832, 4
      %v1959 = vpop.permute.xlu0 %1958
      %1960 = vrot.lane.b32.xlu0 %v1833, 4
      %v1961 = vpop.permute.xlu0 %1960
      %2026 = vrot.lane.b32.xlu0 %v1834, 8
      %v2027 = vpop.permute.xlu0 %2026
      %2028 = vrot.lane.b32.xlu0 %v1835, 8
      %v2029 = vpop.permute.xlu0 %2028
      %2030 = vrot.lane.b32.xlu0 %v1836, 8
      %v2031 = vpop.permute.xlu0 %2030
      %2032 = vrot.lane.b32.xlu0 %v1837, 8
      %v2033 = vpop.permute.xlu0 %2032
      %2034 = vrot.lane.b32.xlu0 %v1838, 8
      %v2035 = vpop.permute.xlu0 %2034
      %2036 = vrot.lane.b32.xlu0 %v1839, 8
      %v2037 = vpop.permute.xlu0 %2036
      %2038 = vrot.lane.b32.xlu0 %v1840, 8
      %v2039 = vpop.permute.xlu0 %2038
      %2040 = vrot.lane.b32.xlu0 %v1841, 8
      %v2041 = vpop.permute.xlu0 %2040
      %2042 = vrot.lane.b32.xlu0 %v1842, 8
      %v2043 = vpop.permute.xlu0 %2042
      %2044 = vrot.lane.b32.xlu0 %v1843, 8
      %v2045 = vpop.permute.xlu0 %2044
      %2046 = vrot.lane.b32.xlu0 %v1844, 8
      %v2047 = vpop.permute.xlu0 %2046
      %2048 = vrot.lane.b32.xlu0 %v1845, 8
      %v2049 = vpop.permute.xlu0 %2048
      %2050 = vrot.lane.b32.xlu0 %v1846, 8
      %v2051 = vpop.permute.xlu0 %2050
      %2052 = vrot.lane.b32.xlu0 %v1847, 8
      %v2053 = vpop.permute.xlu0 %2052
      %2054 = vrot.lane.b32.xlu0 %v1848, 8
      %v2055 = vpop.permute.xlu0 %2054
      %2056 = vrot.lane.b32.xlu0 %v1849, 8
      %v2057 = vpop.permute.xlu0 %2056
      %2058 = vrot.lane.b32.xlu0 %v1850, 8
      %v2059 = vpop.permute.xlu0 %2058
      %2060 = vrot.lane.b32.xlu0 %v1851, 8
      %v2061 = vpop.permute.xlu0 %2060
      %2062 = vrot.lane.b32.xlu0 %v1852, 8
      %v2063 = vpop.permute.xlu0 %2062
      %2064 = vrot.lane.b32.xlu0 %v1853, 8
      %v2065 = vpop.permute.xlu0 %2064
      %2066 = vrot.lane.b32.xlu0 %v1854, 8
      %v2067 = vpop.permute.xlu0 %2066
      %2068 = vrot.lane.b32.xlu0 %v1855, 8
      %v2069 = vpop.permute.xlu0 %2068
      %2070 = vrot.lane.b32.xlu0 %v1856, 8
      %v2071 = vpop.permute.xlu0 %2070
      %2072 = vrot.lane.b32.xlu0 %v1857, 8
      %v2073 = vpop.permute.xlu0 %2072
      %2074 = vrot.lane.b32.xlu0 %v1858, 8
      %v2075 = vpop.permute.xlu0 %2074
      %2076 = vrot.lane.b32.xlu0 %v1859, 8
      %v2077 = vpop.permute.xlu0 %2076
      %2078 = vrot.lane.b32.xlu0 %v1860, 8
      %v2079 = vpop.permute.xlu0 %2078
      %2080 = vrot.lane.b32.xlu0 %v1861, 8
      %v2081 = vpop.permute.xlu0 %2080
      %2082 = vrot.lane.b32.xlu0 %v1862, 8
      %v2083 = vpop.permute.xlu0 %2082
      %2084 = vrot.lane.b32.xlu0 %v1863, 8
      %v2085 = vpop.permute.xlu0 %2084
      %2086 = vrot.lane.b32.xlu0 %v1864, 8
      %v2087 = vpop.permute.xlu0 %2086
      %2088 = vrot.lane.b32.xlu0 %v1865, 8
      %v2089 = vpop.permute.xlu0 %2088
      %v2122 = vsel %vm631, %v1770, %v1899
      %v2123 = vsel %vm631, %v1771, %v1901
      %v2124 = vsel %vm631, %v1772, %v1903
      %v2125 = vsel %vm631, %v1773, %v1905
      %v2126 = vsel %vm631, %v1774, %v1907
      %v2127 = vsel %vm631, %v1775, %v1909
      %v2128 = vsel %vm631, %v1776, %v1911
      %v2129 = vsel %vm631, %v1777, %v1913
      %v2130 = vsel %vm631, %v1778, %v1915
      %v2131 = vsel %vm631, %v1779, %v1917
      %v2132 = vsel %vm631, %v1780, %v1919
      %v2133 = vsel %vm631, %v1781, %v1921
      %v2134 = vsel %vm631, %v1782, %v1923
      %v2135 = vsel %vm631, %v1783, %v1925
      %v2136 = vsel %vm631, %v1784, %v1927
      %v2137 = vsel %vm631, %v1785, %v1929
      %v2138 = vsel %vm631, %v1786, %v1931
      %v2139 = vsel %vm631, %v1787, %v1933
      %v2140 = vsel %vm631, %v1788, %v1935
      %v2141 = vsel %vm631, %v1789, %v1937
      %v2142 = vsel %vm631, %v1790, %v1939
      %v2143 = vsel %vm631, %v1791, %v1941
      %v2144 = vsel %vm631, %v1792, %v1943
      %v2145 = vsel %vm631, %v1793, %v1945
      %v2146 = vsel %vm631, %v1794, %v1947
      %v2147 = vsel %vm631, %v1795, %v1949
      %v2148 = vsel %vm631, %v1796, %v1951
      %v2149 = vsel %vm631, %v1797, %v1953
      %v2150 = vsel %vm631, %v1798, %v1955
      %v2151 = vsel %vm631, %v1799, %v1957
      %v2152 = vsel %vm631, %v1800, %v1959
      %v2153 = vsel %vm631, %v1801, %v1961
      %v2154 = vsel %vm664, %v2122, %v2027
      %v2155 = vsel %vm664, %v2123, %v2029
      %v2156 = vsel %vm664, %v2124, %v2031
      %v2157 = vsel %vm664, %v2125, %v2033
      %v2158 = vsel %vm664, %v2126, %v2035
      %v2159 = vsel %vm664, %v2127, %v2037
      %v2160 = vsel %vm664, %v2128, %v2039
      %v2161 = vsel %vm664, %v2129, %v2041
      %v2162 = vsel %vm664, %v2130, %v2043
      %v2163 = vsel %vm664, %v2131, %v2045
      %v2164 = vsel %vm664, %v2132, %v2047
      %v2165 = vsel %vm664, %v2133, %v2049
      %v2166 = vsel %vm664, %v2134, %v2051
      %v2167 = vsel %vm664, %v2135, %v2053
      %v2168 = vsel %vm664, %v2136, %v2055
      %v2169 = vsel %vm664, %v2137, %v2057
      %v2170 = vsel %vm664, %v2138, %v2059
      %v2171 = vsel %vm664, %v2139, %v2061
      %v2172 = vsel %vm664, %v2140, %v2063
      %v2173 = vsel %vm664, %v2141, %v2065
      %v2174 = vsel %vm664, %v2142, %v2067
      %v2175 = vsel %vm664, %v2143, %v2069
      %v2176 = vsel %vm664, %v2144, %v2071
      %v2177 = vsel %vm664, %v2145, %v2073
      %v2178 = vsel %vm664, %v2146, %v2075
      %v2179 = vsel %vm664, %v2147, %v2077
      %v2180 = vsel %vm664, %v2148, %v2079
      %v2181 = vsel %vm664, %v2149, %v2081
      %v2182 = vsel %vm664, %v2150, %v2083
      %v2183 = vsel %vm664, %v2151, %v2085
      %v2184 = vsel %vm664, %v2152, %v2087
      %v2185 = vsel %vm664, %v2153, %v2089
      %s2186 = scalar_lea.vmem %s1, 32
      %v2187 = vld [vmem:[%s2186] sm:$0xff]
      %v2188 = vld [vmem:[%s2186 + $0x8] sm:$0xf]
      %v2190 = vsel %vm1119, %v2154, 0
      %v2193 = vsel %vm1119, %v2155, 0
      %v2196 = vsel %vm1119, %v2156, 0
      %v2199 = vsel %vm1119, %v2157, 0
      %v2202 = vsel %vm1119, %v2158, 0
      %v2205 = vsel %vm1119, %v2159, 0
      %v2208 = vsel %vm1119, %v2160, 0
      %v2211 = vsel %vm1119, %v2161, 0
      %v2214 = vsel %vm1119, %v2162, 0
      %v2217 = vsel %vm1119, %v2163, 0
      %v2220 = vsel %vm1119, %v2164, 0
      %v2223 = vsel %vm1119, %v2165, 0
      %v2226 = vsel %vm1119, %v2166, 0
      %v2229 = vsel %vm1119, %v2167, 0
      %v2232 = vsel %vm1119, %v2168, 0
      %v2235 = vsel %vm1119, %v2169, 0
      %v2238 = vsel %vm1119, %v2170, 0
      %v2241 = vsel %vm1119, %v2171, 0
      %v2244 = vsel %vm1119, %v2172, 0
      %v2247 = vsel %vm1119, %v2173, 0
      %v2250 = vsel %vm1119, %v2174, 0
      %v2253 = vsel %vm1119, %v2175, 0
      %v2256 = vsel %vm1119, %v2176, 0
      %v2259 = vsel %vm1119, %v2177, 0
      %v2262 = vsel %vm1119, %v2178, 0
      %v2265 = vsel %vm1119, %v2179, 0
      %v2268 = vsel %vm1119, %v2180, 0
      %v2271 = vsel %vm1119, %v2181, 0
      %v2274 = vsel %vm1119, %v2182, 0
      %v2277 = vsel %vm1119, %v2183, 0
      %v2280 = vsel %vm1119, %v2184, 0
      %v2283 = vsel %vm1119, %v2185, 0
      %v2286 = vsel %vm1216, %v2188, 0
      %2288 = vmatprep.subr.mxu0 0.0
      %2289 = vmatpush1.msra.mxu0 0.0
      %2290 = vmatprep.subr.mxu0 0.0
      %2291 = vmatpush1.msra.mxu0 0.0
      %2292 = vmatprep.subr.mxu0 0.0
      %2293 = vmatpush1.msra.mxu0 0.0
      %2294 = vmatprep.subr.mxu0 0.0
      %2295 = vmatpush1.msra.mxu0 0.0
      %2296 = vmatprep.subr.mxu0 0.0
      %2297 = vmatpush1.msra.mxu0 0.0
      %2298 = vmatprep.subr.mxu0 0.0
      %2299 = vmatpush1.msra.mxu0 0.0
      %2300 = vmatprep.subr.mxu0 0.0
      %2301 = vmatpush1.msra.mxu0 0.0
      %2302 = vmatprep.subr.mxu0 0.0
      %2303 = vmatpush1.msra.mxu0 0.0
      %2304 = vmatprep.subr.mxu0 0.0
      %2305 = vmatpush1.msra.mxu0 0.0
      %2306 = vmatprep.subr.mxu0 0.0
      %2307 = vmatpush1.msra.mxu0 0.0
      %2308 = vmatprep.subr.mxu0 0.0
      %2309 = vmatpush1.msra.mxu0 0.0
      %2310 = vmatprep.subr.mxu0 0.0
      %2311 = vmatpush1.msra.mxu0 0.0
      %2312 = vmatprep.subr.mxu0 0.0
      %2313 = vmatpush1.msra.mxu0 0.0
      %2314 = vmatprep.subr.mxu0 0.0
      %2315 = vmatpush1.msra.mxu0 0.0
      %2316 = vmatprep.subr.mxu0 0.0
      %2317 = vmatpush1.msra.mxu0 %v2286
      %2318 = vmatprep.subr.mxu0 0.0
      %2319 = vmatpush1.msra.mxu0 %v2187
      %2320 = vmatprep.subr.mxu0 0.0
      %2321 = vmatpush2.msra.mxu0 0.0
      %2322 = vmatprep.subr.mxu0 0.0
      %2323 = vmatpush2.msra.mxu0 0.0
      %2324 = vmatprep.subr.mxu0 0.0
      %2325 = vmatpush2.msra.mxu0 0.0
      %2326 = vmatprep.subr.mxu0 0.0
      %2327 = vmatpush2.msra.mxu0 0.0
      %2328 = vmatprep.subr.mxu0 0.0
      %2329 = vmatpush2.msra.mxu0 0.0
      %2330 = vmatprep.subr.mxu0 0.0
      %2331 = vmatpush2.msra.mxu0 0.0
      %2332 = vmatprep.subr.mxu0 0.0
      %2333 = vmatpush2.msra.mxu0 0.0
      %2334 = vmatprep.subr.mxu0 0.0
      %2335 = vmatpush2.msra.mxu0 0.0
      %2336 = vmatprep.subr.mxu0 0.0
      %2337 = vmatpush2.msra.mxu0 0.0
      %2338 = vmatprep.subr.mxu0 0.0
      %2339 = vmatpush2.msra.mxu0 0.0
      %2340 = vmatprep.subr.mxu0 0.0
      %2341 = vmatpush2.msra.mxu0 0.0
      %2342 = vmatprep.subr.mxu0 0.0
      %2343 = vmatpush2.msra.mxu0 0.0
      %2344 = vmatprep.subr.mxu0 0.0
      %2345 = vmatpush2.msra.mxu0 0.0
      %2346 = vmatprep.subr.mxu0 0.0
      %2347 = vmatpush2.msra.mxu0 0.0
      %2348 = vmatprep.subr.mxu0 0.0
      %2349 = vmatpush2.msra.mxu0 0.0
      %2350 = vmatprep.subr.mxu0 0.0
      %2351 = vmatpush2.msra.mxu0 0.0
      %2352 = vmatprep.mubr.f32.mxu0 0.0
      %2353 = vmatmul.mubr.f32.gmra.mxu0 %v2190
      %v2354 = vpop.f32.mrf.mxu0
      %v2355 = vadd.f32 0.0, %v2354
      %v2356 = vpop.f32.mrf.mxu0
      %2357 = vmatprep.mubr.f32.mxu0 0.0
      %2358 = vmatmul.mubr.f32.gmra.mxu0 %v2193
      %v2359 = vpop.f32.mrf.mxu0
      %v2360 = vadd.f32 0.0, %v2359
      %v2361 = vpop.f32.mrf.mxu0
      %2362 = vmatprep.mubr.f32.mxu0 0.0
      %2363 = vmatmul.mubr.f32.gmra.mxu0 %v2196
      %v2364 = vpop.f32.mrf.mxu0
      %v2365 = vadd.f32 0.0, %v2364
      %v2366 = vpop.f32.mrf.mxu0
      %2367 = vmatprep.mubr.f32.mxu0 0.0
      %2368 = vmatmul.mubr.f32.gmra.mxu0 %v2199
      %v2369 = vpop.f32.mrf.mxu0
      %v2370 = vadd.f32 0.0, %v2369
      %v2371 = vpop.f32.mrf.mxu0
      %2372 = vmatprep.mubr.f32.mxu0 0.0
      %2373 = vmatmul.mubr.f32.gmra.mxu0 %v2202
      %v2374 = vpop.f32.mrf.mxu0
      %v2375 = vadd.f32 0.0, %v2374
      %v2376 = vpop.f32.mrf.mxu0
      %2377 = vmatprep.mubr.f32.mxu0 0.0
      %2378 = vmatmul.mubr.f32.gmra.mxu0 %v2205
      %v2379 = vpop.f32.mrf.mxu0
      %v2380 = vadd.f32 0.0, %v2379
      %v2381 = vpop.f32.mrf.mxu0
      %2382 = vmatprep.mubr.f32.mxu0 0.0
      %2383 = vmatmul.mubr.f32.gmra.mxu0 %v2208
      %v2384 = vpop.f32.mrf.mxu0
      %v2385 = vadd.f32 0.0, %v2384
      %v2386 = vpop.f32.mrf.mxu0
      %2387 = vmatprep.mubr.f32.mxu0 0.0
      %2388 = vmatmul.mubr.f32.gmra.mxu0 %v2211
      %v2389 = vpop.f32.mrf.mxu0
      %v2390 = vadd.f32 0.0, %v2389
      %v2391 = vpop.f32.mrf.mxu0
      %2392 = vmatprep.mubr.f32.mxu0 0.0
      %2393 = vmatmul.mubr.f32.gmra.mxu0 %v2214
      %v2394 = vpop.f32.mrf.mxu0
      %v2395 = vadd.f32 0.0, %v2394
      %v2396 = vpop.f32.mrf.mxu0
      %2397 = vmatprep.mubr.f32.mxu0 0.0
      %2398 = vmatmul.mubr.f32.gmra.mxu0 %v2217
      %v2399 = vpop.f32.mrf.mxu0
      %v2400 = vadd.f32 0.0, %v2399
      %v2401 = vpop.f32.mrf.mxu0
      %2402 = vmatprep.mubr.f32.mxu0 0.0
      %2403 = vmatmul.mubr.f32.gmra.mxu0 %v2220
      %v2404 = vpop.f32.mrf.mxu0
      %v2405 = vadd.f32 0.0, %v2404
      %v2406 = vpop.f32.mrf.mxu0
      %2407 = vmatprep.mubr.f32.mxu0 0.0
      %2408 = vmatmul.mubr.f32.gmra.mxu0 %v2223
      %v2409 = vpop.f32.mrf.mxu0
      %v2410 = vadd.f32 0.0, %v2409
      %v2411 = vpop.f32.mrf.mxu0
      %2412 = vmatprep.mubr.f32.mxu0 0.0
      %2413 = vmatmul.mubr.f32.gmra.mxu0 %v2226
      %v2414 = vpop.f32.mrf.mxu0
      %v2415 = vadd.f32 0.0, %v2414
      %v2416 = vpop.f32.mrf.mxu0
      %2417 = vmatprep.mubr.f32.mxu0 0.0
      %2418 = vmatmul.mubr.f32.gmra.mxu0 %v2229
      %v2419 = vpop.f32.mrf.mxu0
      %v2420 = vadd.f32 0.0, %v2419
      %v2421 = vpop.f32.mrf.mxu0
      %2422 = vmatprep.mubr.f32.mxu0 0.0
      %2423 = vmatmul.mubr.f32.gmra.mxu0 %v2232
      %v2424 = vpop.f32.mrf.mxu0
      %v2425 = vadd.f32 0.0, %v2424
      %v2426 = vpop.f32.mrf.mxu0
      %2427 = vmatprep.mubr.f32.mxu0 0.0
      %2428 = vmatmul.mubr.f32.gmra.mxu0 %v2235
      %v2429 = vpop.f32.mrf.mxu0
      %v2430 = vadd.f32 0.0, %v2429
      %v2431 = vpop.f32.mrf.mxu0
      %2432 = vmatprep.mubr.f32.mxu0 0.0
      %2433 = vmatmul.mubr.f32.gmra.mxu0 %v2238
      %v2434 = vpop.f32.mrf.mxu0
      %v2435 = vadd.f32 0.0, %v2434
      %v2436 = vpop.f32.mrf.mxu0
      %2437 = vmatprep.mubr.f32.mxu0 0.0
      %2438 = vmatmul.mubr.f32.gmra.mxu0 %v2241
      %v2439 = vpop.f32.mrf.mxu0
      %v2440 = vadd.f32 0.0, %v2439
      %v2441 = vpop.f32.mrf.mxu0
      %2442 = vmatprep.mubr.f32.mxu0 0.0
      %2443 = vmatmul.mubr.f32.gmra.mxu0 %v2244
      %v2444 = vpop.f32.mrf.mxu0
      %v2445 = vadd.f32 0.0, %v2444
      %v2446 = vpop.f32.mrf.mxu0
      %2447 = vmatprep.mubr.f32.mxu0 0.0
      %2448 = vmatmul.mubr.f32.gmra.mxu0 %v2247
      %v2449 = vpop.f32.mrf.mxu0
      %v2450 = vadd.f32 0.0, %v2449
      %v2451 = vpop.f32.mrf.mxu0
      %2452 = vmatprep.mubr.f32.mxu0 0.0
      %2453 = vmatmul.mubr.f32.gmra.mxu0 %v2250
      %v2454 = vpop.f32.mrf.mxu0
      %v2455 = vadd.f32 0.0, %v2454
      %v2456 = vpop.f32.mrf.mxu0
      %2457 = vmatprep.mubr.f32.mxu0 0.0
      %2458 = vmatmul.mubr.f32.gmra.mxu0 %v2253
      %v2459 = vpop.f32.mrf.mxu0
      %v2460 = vadd.f32 0.0, %v2459
      %v2461 = vpop.f32.mrf.mxu0
      %2462 = vmatprep.mubr.f32.mxu0 0.0
      %2463 = vmatmul.mubr.f32.gmra.mxu0 %v2256
      %v2464 = vpop.f32.mrf.mxu0
      %v2465 = vadd.f32 0.0, %v2464
      %v2466 = vpop.f32.mrf.mxu0
      %2467 = vmatprep.mubr.f32.mxu0 0.0
      %2468 = vmatmul.mubr.f32.gmra.mxu0 %v2259
      %v2469 = vpop.f32.mrf.mxu0
      %v2470 = vadd.f32 0.0, %v2469
      %v2471 = vpop.f32.mrf.mxu0
      %2472 = vmatprep.mubr.f32.mxu0 0.0
      %2473 = vmatmul.mubr.f32.gmra.mxu0 %v2262
      %v2474 = vpop.f32.mrf.mxu0
      %v2475 = vadd.f32 0.0, %v2474
      %v2476 = vpop.f32.mrf.mxu0
      %2477 = vmatprep.mubr.f32.mxu0 0.0
      %2478 = vmatmul.mubr.f32.gmra.mxu0 %v2265
      %v2479 = vpop.f32.mrf.mxu0
      %v2480 = vadd.f32 0.0, %v2479
      %v2481 = vpop.f32.mrf.mxu0
      %2482 = vmatprep.mubr.f32.mxu0 0.0
      %2483 = vmatmul.mubr.f32.gmra.mxu0 %v2268
      %v2484 = vpop.f32.mrf.mxu0
      %v2485 = vadd.f32 0.0, %v2484
      %v2486 = vpop.f32.mrf.mxu0
      %2487 = vmatprep.mubr.f32.mxu0 0.0
      %2488 = vmatmul.mubr.f32.gmra.mxu0 %v2271
      %v2489 = vpop.f32.mrf.mxu0
      %v2490 = vadd.f32 0.0, %v2489
      %v2491 = vpop.f32.mrf.mxu0
      %2492 = vmatprep.mubr.f32.mxu0 0.0
      %2493 = vmatmul.mubr.f32.gmra.mxu0 %v2274
      %v2494 = vpop.f32.mrf.mxu0
      %v2495 = vadd.f32 0.0, %v2494
      %v2496 = vpop.f32.mrf.mxu0
      %2497 = vmatprep.mubr.f32.mxu0 0.0
      %2498 = vmatmul.mubr.f32.gmra.mxu0 %v2277
      %v2499 = vpop.f32.mrf.mxu0
      %v2500 = vadd.f32 0.0, %v2499
      %v2501 = vpop.f32.mrf.mxu0
      %2502 = vmatprep.mubr.f32.mxu0 0.0
      %2503 = vmatmul.mubr.f32.gmra.mxu0 %v2280
      %v2504 = vpop.f32.mrf.mxu0
      %v2505 = vadd.f32 0.0, %v2504
      %v2506 = vpop.f32.mrf.mxu0
      %2507 = vmatprep.mubr.f32.mxu0 0.0
      %2508 = vmatmul.mubr.f32.gmra.mxu0 %v2283
      %v2509 = vpop.f32.mrf.mxu0
      %v2510 = vadd.f32 0.0, %v2509
      %v2511 = vpop.f32.mrf.mxu0
      %2512 = vdwg.mxu0
      %v2513 = vadd.f32 %v1611, %v2355
      %v2514 = vadd.f32 %v1616, %v2360
      %v2515 = vadd.f32 %v1621, %v2365
      %v2516 = vadd.f32 %v1626, %v2370
      %v2517 = vadd.f32 %v1631, %v2375
      %v2518 = vadd.f32 %v1636, %v2380
      %v2519 = vadd.f32 %v1641, %v2385
      %v2520 = vadd.f32 %v1646, %v2390
      %v2521 = vadd.f32 %v1651, %v2395
      %v2522 = vadd.f32 %v1656, %v2400
      %v2523 = vadd.f32 %v1661, %v2405
      %v2524 = vadd.f32 %v1666, %v2410
      %v2525 = vadd.f32 %v1671, %v2415
      %v2526 = vadd.f32 %v1676, %v2420
      %v2527 = vadd.f32 %v1681, %v2425
      %v2528 = vadd.f32 %v1686, %v2430
      %v2529 = vadd.f32 %v1691, %v2435
      %v2530 = vadd.f32 %v1696, %v2440
      %v2531 = vadd.f32 %v1701, %v2445
      %v2532 = vadd.f32 %v1706, %v2450
      %v2533 = vadd.f32 %v1711, %v2455
      %v2534 = vadd.f32 %v1716, %v2460
      %v2535 = vadd.f32 %v1721, %v2465
      %v2536 = vadd.f32 %v1726, %v2470
      %v2537 = vadd.f32 %v1731, %v2475
      %v2538 = vadd.f32 %v1736, %v2480
      %v2539 = vadd.f32 %v1741, %v2485
      %v2540 = vadd.f32 %v1746, %v2490
      %v2541 = vadd.f32 %v1751, %v2495
      %v2542 = vadd.f32 %v1756, %v2500
      %v2543 = vadd.f32 %v1761, %v2505
      %v2544 = vadd.f32 %v1766, %v2510
      %v2545 = vld [vmem:[%s2] sm:$0x1]
      %v2547 = vlaneseq
      %v2548 = vshrl.u32 %v2547, 7
      %v2549 = vsub.s32 0, %v2548
      %v2550 = vrot.slane %v2545, %v2549
      %v2552 = vadd.f32 %v2513, %v2550
      %v2553 = vadd.f32 %v2514, %v2550
      %v2554 = vadd.f32 %v2515, %v2550
      %v2555 = vadd.f32 %v2516, %v2550
      %v2556 = vadd.f32 %v2517, %v2550
      %v2557 = vadd.f32 %v2518, %v2550
      %v2558 = vadd.f32 %v2519, %v2550
      %v2559 = vadd.f32 %v2520, %v2550
      %v2560 = vadd.f32 %v2521, %v2550
      %v2561 = vadd.f32 %v2522, %v2550
      %v2562 = vadd.f32 %v2523, %v2550
      %v2563 = vadd.f32 %v2524, %v2550
      %v2564 = vadd.f32 %v2525, %v2550
      %v2565 = vadd.f32 %v2526, %v2550
      %v2566 = vadd.f32 %v2527, %v2550
      %v2567 = vadd.f32 %v2528, %v2550
      %v2568 = vadd.f32 %v2529, %v2550
      %v2569 = vadd.f32 %v2530, %v2550
      %v2570 = vadd.f32 %v2531, %v2550
      %v2571 = vadd.f32 %v2532, %v2550
      %v2572 = vadd.f32 %v2533, %v2550
      %v2573 = vadd.f32 %v2534, %v2550
      %v2574 = vadd.f32 %v2535, %v2550
      %v2575 = vadd.f32 %v2536, %v2550
      %v2576 = vadd.f32 %v2537, %v2550
      %v2577 = vadd.f32 %v2538, %v2550
      %v2578 = vadd.f32 %v2539, %v2550
      %v2579 = vadd.f32 %v2540, %v2550
      %v2580 = vadd.f32 %v2541, %v2550
      %v2581 = vadd.f32 %v2542, %v2550
      %v2582 = vadd.f32 %v2543, %v2550
      %v2583 = vadd.f32 %v2544, %v2550
      %v2584 = vmax.f32 %v2552, 0.0
      %v2585 = vmax.f32 %v2553, 0.0
      %v2586 = vmax.f32 %v2554, 0.0
      %v2587 = vmax.f32 %v2555, 0.0
      %v2588 = vmax.f32 %v2556, 0.0
      %v2589 = vmax.f32 %v2557, 0.0
      %v2590 = vmax.f32 %v2558, 0.0
      %v2591 = vmax.f32 %v2559, 0.0
      %v2592 = vmax.f32 %v2560, 0.0
      %v2593 = vmax.f32 %v2561, 0.0
      %v2594 = vmax.f32 %v2562, 0.0
      %v2595 = vmax.f32 %v2563, 0.0
      %v2596 = vmax.f32 %v2564, 0.0
      %v2597 = vmax.f32 %v2565, 0.0
      %v2598 = vmax.f32 %v2566, 0.0
      %v2599 = vmax.f32 %v2567, 0.0
      %v2600 = vmax.f32 %v2568, 0.0
      %v2601 = vmax.f32 %v2569, 0.0
      %v2602 = vmax.f32 %v2570, 0.0
      %v2603 = vmax.f32 %v2571, 0.0
      %v2604 = vmax.f32 %v2572, 0.0
      %v2605 = vmax.f32 %v2573, 0.0
      %v2606 = vmax.f32 %v2574, 0.0
      %v2607 = vmax.f32 %v2575, 0.0
      %v2608 = vmax.f32 %v2576, 0.0
      %v2609 = vmax.f32 %v2577, 0.0
      %v2610 = vmax.f32 %v2578, 0.0
      %v2611 = vmax.f32 %v2579, 0.0
      %v2612 = vmax.f32 %v2580, 0.0
      %v2613 = vmax.f32 %v2581, 0.0
      %v2614 = vmax.f32 %v2582, 0.0
      %v2615 = vmax.f32 %v2583, 0.0
      %2616 = vst.msk [vmem:[#allocation2] sm:$0xff] %vm664, 0.0
      %2617 = vst.msk [vmem:[#allocation2 + $0x8] sm:$0xff] %vm664, 0.0
      %vm2618 = vcmask 58368
      %2619 = vst.msk [vmem:[#allocation2 + $0x10] sm:$0x3] %vm2618, 0.0
      %2620 = vst.msk [vmem:[#allocation2 + $0x18] sm:$0xff] %vm664, 0.0
      %2621 = vst.msk [vmem:[#allocation2 + $0x20] sm:$0xff] %vm664, 0.0
      %2622 = vst.msk [vmem:[#allocation2 + $0x28] sm:$0x3] %vm2618, 0.0
      %2623 = vst.msk [vmem:[#allocation2 + $0x30] sm:$0xff] %vm664, 0.0
      %2624 = vst.msk [vmem:[#allocation2 + $0x38] sm:$0xff] %vm664, 0.0
      %2625 = vst.msk [vmem:[#allocation2 + $0x40] sm:$0x3] %vm2618, 0.0
      %2626 = vst.msk [vmem:[#allocation2 + $0x48] sm:$0xff] %vm664, 0.0
      %2627 = vst.msk [vmem:[#allocation2 + $0x50] sm:$0xff] %vm664, 0.0
      %2628 = vst.msk [vmem:[#allocation2 + $0x58] sm:$0x3] %vm2618, 0.0
      %2629 = vst.msk [vmem:[#allocation2 + $0x60] sm:$0xff] %vm664, 0.0
      %2630 = vst.msk [vmem:[#allocation2 + $0x68] sm:$0xff] %vm664, 0.0
      %2631 = vst.msk [vmem:[#allocation2 + $0x70] sm:$0x3] %vm2618, 0.0
      %2632 = vst.msk [vmem:[#allocation2 + $0x78] sm:$0xff] %vm664, 0.0
      %2633 = vst.msk [vmem:[#allocation2 + $0x80] sm:$0xff] %vm664, 0.0
      %2634 = vst.msk [vmem:[#allocation2 + $0x88] sm:$0x3] %vm2618, 0.0
      %2635 = vst.msk [vmem:[#allocation2 + $0x90] sm:$0xff] %vm664, 0.0
      %2636 = vst.msk [vmem:[#allocation2 + $0x98] sm:$0xff] %vm664, 0.0
      %2637 = vst.msk [vmem:[#allocation2 + $0xa0] sm:$0x3] %vm2618, 0.0
      %2638 = vst.msk [vmem:[#allocation2 + $0xa8] sm:$0xff] %vm664, 0.0
      %2639 = vst.msk [vmem:[#allocation2 + $0xb0] sm:$0xff] %vm664, 0.0
      %2640 = vst.msk [vmem:[#allocation2 + $0xb8] sm:$0x3] %vm2618, 0.0
      %2641 = vst.msk [vmem:[#allocation2 + $0xc0] sm:$0xff] %vm664, 0.0
      %2642 = vst.msk [vmem:[#allocation2 + $0xc8] sm:$0xff] %vm664, 0.0
      %2643 = vst.msk [vmem:[#allocation2 + $0xd0] sm:$0x3] %vm2618, 0.0
      %2644 = vst.msk [vmem:[#allocation2 + $0xd8] sm:$0xff] %vm664, 0.0
      %2645 = vst.msk [vmem:[#allocation2 + $0xe0] sm:$0xff] %vm664, 0.0
      %2646 = vst.msk [vmem:[#allocation2 + $0xe8] sm:$0x3] %vm2618, 0.0
      %2647 = vst.msk [vmem:[#allocation2 + $0xf0] sm:$0xff] %vm664, 0.0
      %2648 = vst.msk [vmem:[#allocation2 + $0xf8] sm:$0xff] %vm664, 0.0
      %2649 = vst.msk [vmem:[#allocation2 + $0x100] sm:$0x3] %vm2618, 0.0
      %2650 = vst.msk [vmem:[#allocation2 + $0x108] sm:$0xff] %vm664, 0.0
      %2651 = vst.msk [vmem:[#allocation2 + $0x110] sm:$0xff] %vm664, 0.0
      %2652 = vst.msk [vmem:[#allocation2 + $0x118] sm:$0x3] %vm2618, 0.0
      %2653 = vst.msk [vmem:[#allocation2 + $0x120] sm:$0xff] %vm664, 0.0
      %2654 = vst.msk [vmem:[#allocation2 + $0x128] sm:$0xff] %vm664, 0.0
      %2655 = vst.msk [vmem:[#allocation2 + $0x130] sm:$0x3] %vm2618, 0.0
      %2656 = vst.msk [vmem:[#allocation2 + $0x138] sm:$0xff] %vm664, 0.0
      %2657 = vst.msk [vmem:[#allocation2 + $0x140] sm:$0xff] %vm664, 0.0
      %2658 = vst.msk [vmem:[#allocation2 + $0x148] sm:$0x3] %vm2618, 0.0
      %2659 = vst.msk [vmem:[#allocation2 + $0x150] sm:$0xff] %vm664, 0.0
      %2660 = vst.msk [vmem:[#allocation2 + $0x158] sm:$0xff] %vm664, 0.0
      %2661 = vst.msk [vmem:[#allocation2 + $0x160] sm:$0x3] %vm2618, 0.0
      %2662 = vst.msk [vmem:[#allocation2 + $0x168] sm:$0xff] %vm664, 0.0
      %2663 = vst.msk [vmem:[#allocation2 + $0x170] sm:$0xff] %vm664, 0.0
      %2664 = vst.msk [vmem:[#allocation2 + $0x178] sm:$0x3] %vm2618, 0.0
      %2665 = vst.msk [vmem:[#allocation2 + $0x180] sm:$0xff] %vm664, 0.0
      %2666 = vst.msk [vmem:[#allocation2 + $0x188] sm:$0xff] %vm664, 0.0
      %2667 = vst.msk [vmem:[#allocation2 + $0x190] sm:$0x3] %vm2618, 0.0
      %2668 = vst.msk [vmem:[#allocation2 + $0x198] sm:$0xff] %vm664, 0.0
      %2669 = vst.msk [vmem:[#allocation2 + $0x1a0] sm:$0xff] %vm664, 0.0
      %2670 = vst.msk [vmem:[#allocation2 + $0x1a8] sm:$0x3] %vm2618, 0.0
      %s2671 = scalar_lea.vmem [#allocation2], 24
      %2672 = vst.msk [vmem:[%s2671 + $0x1] sm:$0xff] %vm664, %v2584
      %2673 = vst.msk [vmem:[%s2671 + $0x9] sm:$0xff] %vm664, %v2585
      %2674 = vst.msk [vmem:[%s2671 + $0x19] sm:$0xff] %vm664, %v2586
      %2675 = vst.msk [vmem:[%s2671 + $0x21] sm:$0xff] %vm664, %v2587
      %2676 = vst.msk [vmem:[%s2671 + $0x31] sm:$0xff] %vm664, %v2588
      %2677 = vst.msk [vmem:[%s2671 + $0x39] sm:$0xff] %vm664, %v2589
      %2678 = vst.msk [vmem:[%s2671 + $0x49] sm:$0xff] %vm664, %v2590
      %2679 = vst.msk [vmem:[%s2671 + $0x51] sm:$0xff] %vm664, %v2591
      %2680 = vst.msk [vmem:[%s2671 + $0x61] sm:$0xff] %vm664, %v2592
      %2681 = vst.msk [vmem:[%s2671 + $0x69] sm:$0xff] %vm664, %v2593
      %2682 = vst.msk [vmem:[%s2671 + $0x79] sm:$0xff] %vm664, %v2594
      %2683 = vst.msk [vmem:[%s2671 + $0x81] sm:$0xff] %vm664, %v2595
      %2684 = vst.msk [vmem:[%s2671 + $0x91] sm:$0xff] %vm664, %v2596
      %2685 = vst.msk [vmem:[%s2671 + $0x99] sm:$0xff] %vm664, %v2597
      %2686 = vst.msk [vmem:[%s2671 + $0xa9] sm:$0xff] %vm664, %v2598
      %2687 = vst.msk [vmem:[%s2671 + $0xb1] sm:$0xff] %vm664, %v2599
      %2688 = vst.msk [vmem:[%s2671 + $0xc1] sm:$0xff] %vm664, %v2600
      %2689 = vst.msk [vmem:[%s2671 + $0xc9] sm:$0xff] %vm664, %v2601
      %2690 = vst.msk [vmem:[%s2671 + $0xd9] sm:$0xff] %vm664, %v2602
      %2691 = vst.msk [vmem:[%s2671 + $0xe1] sm:$0xff] %vm664, %v2603
      %2692 = vst.msk [vmem:[%s2671 + $0xf1] sm:$0xff] %vm664, %v2604
      %2693 = vst.msk [vmem:[%s2671 + $0xf9] sm:$0xff] %vm664, %v2605
      %2694 = vst.msk [vmem:[%s2671 + $0x109] sm:$0xff] %vm664, %v2606
      %2695 = vst.msk [vmem:[%s2671 + $0x111] sm:$0xff] %vm664, %v2607
      %2696 = vst.msk [vmem:[%s2671 + $0x121] sm:$0xff] %vm664, %v2608
      %2697 = vst.msk [vmem:[%s2671 + $0x129] sm:$0xff] %vm664, %v2609
      %2698 = vst.msk [vmem:[%s2671 + $0x139] sm:$0xff] %vm664, %v2610
      %2699 = vst.msk [vmem:[%s2671 + $0x141] sm:$0xff] %vm664, %v2611
      %2700 = vst.msk [vmem:[%s2671 + $0x151] sm:$0xff] %vm664, %v2612
      %2701 = vst.msk [vmem:[%s2671 + $0x159] sm:$0xff] %vm664, %v2613
      %2702 = vst.msk [vmem:[%s2671 + $0x169] sm:$0xff] %vm664, %v2614
      %2703 = vst.msk [vmem:[%s2671 + $0x171] sm:$0xff] %vm664, %v2615
      %v2704 = vld [vmem:[#allocation2] sm:$0xff]
      %v2705 = vld [vmem:[#allocation2 + $0x8] sm:$0xff]
      %v2706 = vld [vmem:[#allocation2 + $0x18] sm:$0xff]
      %v2707 = vld [vmem:[#allocation2 + $0x20] sm:$0xff]
      %v2708 = vld [vmem:[#allocation2 + $0x30] sm:$0xff]
      %v2709 = vld [vmem:[#allocation2 + $0x38] sm:$0xff]
      %v2710 = vld [vmem:[#allocation2 + $0x48] sm:$0xff]
      %v2711 = vld [vmem:[#allocation2 + $0x50] sm:$0xff]
      %v2712 = vld [vmem:[#allocation2 + $0x60] sm:$0xff]
      %v2713 = vld [vmem:[#allocation2 + $0x68] sm:$0xff]
      %v2714 = vld [vmem:[#allocation2 + $0x78] sm:$0xff]
      %v2715 = vld [vmem:[#allocation2 + $0x80] sm:$0xff]
      %v2716 = vld [vmem:[#allocation2 + $0x90] sm:$0xff]
      %v2717 = vld [vmem:[#allocation2 + $0x98] sm:$0xff]
      %v2718 = vld [vmem:[#allocation2 + $0xa8] sm:$0xff]
      %v2719 = vld [vmem:[#allocation2 + $0xb0] sm:$0xff]
      %v2720 = vld [vmem:[#allocation2 + $0xc0] sm:$0xff]
      %v2721 = vld [vmem:[#allocation2 + $0xc8] sm:$0xff]
      %v2722 = vld [vmem:[#allocation2 + $0xd8] sm:$0xff]
      %v2723 = vld [vmem:[#allocation2 + $0xe0] sm:$0xff]
      %v2724 = vld [vmem:[#allocation2 + $0xf0] sm:$0xff]
      %v2725 = vld [vmem:[#allocation2 + $0xf8] sm:$0xff]
      %v2726 = vld [vmem:[#allocation2 + $0x108] sm:$0xff]
      %v2727 = vld [vmem:[#allocation2 + $0x110] sm:$0xff]
      %v2728 = vld [vmem:[#allocation2 + $0x120] sm:$0xff]
      %v2729 = vld [vmem:[#allocation2 + $0x128] sm:$0xff]
      %v2730 = vld [vmem:[#allocation2 + $0x138] sm:$0xff]
      %v2731 = vld [vmem:[#allocation2 + $0x140] sm:$0xff]
      %v2732 = vld [vmem:[#allocation2 + $0x150] sm:$0xff]
      %v2733 = vld [vmem:[#allocation2 + $0x158] sm:$0xff]
      %v2734 = vld [vmem:[#allocation2 + $0x168] sm:$0xff]
      %v2735 = vld [vmem:[#allocation2 + $0x170] sm:$0xff]
      %v2736 = vld [vmem:[#allocation2 + $0x1] sm:$0xff]
      %v2737 = vld [vmem:[#allocation2 + $0x9] sm:$0xff]
      %v2738 = vld [vmem:[#allocation2 + $0x19] sm:$0xff]
      %v2739 = vld [vmem:[#allocation2 + $0x21] sm:$0xff]
      %v2740 = vld [vmem:[#allocation2 + $0x31] sm:$0xff]
      %v2741 = vld [vmem:[#allocation2 + $0x39] sm:$0xff]
      %v2742 = vld [vmem:[#allocation2 + $0x49] sm:$0xff]
      %v2743 = vld [vmem:[#allocation2 + $0x51] sm:$0xff]
      %v2744 = vld [vmem:[#allocation2 + $0x61] sm:$0xff]
      %v2745 = vld [vmem:[#allocation2 + $0x69] sm:$0xff]
      %v2746 = vld [vmem:[#allocation2 + $0x79] sm:$0xff]
      %v2747 = vld [vmem:[#allocation2 + $0x81] sm:$0xff]
      %v2748 = vld [vmem:[#allocation2 + $0x91] sm:$0xff]
      %v2749 = vld [vmem:[#allocation2 + $0x99] sm:$0xff]
      %v2750 = vld [vmem:[#allocation2 + $0xa9] sm:$0xff]
      %v2751 = vld [vmem:[#allocation2 + $0xb1] sm:$0xff]
      %v2752 = vld [vmem:[#allocation2 + $0xc1] sm:$0xff]
      %v2753 = vld [vmem:[#allocation2 + $0xc9] sm:$0xff]
      %v2754 = vld [vmem:[#allocation2 + $0xd9] sm:$0xff]
      %v2755 = vld [vmem:[#allocation2 + $0xe1] sm:$0xff]
      %v2756 = vld [vmem:[#allocation2 + $0xf1] sm:$0xff]
      %v2757 = vld [vmem:[#allocation2 + $0xf9] sm:$0xff]
      %v2758 = vld [vmem:[#allocation2 + $0x109] sm:$0xff]
      %v2759 = vld [vmem:[#allocation2 + $0x111] sm:$0xff]
      %v2760 = vld [vmem:[#allocation2 + $0x121] sm:$0xff]
      %v2761 = vld [vmem:[#allocation2 + $0x129] sm:$0xff]
      %v2762 = vld [vmem:[#allocation2 + $0x139] sm:$0xff]
      %v2763 = vld [vmem:[#allocation2 + $0x141] sm:$0xff]
      %v2764 = vld [vmem:[#allocation2 + $0x151] sm:$0xff]
      %v2765 = vld [vmem:[#allocation2 + $0x159] sm:$0xff]
      %v2766 = vld [vmem:[#allocation2 + $0x169] sm:$0xff]
      %v2767 = vld [vmem:[#allocation2 + $0x171] sm:$0xff]
      %v2768 = vld [vmem:[#allocation2 + $0x2] sm:$0xff]
      %v2769 = vld [vmem:[#allocation2 + $0xa] sm:$0xff]
      %v2770 = vld [vmem:[#allocation2 + $0x1a] sm:$0xff]
      %v2771 = vld [vmem:[#allocation2 + $0x22] sm:$0xff]
      %v2772 = vld [vmem:[#allocation2 + $0x32] sm:$0xff]
      %v2773 = vld [vmem:[#allocation2 + $0x3a] sm:$0xff]
      %v2774 = vld [vmem:[#allocation2 + $0x4a] sm:$0xff]
      %v2775 = vld [vmem:[#allocation2 + $0x52] sm:$0xff]
      %v2776 = vld [vmem:[#allocation2 + $0x62] sm:$0xff]
      %v2777 = vld [vmem:[#allocation2 + $0x6a] sm:$0xff]
      %v2778 = vld [vmem:[#allocation2 + $0x7a] sm:$0xff]
      %v2779 = vld [vmem:[#allocation2 + $0x82] sm:$0xff]
      %v2780 = vld [vmem:[#allocation2 + $0x92] sm:$0xff]
      %v2781 = vld [vmem:[#allocation2 + $0x9a] sm:$0xff]
      %v2782 = vld [vmem:[#allocation2 + $0xaa] sm:$0xff]
      %v2783 = vld [vmem:[#allocation2 + $0xb2] sm:$0xff]
      %v2784 = vld [vmem:[#allocation2 + $0xc2] sm:$0xff]
      %v2785 = vld [vmem:[#allocation2 + $0xca] sm:$0xff]
      %v2786 = vld [vmem:[#allocation2 + $0xda] sm:$0xff]
      %v2787 = vld [vmem:[#allocation2 + $0xe2] sm:$0xff]
      %v2788 = vld [vmem:[#allocation2 + $0xf2] sm:$0xff]
      %v2789 = vld [vmem:[#allocation2 + $0xfa] sm:$0xff]
      %v2790 = vld [vmem:[#allocation2 + $0x10a] sm:$0xff]
      %v2791 = vld [vmem:[#allocation2 + $0x112] sm:$0xff]
      %v2792 = vld [vmem:[#allocation2 + $0x122] sm:$0xff]
      %v2793 = vld [vmem:[#allocation2 + $0x12a] sm:$0xff]
      %v2794 = vld [vmem:[#allocation2 + $0x13a] sm:$0xff]
      %v2795 = vld [vmem:[#allocation2 + $0x142] sm:$0xff]
      %v2796 = vld [vmem:[#allocation2 + $0x152] sm:$0xff]
      %v2797 = vld [vmem:[#allocation2 + $0x15a] sm:$0xff]
      %v2798 = vld [vmem:[#allocation2 + $0x16a] sm:$0xff]
      %v2799 = vld [vmem:[#allocation2 + $0x172] sm:$0xff]
      %2832 = vrot.lane.b32.xlu0 %v2736, 8
      %v2833 = vpop.permute.xlu0 %2832
      %2834 = vrot.lane.b32.xlu0 %v2737, 8
      %v2835 = vpop.permute.xlu0 %2834
      %2836 = vrot.lane.b32.xlu0 %v2738, 8
      %v2837 = vpop.permute.xlu0 %2836
      %2838 = vrot.lane.b32.xlu0 %v2739, 8
      %v2839 = vpop.permute.xlu0 %2838
      %2840 = vrot.lane.b32.xlu0 %v2740, 8
      %v2841 = vpop.permute.xlu0 %2840
      %2842 = vrot.lane.b32.xlu0 %v2741, 8
      %v2843 = vpop.permute.xlu0 %2842
      %2844 = vrot.lane.b32.xlu0 %v2742, 8
      %v2845 = vpop.permute.xlu0 %2844
      %2846 = vrot.lane.b32.xlu0 %v2743, 8
      %v2847 = vpop.permute.xlu0 %2846
      %2848 = vrot.lane.b32.xlu0 %v2744, 8
      %v2849 = vpop.permute.xlu0 %2848
      %2850 = vrot.lane.b32.xlu0 %v2745, 8
      %v2851 = vpop.permute.xlu0 %2850
      %2852 = vrot.lane.b32.xlu0 %v2746, 8
      %v2853 = vpop.permute.xlu0 %2852
      %2854 = vrot.lane.b32.xlu0 %v2747, 8
      %v2855 = vpop.permute.xlu0 %2854
      %2856 = vrot.lane.b32.xlu0 %v2748, 8
      %v2857 = vpop.permute.xlu0 %2856
      %2858 = vrot.lane.b32.xlu0 %v2749, 8
      %v2859 = vpop.permute.xlu0 %2858
      %2860 = vrot.lane.b32.xlu0 %v2750, 8
      %v2861 = vpop.permute.xlu0 %2860
      %2862 = vrot.lane.b32.xlu0 %v2751, 8
      %v2863 = vpop.permute.xlu0 %2862
      %2864 = vrot.lane.b32.xlu0 %v2752, 8
      %v2865 = vpop.permute.xlu0 %2864
      %2866 = vrot.lane.b32.xlu0 %v2753, 8
      %v2867 = vpop.permute.xlu0 %2866
      %2868 = vrot.lane.b32.xlu0 %v2754, 8
      %v2869 = vpop.permute.xlu0 %2868
      %2870 = vrot.lane.b32.xlu0 %v2755, 8
      %v2871 = vpop.permute.xlu0 %2870
      %2872 = vrot.lane.b32.xlu0 %v2756, 8
      %v2873 = vpop.permute.xlu0 %2872
      %2874 = vrot.lane.b32.xlu0 %v2757, 8
      %v2875 = vpop.permute.xlu0 %2874
      %2876 = vrot.lane.b32.xlu0 %v2758, 8
      %v2877 = vpop.permute.xlu0 %2876
      %2878 = vrot.lane.b32.xlu0 %v2759, 8
      %v2879 = vpop.permute.xlu0 %2878
      %2880 = vrot.lane.b32.xlu0 %v2760, 8
      %v2881 = vpop.permute.xlu0 %2880
      %2882 = vrot.lane.b32.xlu0 %v2761, 8
      %v2883 = vpop.permute.xlu0 %2882
      %2884 = vrot.lane.b32.xlu0 %v2762, 8
      %v2885 = vpop.permute.xlu0 %2884
      %2886 = vrot.lane.b32.xlu0 %v2763, 8
      %v2887 = vpop.permute.xlu0 %2886
      %2888 = vrot.lane.b32.xlu0 %v2764, 8
      %v2889 = vpop.permute.xlu0 %2888
      %2890 = vrot.lane.b32.xlu0 %v2765, 8
      %v2891 = vpop.permute.xlu0 %2890
      %2892 = vrot.lane.b32.xlu0 %v2766, 8
      %v2893 = vpop.permute.xlu0 %2892
      %2894 = vrot.lane.b32.xlu0 %v2767, 8
      %v2895 = vpop.permute.xlu0 %2894
      %2960 = vrot.lane.b32.xlu0 %v2768, 16
      %v2961 = vpop.permute.xlu0 %2960
      %2962 = vrot.lane.b32.xlu0 %v2769, 16
      %v2963 = vpop.permute.xlu0 %2962
      %2964 = vrot.lane.b32.xlu0 %v2770, 16
      %v2965 = vpop.permute.xlu0 %2964
      %2966 = vrot.lane.b32.xlu0 %v2771, 16
      %v2967 = vpop.permute.xlu0 %2966
      %2968 = vrot.lane.b32.xlu0 %v2772, 16
      %v2969 = vpop.permute.xlu0 %2968
      %2970 = vrot.lane.b32.xlu0 %v2773, 16
      %v2971 = vpop.permute.xlu0 %2970
      %2972 = vrot.lane.b32.xlu0 %v2774, 16
      %v2973 = vpop.permute.xlu0 %2972
      %2974 = vrot.lane.b32.xlu0 %v2775, 16
      %v2975 = vpop.permute.xlu0 %2974
      %2976 = vrot.lane.b32.xlu0 %v2776, 16
      %v2977 = vpop.permute.xlu0 %2976
      %2978 = vrot.lane.b32.xlu0 %v2777, 16
      %v2979 = vpop.permute.xlu0 %2978
      %2980 = vrot.lane.b32.xlu0 %v2778, 16
      %v2981 = vpop.permute.xlu0 %2980
      %2982 = vrot.lane.b32.xlu0 %v2779, 16
      %v2983 = vpop.permute.xlu0 %2982
      %2984 = vrot.lane.b32.xlu0 %v2780, 16
      %v2985 = vpop.permute.xlu0 %2984
      %2986 = vrot.lane.b32.xlu0 %v2781, 16
      %v2987 = vpop.permute.xlu0 %2986
      %2988 = vrot.lane.b32.xlu0 %v2782, 16
      %v2989 = vpop.permute.xlu0 %2988
      %2990 = vrot.lane.b32.xlu0 %v2783, 16
      %v2991 = vpop.permute.xlu0 %2990
      %2992 = vrot.lane.b32.xlu0 %v2784, 16
      %v2993 = vpop.permute.xlu0 %2992
      %2994 = vrot.lane.b32.xlu0 %v2785, 16
      %v2995 = vpop.permute.xlu0 %2994
      %2996 = vrot.lane.b32.xlu0 %v2786, 16
      %v2997 = vpop.permute.xlu0 %2996
      %2998 = vrot.lane.b32.xlu0 %v2787, 16
      %v2999 = vpop.permute.xlu0 %2998
      %3000 = vrot.lane.b32.xlu0 %v2788, 16
      %v3001 = vpop.permute.xlu0 %3000
      %3002 = vrot.lane.b32.xlu0 %v2789, 16
      %v3003 = vpop.permute.xlu0 %3002
      %3004 = vrot.lane.b32.xlu0 %v2790, 16
      %v3005 = vpop.permute.xlu0 %3004
      %3006 = vrot.lane.b32.xlu0 %v2791, 16
      %v3007 = vpop.permute.xlu0 %3006
      %3008 = vrot.lane.b32.xlu0 %v2792, 16
      %v3009 = vpop.permute.xlu0 %3008
      %3010 = vrot.lane.b32.xlu0 %v2793, 16
      %v3011 = vpop.permute.xlu0 %3010
      %3012 = vrot.lane.b32.xlu0 %v2794, 16
      %v3013 = vpop.permute.xlu0 %3012
      %3014 = vrot.lane.b32.xlu0 %v2795, 16
      %v3015 = vpop.permute.xlu0 %3014
      %3016 = vrot.lane.b32.xlu0 %v2796, 16
      %v3017 = vpop.permute.xlu0 %3016
      %3018 = vrot.lane.b32.xlu0 %v2797, 16
      %v3019 = vpop.permute.xlu0 %3018
      %3020 = vrot.lane.b32.xlu0 %v2798, 16
      %v3021 = vpop.permute.xlu0 %3020
      %3022 = vrot.lane.b32.xlu0 %v2799, 16
      %v3023 = vpop.permute.xlu0 %3022
      %v3056 = vsel %vm664, %v2704, %v2833
      %v3057 = vsel %vm664, %v2705, %v2835
      %v3058 = vsel %vm664, %v2706, %v2837
      %v3059 = vsel %vm664, %v2707, %v2839
      %v3060 = vsel %vm664, %v2708, %v2841
      %v3061 = vsel %vm664, %v2709, %v2843
      %v3062 = vsel %vm664, %v2710, %v2845
      %v3063 = vsel %vm664, %v2711, %v2847
      %v3064 = vsel %vm664, %v2712, %v2849
      %v3065 = vsel %vm664, %v2713, %v2851
      %v3066 = vsel %vm664, %v2714, %v2853
      %v3067 = vsel %vm664, %v2715, %v2855
      %v3068 = vsel %vm664, %v2716, %v2857
      %v3069 = vsel %vm664, %v2717, %v2859
      %v3070 = vsel %vm664, %v2718, %v2861
      %v3071 = vsel %vm664, %v2719, %v2863
      %v3072 = vsel %vm664, %v2720, %v2865
      %v3073 = vsel %vm664, %v2721, %v2867
      %v3074 = vsel %vm664, %v2722, %v2869
      %v3075 = vsel %vm664, %v2723, %v2871
      %v3076 = vsel %vm664, %v2724, %v2873
      %v3077 = vsel %vm664, %v2725, %v2875
      %v3078 = vsel %vm664, %v2726, %v2877
      %v3079 = vsel %vm664, %v2727, %v2879
      %v3080 = vsel %vm664, %v2728, %v2881
      %v3081 = vsel %vm664, %v2729, %v2883
      %v3082 = vsel %vm664, %v2730, %v2885
      %v3083 = vsel %vm664, %v2731, %v2887
      %v3084 = vsel %vm664, %v2732, %v2889
      %v3085 = vsel %vm664, %v2733, %v2891
      %v3086 = vsel %vm664, %v2734, %v2893
      %v3087 = vsel %vm664, %v2735, %v2895
      %vm3088 = vcmask 130048
      %v3089 = vsel %vm3088, %v3056, %v2961
      %v3090 = vsel %vm3088, %v3057, %v2963
      %v3091 = vsel %vm3088, %v3058, %v2965
      %v3092 = vsel %vm3088, %v3059, %v2967
      %v3093 = vsel %vm3088, %v3060, %v2969
      %v3094 = vsel %vm3088, %v3061, %v2971
      %v3095 = vsel %vm3088, %v3062, %v2973
      %v3096 = vsel %vm3088, %v3063, %v2975
      %v3097 = vsel %vm3088, %v3064, %v2977
      %v3098 = vsel %vm3088, %v3065, %v2979
      %v3099 = vsel %vm3088, %v3066, %v2981
      %v3100 = vsel %vm3088, %v3067, %v2983
      %v3101 = vsel %vm3088, %v3068, %v2985
      %v3102 = vsel %vm3088, %v3069, %v2987
      %v3103 = vsel %vm3088, %v3070, %v2989
      %v3104 = vsel %vm3088, %v3071, %v2991
      %v3105 = vsel %vm3088, %v3072, %v2993
      %v3106 = vsel %vm3088, %v3073, %v2995
      %v3107 = vsel %vm3088, %v3074, %v2997
      %v3108 = vsel %vm3088, %v3075, %v2999
      %v3109 = vsel %vm3088, %v3076, %v3001
      %v3110 = vsel %vm3088, %v3077, %v3003
      %v3111 = vsel %vm3088, %v3078, %v3005
      %v3112 = vsel %vm3088, %v3079, %v3007
      %v3113 = vsel %vm3088, %v3080, %v3009
      %v3114 = vsel %vm3088, %v3081, %v3011
      %v3115 = vsel %vm3088, %v3082, %v3013
      %v3116 = vsel %vm3088, %v3083, %v3015
      %v3117 = vsel %vm3088, %v3084, %v3017
      %v3118 = vsel %vm3088, %v3085, %v3019
      %v3119 = vsel %vm3088, %v3086, %v3021
      %v3120 = vsel %vm3088, %v3087, %v3023
      %v3121 = vld [vmem:[%s3] sm:$0xff]
      %v3122 = vld [vmem:[%s3 + $0x8] sm:$0xff]
      %v3123 = vld [vmem:[%s3 + $0x10] sm:$0xff]
      %v3124 = vld [vmem:[%s2671] sm:$0xff]
      %v3125 = vld [vmem:[%s2671 + $0x8] sm:$0xff]
      %v3126 = vld [vmem:[%s2671 + $0x18] sm:$0xff]
      %v3127 = vld [vmem:[%s2671 + $0x20] sm:$0xff]
      %v3128 = vld [vmem:[%s2671 + $0x30] sm:$0xff]
      %v3129 = vld [vmem:[%s2671 + $0x38] sm:$0xff]
      %v3130 = vld [vmem:[%s2671 + $0x48] sm:$0xff]
      %v3131 = vld [vmem:[%s2671 + $0x50] sm:$0xff]
      %v3132 = vld [vmem:[%s2671 + $0x60] sm:$0xff]
      %v3133 = vld [vmem:[%s2671 + $0x68] sm:$0xff]
      %v3134 = vld [vmem:[%s2671 + $0x78] sm:$0xff]
      %v3135 = vld [vmem:[%s2671 + $0x80] sm:$0xff]
      %v3136 = vld [vmem:[%s2671 + $0x90] sm:$0xff]
      %v3137 = vld [vmem:[%s2671 + $0x98] sm:$0xff]
      %v3138 = vld [vmem:[%s2671 + $0xa8] sm:$0xff]
      %v3139 = vld [vmem:[%s2671 + $0xb0] sm:$0xff]
      %v3140 = vld [vmem:[%s2671 + $0xc0] sm:$0xff]
      %v3141 = vld [vmem:[%s2671 + $0xc8] sm:$0xff]
      %v3142 = vld [vmem:[%s2671 + $0xd8] sm:$0xff]
      %v3143 = vld [vmem:[%s2671 + $0xe0] sm:$0xff]
      %v3144 = vld [vmem:[%s2671 + $0xf0] sm:$0xff]
      %v3145 = vld [vmem:[%s2671 + $0xf8] sm:$0xff]
      %v3146 = vld [vmem:[%s2671 + $0x108] sm:$0xff]
      %v3147 = vld [vmem:[%s2671 + $0x110] sm:$0xff]
      %v3148 = vld [vmem:[%s2671 + $0x120] sm:$0xff]
      %v3149 = vld [vmem:[%s2671 + $0x128] sm:$0xff]
      %v3150 = vld [vmem:[%s2671 + $0x138] sm:$0xff]
      %v3151 = vld [vmem:[%s2671 + $0x140] sm:$0xff]
      %v3152 = vld [vmem:[%s2671 + $0x150] sm:$0xff]
      %v3153 = vld [vmem:[%s2671 + $0x158] sm:$0xff]
      %v3154 = vld [vmem:[%s2671 + $0x168] sm:$0xff]
      %v3155 = vld [vmem:[%s2671 + $0x170] sm:$0xff]
      %v3156 = vld [vmem:[%s2671 + $0x1] sm:$0xff]
      %v3157 = vld [vmem:[%s2671 + $0x9] sm:$0xff]
      %v3158 = vld [vmem:[%s2671 + $0x19] sm:$0xff]
      %v3159 = vld [vmem:[%s2671 + $0x21] sm:$0xff]
      %v3160 = vld [vmem:[%s2671 + $0x31] sm:$0xff]
      %v3161 = vld [vmem:[%s2671 + $0x39] sm:$0xff]
      %v3162 = vld [vmem:[%s2671 + $0x49] sm:$0xff]
      %v3163 = vld [vmem:[%s2671 + $0x51] sm:$0xff]
      %v3164 = vld [vmem:[%s2671 + $0x61] sm:$0xff]
      %v3165 = vld [vmem:[%s2671 + $0x69] sm:$0xff]
      %v3166 = vld [vmem:[%s2671 + $0x79] sm:$0xff]
      %v3167 = vld [vmem:[%s2671 + $0x81] sm:$0xff]
      %v3168 = vld [vmem:[%s2671 + $0x91] sm:$0xff]
      %v3169 = vld [vmem:[%s2671 + $0x99] sm:$0xff]
      %v3170 = vld [vmem:[%s2671 + $0xa9] sm:$0xff]
      %v3171 = vld [vmem:[%s2671 + $0xb1] sm:$0xff]
      %v3172 = vld [vmem:[%s2671 + $0xc1] sm:$0xff]
      %v3173 = vld [vmem:[%s2671 + $0xc9] sm:$0xff]
      %v3174 = vld [vmem:[%s2671 + $0xd9] sm:$0xff]
      %v3175 = vld [vmem:[%s2671 + $0xe1] sm:$0xff]
      %v3176 = vld [vmem:[%s2671 + $0xf1] sm:$0xff]
      %v3177 = vld [vmem:[%s2671 + $0xf9] sm:$0xff]
      %v3178 = vld [vmem:[%s2671 + $0x109] sm:$0xff]
      %v3179 = vld [vmem:[%s2671 + $0x111] sm:$0xff]
      %v3180 = vld [vmem:[%s2671 + $0x121] sm:$0xff]
      %v3181 = vld [vmem:[%s2671 + $0x129] sm:$0xff]
      %v3182 = vld [vmem:[%s2671 + $0x139] sm:$0xff]
      %v3183 = vld [vmem:[%s2671 + $0x141] sm:$0xff]
      %v3184 = vld [vmem:[%s2671 + $0x151] sm:$0xff]
      %v3185 = vld [vmem:[%s2671 + $0x159] sm:$0xff]
      %v3186 = vld [vmem:[%s2671 + $0x169] sm:$0xff]
      %v3187 = vld [vmem:[%s2671 + $0x171] sm:$0xff]
      %v3188 = vld [vmem:[%s2671 + $0x2] sm:$0xff]
      %v3189 = vld [vmem:[%s2671 + $0xa] sm:$0xff]
      %v3190 = vld [vmem:[%s2671 + $0x1a] sm:$0xff]
      %v3191 = vld [vmem:[%s2671 + $0x22] sm:$0xff]
      %v3192 = vld [vmem:[%s2671 + $0x32] sm:$0xff]
      %v3193 = vld [vmem:[%s2671 + $0x3a] sm:$0xff]
      %v3194 = vld [vmem:[%s2671 + $0x4a] sm:$0xff]
      %v3195 = vld [vmem:[%s2671 + $0x52] sm:$0xff]
      %v3196 = vld [vmem:[%s2671 + $0x62] sm:$0xff]
      %v3197 = vld [vmem:[%s2671 + $0x6a] sm:$0xff]
      %v3198 = vld [vmem:[%s2671 + $0x7a] sm:$0xff]
      %v3199 = vld [vmem:[%s2671 + $0x82] sm:$0xff]
      %v3200 = vld [vmem:[%s2671 + $0x92] sm:$0xff]
      %v3201 = vld [vmem:[%s2671 + $0x9a] sm:$0xff]
      %v3202 = vld [vmem:[%s2671 + $0xaa] sm:$0xff]
      %v3203 = vld [vmem:[%s2671 + $0xb2] sm:$0xff]
      %v3204 = vld [vmem:[%s2671 + $0xc2] sm:$0xff]
      %v3205 = vld [vmem:[%s2671 + $0xca] sm:$0xff]
      %v3206 = vld [vmem:[%s2671 + $0xda] sm:$0xff]
      %v3207 = vld [vmem:[%s2671 + $0xe2] sm:$0xff]
      %v3208 = vld [vmem:[%s2671 + $0xf2] sm:$0xff]
      %v3209 = vld [vmem:[%s2671 + $0xfa] sm:$0xff]
      %v3210 = vld [vmem:[%s2671 + $0x10a] sm:$0xff]
      %v3211 = vld [vmem:[%s2671 + $0x112] sm:$0xff]
      %v3212 = vld [vmem:[%s2671 + $0x122] sm:$0xff]
      %v3213 = vld [vmem:[%s2671 + $0x12a] sm:$0xff]
      %v3214 = vld [vmem:[%s2671 + $0x13a] sm:$0xff]
      %v3215 = vld [vmem:[%s2671 + $0x142] sm:$0xff]
      %v3216 = vld [vmem:[%s2671 + $0x152] sm:$0xff]
      %v3217 = vld [vmem:[%s2671 + $0x15a] sm:$0xff]
      %v3218 = vld [vmem:[%s2671 + $0x16a] sm:$0xff]
      %v3219 = vld [vmem:[%s2671 + $0x172] sm:$0xff]
      %3252 = vrot.lane.b32.xlu0 %v3156, 8
      %v3253 = vpop.permute.xlu0 %3252
      %3254 = vrot.lane.b32.xlu0 %v3157, 8
      %v3255 = vpop.permute.xlu0 %3254
      %3256 = vrot.lane.b32.xlu0 %v3158, 8
      %v3257 = vpop.permute.xlu0 %3256
      %3258 = vrot.lane.b32.xlu0 %v3159, 8
      %v3259 = vpop.permute.xlu0 %3258
      %3260 = vrot.lane.b32.xlu0 %v3160, 8
      %v3261 = vpop.permute.xlu0 %3260
      %3262 = vrot.lane.b32.xlu0 %v3161, 8
      %v3263 = vpop.permute.xlu0 %3262
      %3264 = vrot.lane.b32.xlu0 %v3162, 8
      %v3265 = vpop.permute.xlu0 %3264
      %3266 = vrot.lane.b32.xlu0 %v3163, 8
      %v3267 = vpop.permute.xlu0 %3266
      %3268 = vrot.lane.b32.xlu0 %v3164, 8
      %v3269 = vpop.permute.xlu0 %3268
      %3270 = vrot.lane.b32.xlu0 %v3165, 8
      %v3271 = vpop.permute.xlu0 %3270
      %3272 = vrot.lane.b32.xlu0 %v3166, 8
      %v3273 = vpop.permute.xlu0 %3272
      %3274 = vrot.lane.b32.xlu0 %v3167, 8
      %v3275 = vpop.permute.xlu0 %3274
      %3276 = vrot.lane.b32.xlu0 %v3168, 8
      %v3277 = vpop.permute.xlu0 %3276
      %3278 = vrot.lane.b32.xlu0 %v3169, 8
      %v3279 = vpop.permute.xlu0 %3278
      %3280 = vrot.lane.b32.xlu0 %v3170, 8
      %v3281 = vpop.permute.xlu0 %3280
      %3282 = vrot.lane.b32.xlu0 %v3171, 8
      %v3283 = vpop.permute.xlu0 %3282
      %3284 = vrot.lane.b32.xlu0 %v3172, 8
      %v3285 = vpop.permute.xlu0 %3284
      %3286 = vrot.lane.b32.xlu0 %v3173, 8
      %v3287 = vpop.permute.xlu0 %3286
      %3288 = vrot.lane.b32.xlu0 %v3174, 8
      %v3289 = vpop.permute.xlu0 %3288
      %3290 = vrot.lane.b32.xlu0 %v3175, 8
      %v3291 = vpop.permute.xlu0 %3290
      %3292 = vrot.lane.b32.xlu0 %v3176, 8
      %v3293 = vpop.permute.xlu0 %3292
      %3294 = vrot.lane.b32.xlu0 %v3177, 8
      %v3295 = vpop.permute.xlu0 %3294
      %3296 = vrot.lane.b32.xlu0 %v3178, 8
      %v3297 = vpop.permute.xlu0 %3296
      %3298 = vrot.lane.b32.xlu0 %v3179, 8
      %v3299 = vpop.permute.xlu0 %3298
      %3300 = vrot.lane.b32.xlu0 %v3180, 8
      %v3301 = vpop.permute.xlu0 %3300
      %3302 = vrot.lane.b32.xlu0 %v3181, 8
      %v3303 = vpop.permute.xlu0 %3302
      %3304 = vrot.lane.b32.xlu0 %v3182, 8
      %v3305 = vpop.permute.xlu0 %3304
      %3306 = vrot.lane.b32.xlu0 %v3183, 8
      %v3307 = vpop.permute.xlu0 %3306
      %3308 = vrot.lane.b32.xlu0 %v3184, 8
      %v3309 = vpop.permute.xlu0 %3308
      %3310 = vrot.lane.b32.xlu0 %v3185, 8
      %v3311 = vpop.permute.xlu0 %3310
      %3312 = vrot.lane.b32.xlu0 %v3186, 8
      %v3313 = vpop.permute.xlu0 %3312
      %3314 = vrot.lane.b32.xlu0 %v3187, 8
      %v3315 = vpop.permute.xlu0 %3314
      %3380 = vrot.lane.b32.xlu0 %v3188, 16
      %v3381 = vpop.permute.xlu0 %3380
      %3382 = vrot.lane.b32.xlu0 %v3189, 16
      %v3383 = vpop.permute.xlu0 %3382
      %3384 = vrot.lane.b32.xlu0 %v3190, 16
      %v3385 = vpop.permute.xlu0 %3384
      %3386 = vrot.lane.b32.xlu0 %v3191, 16
      %v3387 = vpop.permute.xlu0 %3386
      %3388 = vrot.lane.b32.xlu0 %v3192, 16
      %v3389 = vpop.permute.xlu0 %3388
      %3390 = vrot.lane.b32.xlu0 %v3193, 16
      %v3391 = vpop.permute.xlu0 %3390
      %3392 = vrot.lane.b32.xlu0 %v3194, 16
      %v3393 = vpop.permute.xlu0 %3392
      %3394 = vrot.lane.b32.xlu0 %v3195, 16
      %v3395 = vpop.permute.xlu0 %3394
      %3396 = vrot.lane.b32.xlu0 %v3196, 16
      %v3397 = vpop.permute.xlu0 %3396
      %3398 = vrot.lane.b32.xlu0 %v3197, 16
      %v3399 = vpop.permute.xlu0 %3398
      %3400 = vrot.lane.b32.xlu0 %v3198, 16
      %v3401 = vpop.permute.xlu0 %3400
      %3402 = vrot.lane.b32.xlu0 %v3199, 16
      %v3403 = vpop.permute.xlu0 %3402
      %3404 = vrot.lane.b32.xlu0 %v3200, 16
      %v3405 = vpop.permute.xlu0 %3404
      %3406 = vrot.lane.b32.xlu0 %v3201, 16
      %v3407 = vpop.permute.xlu0 %3406
      %3408 = vrot.lane.b32.xlu0 %v3202, 16
      %v3409 = vpop.permute.xlu0 %3408
      %3410 = vrot.lane.b32.xlu0 %v3203, 16
      %v3411 = vpop.permute.xlu0 %3410
      %3412 = vrot.lane.b32.xlu0 %v3204, 16
      %v3413 = vpop.permute.xlu0 %3412
      %3414 = vrot.lane.b32.xlu0 %v3205, 16
      %v3415 = vpop.permute.xlu0 %3414
      %3416 = vrot.lane.b32.xlu0 %v3206, 16
      %v3417 = vpop.permute.xlu0 %3416
      %3418 = vrot.lane.b32.xlu0 %v3207, 16
      %v3419 = vpop.permute.xlu0 %3418
      %3420 = vrot.lane.b32.xlu0 %v3208, 16
      %v3421 = vpop.permute.xlu0 %3420
      %3422 = vrot.lane.b32.xlu0 %v3209, 16
      %v3423 = vpop.permute.xlu0 %3422
      %3424 = vrot.lane.b32.xlu0 %v3210, 16
      %v3425 = vpop.permute.xlu0 %3424
      %3426 = vrot.lane.b32.xlu0 %v3211, 16
      %v3427 = vpop.permute.xlu0 %3426
      %3428 = vrot.lane.b32.xlu0 %v3212, 16
      %v3429 = vpop.permute.xlu0 %3428
      %3430 = vrot.lane.b32.xlu0 %v3213, 16
      %v3431 = vpop.permute.xlu0 %3430
      %3432 = vrot.lane.b32.xlu0 %v3214, 16
      %v3433 = vpop.permute.xlu0 %3432
      %3434 = vrot.lane.b32.xlu0 %v3215, 16
      %v3435 = vpop.permute.xlu0 %3434
      %3436 = vrot.lane.b32.xlu0 %v3216, 16
      %v3437 = vpop.permute.xlu0 %3436
      %3438 = vrot.lane.b32.xlu0 %v3217, 16
      %v3439 = vpop.permute.xlu0 %3438
      %3440 = vrot.lane.b32.xlu0 %v3218, 16
      %v3441 = vpop.permute.xlu0 %3440
      %3442 = vrot.lane.b32.xlu0 %v3219, 16
      %v3443 = vpop.permute.xlu0 %3442
      %v3476 = vsel %vm664, %v3124, %v3253
      %v3477 = vsel %vm664, %v3125, %v3255
      %v3478 = vsel %vm664, %v3126, %v3257
      %v3479 = vsel %vm664, %v3127, %v3259
      %v3480 = vsel %vm664, %v3128, %v3261
      %v3481 = vsel %vm664, %v3129, %v3263
      %v3482 = vsel %vm664, %v3130, %v3265
      %v3483 = vsel %vm664, %v3131, %v3267
      %v3484 = vsel %vm664, %v3132, %v3269
      %v3485 = vsel %vm664, %v3133, %v3271
      %v3486 = vsel %vm664, %v3134, %v3273
      %v3487 = vsel %vm664, %v3135, %v3275
      %v3488 = vsel %vm664, %v3136, %v3277
      %v3489 = vsel %vm664, %v3137, %v3279
      %v3490 = vsel %vm664, %v3138, %v3281
      %v3491 = vsel %vm664, %v3139, %v3283
      %v3492 = vsel %vm664, %v3140, %v3285
      %v3493 = vsel %vm664, %v3141, %v3287
      %v3494 = vsel %vm664, %v3142, %v3289
      %v3495 = vsel %vm664, %v3143, %v3291
      %v3496 = vsel %vm664, %v3144, %v3293
      %v3497 = vsel %vm664, %v3145, %v3295
      %v3498 = vsel %vm664, %v3146, %v3297
      %v3499 = vsel %vm664, %v3147, %v3299
      %v3500 = vsel %vm664, %v3148, %v3301
      %v3501 = vsel %vm664, %v3149, %v3303
      %v3502 = vsel %vm664, %v3150, %v3305
      %v3503 = vsel %vm664, %v3151, %v3307
      %v3504 = vsel %vm664, %v3152, %v3309
      %v3505 = vsel %vm664, %v3153, %v3311
      %v3506 = vsel %vm664, %v3154, %v3313
      %v3507 = vsel %vm664, %v3155, %v3315
      %v3508 = vsel %vm3088, %v3476, %v3381
      %v3509 = vsel %vm3088, %v3477, %v3383
      %v3510 = vsel %vm3088, %v3478, %v3385
      %v3511 = vsel %vm3088, %v3479, %v3387
      %v3512 = vsel %vm3088, %v3480, %v3389
      %v3513 = vsel %vm3088, %v3481, %v3391
      %v3514 = vsel %vm3088, %v3482, %v3393
      %v3515 = vsel %vm3088, %v3483, %v3395
      %v3516 = vsel %vm3088, %v3484, %v3397
      %v3517 = vsel %vm3088, %v3485, %v3399
      %v3518 = vsel %vm3088, %v3486, %v3401
      %v3519 = vsel %vm3088, %v3487, %v3403
      %v3520 = vsel %vm3088, %v3488, %v3405
      %v3521 = vsel %vm3088, %v3489, %v3407
      %v3522 = vsel %vm3088, %v3490, %v3409
      %v3523 = vsel %vm3088, %v3491, %v3411
      %v3524 = vsel %vm3088, %v3492, %v3413
      %v3525 = vsel %vm3088, %v3493, %v3415
      %v3526 = vsel %vm3088, %v3494, %v3417
      %v3527 = vsel %vm3088, %v3495, %v3419
      %v3528 = vsel %vm3088, %v3496, %v3421
      %v3529 = vsel %vm3088, %v3497, %v3423
      %v3530 = vsel %vm3088, %v3498, %v3425
      %v3531 = vsel %vm3088, %v3499, %v3427
      %v3532 = vsel %vm3088, %v3500, %v3429
      %v3533 = vsel %vm3088, %v3501, %v3431
      %v3534 = vsel %vm3088, %v3502, %v3433
      %v3535 = vsel %vm3088, %v3503, %v3435
      %v3536 = vsel %vm3088, %v3504, %v3437
      %v3537 = vsel %vm3088, %v3505, %v3439
      %v3538 = vsel %vm3088, %v3506, %v3441
      %v3539 = vsel %vm3088, %v3507, %v3443
      %s3540 = scalar_lea.vmem %s3, 24
      %v3541 = vld [vmem:[%s3540] sm:$0xff]
      %v3542 = vld [vmem:[%s3540 + $0x8] sm:$0xff]
      %v3543 = vld [vmem:[%s3540 + $0x10] sm:$0xff]
      %vm3544 = vcmask 195584
      %v3546 = vsel %vm3544, %v3508, 0
      %v3549 = vsel %vm3544, %v3509, 0
      %v3552 = vsel %vm3544, %v3510, 0
      %v3555 = vsel %vm3544, %v3511, 0
      %v3558 = vsel %vm3544, %v3512, 0
      %v3561 = vsel %vm3544, %v3513, 0
      %v3564 = vsel %vm3544, %v3514, 0
      %v3567 = vsel %vm3544, %v3515, 0
      %v3570 = vsel %vm3544, %v3516, 0
      %v3573 = vsel %vm3544, %v3517, 0
      %v3576 = vsel %vm3544, %v3518, 0
      %v3579 = vsel %vm3544, %v3519, 0
      %v3582 = vsel %vm3544, %v3520, 0
      %v3585 = vsel %vm3544, %v3521, 0
      %v3588 = vsel %vm3544, %v3522, 0
      %v3591 = vsel %vm3544, %v3523, 0
      %v3594 = vsel %vm3544, %v3524, 0
      %v3597 = vsel %vm3544, %v3525, 0
      %v3600 = vsel %vm3544, %v3526, 0
      %v3603 = vsel %vm3544, %v3527, 0
      %v3606 = vsel %vm3544, %v3528, 0
      %v3609 = vsel %vm3544, %v3529, 0
      %v3612 = vsel %vm3544, %v3530, 0
      %v3615 = vsel %vm3544, %v3531, 0
      %v3618 = vsel %vm3544, %v3532, 0
      %v3621 = vsel %vm3544, %v3533, 0
      %v3624 = vsel %vm3544, %v3534, 0
      %v3627 = vsel %vm3544, %v3535, 0
      %v3630 = vsel %vm3544, %v3536, 0
      %v3633 = vsel %vm3544, %v3537, 0
      %v3636 = vsel %vm3544, %v3538, 0
      %v3639 = vsel %vm3544, %v3539, 0
      %3641 = vmatprep.subr.mxu0 0.0
      %3642 = vmatpush1.msra.mxu0 0.0
      %3643 = vmatprep.subr.mxu0 0.0
      %3644 = vmatpush1.msra.mxu0 0.0
      %3645 = vmatprep.subr.mxu0 0.0
      %3646 = vmatpush1.msra.mxu0 0.0
      %3647 = vmatprep.subr.mxu0 0.0
      %3648 = vmatpush1.msra.mxu0 0.0
      %3649 = vmatprep.subr.mxu0 0.0
      %3650 = vmatpush1.msra.mxu0 0.0
      %3651 = vmatprep.subr.mxu0 0.0
      %3652 = vmatpush1.msra.mxu0 0.0
      %3653 = vmatprep.subr.mxu0 0.0
      %3654 = vmatpush1.msra.mxu0 0.0
      %3655 = vmatprep.subr.mxu0 0.0
      %3656 = vmatpush1.msra.mxu0 0.0
      %3657 = vmatprep.subr.mxu0 0.0
      %3658 = vmatpush1.msra.mxu0 0.0
      %3659 = vmatprep.subr.mxu0 0.0
      %3660 = vmatpush1.msra.mxu0 0.0
      %3661 = vmatprep.subr.mxu0 0.0
      %3662 = vmatpush1.msra.mxu0 0.0
      %3663 = vmatprep.subr.mxu0 0.0
      %3664 = vmatpush1.msra.mxu0 0.0
      %3665 = vmatprep.subr.mxu0 0.0
      %3666 = vmatpush1.msra.mxu0 0.0
      %3667 = vmatprep.subr.mxu0 0.0
      %3668 = vmatpush1.msra.mxu0 %v3543
      %3669 = vmatprep.subr.mxu0 0.0
      %3670 = vmatpush1.msra.mxu0 %v3542
      %3671 = vmatprep.subr.mxu0 0.0
      %3672 = vmatpush1.msra.mxu0 %v3541
      %3673 = vmatprep.subr.mxu0 0.0
      %3674 = vmatpush2.msra.mxu0 0.0
      %3675 = vmatprep.subr.mxu0 0.0
      %3676 = vmatpush2.msra.mxu0 0.0
      %3677 = vmatprep.subr.mxu0 0.0
      %3678 = vmatpush2.msra.mxu0 0.0
      %3679 = vmatprep.subr.mxu0 0.0
      %3680 = vmatpush2.msra.mxu0 0.0
      %3681 = vmatprep.subr.mxu0 0.0
      %3682 = vmatpush2.msra.mxu0 0.0
      %3683 = vmatprep.subr.mxu0 0.0
      %3684 = vmatpush2.msra.mxu0 0.0
      %3685 = vmatprep.subr.mxu0 0.0
      %3686 = vmatpush2.msra.mxu0 0.0
      %3687 = vmatprep.subr.mxu0 0.0
      %3688 = vmatpush2.msra.mxu0 0.0
      %3689 = vmatprep.subr.mxu0 0.0
      %3690 = vmatpush2.msra.mxu0 0.0
      %3691 = vmatprep.subr.mxu0 0.0
      %3692 = vmatpush2.msra.mxu0 0.0
      %3693 = vmatprep.subr.mxu0 0.0
      %3694 = vmatpush2.msra.mxu0 0.0
      %3695 = vmatprep.subr.mxu0 0.0
      %3696 = vmatpush2.msra.mxu0 0.0
      %3697 = vmatprep.subr.mxu0 0.0
      %3698 = vmatpush2.msra.mxu0 0.0
      %3699 = vmatprep.subr.mxu0 0.0
      %3700 = vmatpush2.msra.mxu0 0.0
      %3701 = vmatprep.subr.mxu0 0.0
      %3702 = vmatpush2.msra.mxu0 0.0
      %3703 = vmatprep.subr.mxu0 0.0
      %3704 = vmatpush2.msra.mxu0 0.0
      %3705 = vmatprep.mubr.f32.mxu0 0.0
      %3706 = vmatmul.mubr.f32.gmra.mxu0 %v3546
      %v3707 = vpop.f32.mrf.mxu0
      %v3708 = vadd.f32 0.0, %v3707
      %v3709 = vpop.f32.mrf.mxu0
      %3710 = vmatprep.mubr.f32.mxu0 0.0
      %3711 = vmatmul.mubr.f32.gmra.mxu0 %v3549
      %v3712 = vpop.f32.mrf.mxu0
      %v3713 = vadd.f32 0.0, %v3712
      %v3714 = vpop.f32.mrf.mxu0
      %3715 = vmatprep.mubr.f32.mxu0 0.0
      %3716 = vmatmul.mubr.f32.gmra.mxu0 %v3552
      %v3717 = vpop.f32.mrf.mxu0
      %v3718 = vadd.f32 0.0, %v3717
      %v3719 = vpop.f32.mrf.mxu0
      %3720 = vmatprep.mubr.f32.mxu0 0.0
      %3721 = vmatmul.mubr.f32.gmra.mxu0 %v3555
      %v3722 = vpop.f32.mrf.mxu0
      %v3723 = vadd.f32 0.0, %v3722
      %v3724 = vpop.f32.mrf.mxu0
      %3725 = vmatprep.mubr.f32.mxu0 0.0
      %3726 = vmatmul.mubr.f32.gmra.mxu0 %v3558
      %v3727 = vpop.f32.mrf.mxu0
      %v3728 = vadd.f32 0.0, %v3727
      %v3729 = vpop.f32.mrf.mxu0
      %3730 = vmatprep.mubr.f32.mxu0 0.0
      %3731 = vmatmul.mubr.f32.gmra.mxu0 %v3561
      %v3732 = vpop.f32.mrf.mxu0
      %v3733 = vadd.f32 0.0, %v3732
      %v3734 = vpop.f32.mrf.mxu0
      %3735 = vmatprep.mubr.f32.mxu0 0.0
      %3736 = vmatmul.mubr.f32.gmra.mxu0 %v3564
      %v3737 = vpop.f32.mrf.mxu0
      %v3738 = vadd.f32 0.0, %v3737
      %v3739 = vpop.f32.mrf.mxu0
      %3740 = vmatprep.mubr.f32.mxu0 0.0
      %3741 = vmatmul.mubr.f32.gmra.mxu0 %v3567
      %v3742 = vpop.f32.mrf.mxu0
      %v3743 = vadd.f32 0.0, %v3742
      %v3744 = vpop.f32.mrf.mxu0
      %3745 = vmatprep.mubr.f32.mxu0 0.0
      %3746 = vmatmul.mubr.f32.gmra.mxu0 %v3570
      %v3747 = vpop.f32.mrf.mxu0
      %v3748 = vadd.f32 0.0, %v3747
      %v3749 = vpop.f32.mrf.mxu0
      %3750 = vmatprep.mubr.f32.mxu0 0.0
      %3751 = vmatmul.mubr.f32.gmra.mxu0 %v3573
      %v3752 = vpop.f32.mrf.mxu0
      %v3753 = vadd.f32 0.0, %v3752
      %v3754 = vpop.f32.mrf.mxu0
      %3755 = vmatprep.mubr.f32.mxu0 0.0
      %3756 = vmatmul.mubr.f32.gmra.mxu0 %v3576
      %v3757 = vpop.f32.mrf.mxu0
      %v3758 = vadd.f32 0.0, %v3757
      %v3759 = vpop.f32.mrf.mxu0
      %3760 = vmatprep.mubr.f32.mxu0 0.0
      %3761 = vmatmul.mubr.f32.gmra.mxu0 %v3579
      %v3762 = vpop.f32.mrf.mxu0
      %v3763 = vadd.f32 0.0, %v3762
      %v3764 = vpop.f32.mrf.mxu0
      %3765 = vmatprep.mubr.f32.mxu0 0.0
      %3766 = vmatmul.mubr.f32.gmra.mxu0 %v3582
      %v3767 = vpop.f32.mrf.mxu0
      %v3768 = vadd.f32 0.0, %v3767
      %v3769 = vpop.f32.mrf.mxu0
      %3770 = vmatprep.mubr.f32.mxu0 0.0
      %3771 = vmatmul.mubr.f32.gmra.mxu0 %v3585
      %v3772 = vpop.f32.mrf.mxu0
      %v3773 = vadd.f32 0.0, %v3772
      %v3774 = vpop.f32.mrf.mxu0
      %3775 = vmatprep.mubr.f32.mxu0 0.0
      %3776 = vmatmul.mubr.f32.gmra.mxu0 %v3588
      %v3777 = vpop.f32.mrf.mxu0
      %v3778 = vadd.f32 0.0, %v3777
      %v3779 = vpop.f32.mrf.mxu0
      %3780 = vmatprep.mubr.f32.mxu0 0.0
      %3781 = vmatmul.mubr.f32.gmra.mxu0 %v3591
      %v3782 = vpop.f32.mrf.mxu0
      %v3783 = vadd.f32 0.0, %v3782
      %v3784 = vpop.f32.mrf.mxu0
      %3785 = vmatprep.mubr.f32.mxu0 0.0
      %3786 = vmatmul.mubr.f32.gmra.mxu0 %v3594
      %v3787 = vpop.f32.mrf.mxu0
      %v3788 = vadd.f32 0.0, %v3787
      %v3789 = vpop.f32.mrf.mxu0
      %3790 = vmatprep.mubr.f32.mxu0 0.0
      %3791 = vmatmul.mubr.f32.gmra.mxu0 %v3597
      %v3792 = vpop.f32.mrf.mxu0
      %v3793 = vadd.f32 0.0, %v3792
      %v3794 = vpop.f32.mrf.mxu0
      %3795 = vmatprep.mubr.f32.mxu0 0.0
      %3796 = vmatmul.mubr.f32.gmra.mxu0 %v3600
      %v3797 = vpop.f32.mrf.mxu0
      %v3798 = vadd.f32 0.0, %v3797
      %v3799 = vpop.f32.mrf.mxu0
      %3800 = vmatprep.mubr.f32.mxu0 0.0
      %3801 = vmatmul.mubr.f32.gmra.mxu0 %v3603
      %v3802 = vpop.f32.mrf.mxu0
      %v3803 = vadd.f32 0.0, %v3802
      %v3804 = vpop.f32.mrf.mxu0
      %3805 = vmatprep.mubr.f32.mxu0 0.0
      %3806 = vmatmul.mubr.f32.gmra.mxu0 %v3606
      %v3807 = vpop.f32.mrf.mxu0
      %v3808 = vadd.f32 0.0, %v3807
      %v3809 = vpop.f32.mrf.mxu0
      %3810 = vmatprep.mubr.f32.mxu0 0.0
      %3811 = vmatmul.mubr.f32.gmra.mxu0 %v3609
      %v3812 = vpop.f32.mrf.mxu0
      %v3813 = vadd.f32 0.0, %v3812
      %v3814 = vpop.f32.mrf.mxu0
      %3815 = vmatprep.mubr.f32.mxu0 0.0
      %3816 = vmatmul.mubr.f32.gmra.mxu0 %v3612
      %v3817 = vpop.f32.mrf.mxu0
      %v3818 = vadd.f32 0.0, %v3817
      %v3819 = vpop.f32.mrf.mxu0
      %3820 = vmatprep.mubr.f32.mxu0 0.0
      %3821 = vmatmul.mubr.f32.gmra.mxu0 %v3615
      %v3822 = vpop.f32.mrf.mxu0
      %v3823 = vadd.f32 0.0, %v3822
      %v3824 = vpop.f32.mrf.mxu0
      %3825 = vmatprep.mubr.f32.mxu0 0.0
      %3826 = vmatmul.mubr.f32.gmra.mxu0 %v3618
      %v3827 = vpop.f32.mrf.mxu0
      %v3828 = vadd.f32 0.0, %v3827
      %v3829 = vpop.f32.mrf.mxu0
      %3830 = vmatprep.mubr.f32.mxu0 0.0
      %3831 = vmatmul.mubr.f32.gmra.mxu0 %v3621
      %v3832 = vpop.f32.mrf.mxu0
      %v3833 = vadd.f32 0.0, %v3832
      %v3834 = vpop.f32.mrf.mxu0
      %3835 = vmatprep.mubr.f32.mxu0 0.0
      %3836 = vmatmul.mubr.f32.gmra.mxu0 %v3624
      %v3837 = vpop.f32.mrf.mxu0
      %v3838 = vadd.f32 0.0, %v3837
      %v3839 = vpop.f32.mrf.mxu0
      %3840 = vmatprep.mubr.f32.mxu0 0.0
      %3841 = vmatmul.mubr.f32.gmra.mxu0 %v3627
      %v3842 = vpop.f32.mrf.mxu0
      %v3843 = vadd.f32 0.0, %v3842
      %v3844 = vpop.f32.mrf.mxu0
      %3845 = vmatprep.mubr.f32.mxu0 0.0
      %3846 = vmatmul.mubr.f32.gmra.mxu0 %v3630
      %v3847 = vpop.f32.mrf.mxu0
      %v3848 = vadd.f32 0.0, %v3847
      %v3849 = vpop.f32.mrf.mxu0
      %3850 = vmatprep.mubr.f32.mxu0 0.0
      %3851 = vmatmul.mubr.f32.gmra.mxu0 %v3633
      %v3852 = vpop.f32.mrf.mxu0
      %v3853 = vadd.f32 0.0, %v3852
      %v3854 = vpop.f32.mrf.mxu0
      %3855 = vmatprep.mubr.f32.mxu0 0.0
      %3856 = vmatmul.mubr.f32.gmra.mxu0 %v3636
      %v3857 = vpop.f32.mrf.mxu0
      %v3858 = vadd.f32 0.0, %v3857
      %v3859 = vpop.f32.mrf.mxu0
      %3860 = vmatprep.mubr.f32.mxu0 0.0
      %3861 = vmatmul.mubr.f32.gmra.mxu0 %v3639
      %v3862 = vpop.f32.mrf.mxu0
      %v3863 = vadd.f32 0.0, %v3862
      %v3864 = vpop.f32.mrf.mxu0
      %3865 = vdwg.mxu0
      %v3867 = vsel %vm3544, %v3089, 0
      %v3870 = vsel %vm3544, %v3090, 0
      %v3873 = vsel %vm3544, %v3091, 0
      %v3876 = vsel %vm3544, %v3092, 0
      %v3879 = vsel %vm3544, %v3093, 0
      %v3882 = vsel %vm3544, %v3094, 0
      %v3885 = vsel %vm3544, %v3095, 0
      %v3888 = vsel %vm3544, %v3096, 0
      %v3891 = vsel %vm3544, %v3097, 0
      %v3894 = vsel %vm3544, %v3098, 0
      %v3897 = vsel %vm3544, %v3099, 0
      %v3900 = vsel %vm3544, %v3100, 0
      %v3903 = vsel %vm3544, %v3101, 0
      %v3906 = vsel %vm3544, %v3102, 0
      %v3909 = vsel %vm3544, %v3103, 0
      %v3912 = vsel %vm3544, %v3104, 0
      %v3915 = vsel %vm3544, %v3105, 0
      %v3918 = vsel %vm3544, %v3106, 0
      %v3921 = vsel %vm3544, %v3107, 0
      %v3924 = vsel %vm3544, %v3108, 0
      %v3927 = vsel %vm3544, %v3109, 0
      %v3930 = vsel %vm3544, %v3110, 0
      %v3933 = vsel %vm3544, %v3111, 0
      %v3936 = vsel %vm3544, %v3112, 0
      %v3939 = vsel %vm3544, %v3113, 0
      %v3942 = vsel %vm3544, %v3114, 0
      %v3945 = vsel %vm3544, %v3115, 0
      %v3948 = vsel %vm3544, %v3116, 0
      %v3951 = vsel %vm3544, %v3117, 0
      %v3954 = vsel %vm3544, %v3118, 0
      %v3957 = vsel %vm3544, %v3119, 0
      %v3960 = vsel %vm3544, %v3120, 0
      %3962 = vmatprep.subr.mxu0 0.0
      %3963 = vmatpush1.msra.mxu0 0.0
      %3964 = vmatprep.subr.mxu0 0.0
      %3965 = vmatpush1.msra.mxu0 0.0
      %3966 = vmatprep.subr.mxu0 0.0
      %3967 = vmatpush1.msra.mxu0 0.0
      %3968 = vmatprep.subr.mxu0 0.0
      %3969 = vmatpush1.msra.mxu0 0.0
      %3970 = vmatprep.subr.mxu0 0.0
      %3971 = vmatpush1.msra.mxu0 0.0
      %3972 = vmatprep.subr.mxu0 0.0
      %3973 = vmatpush1.msra.mxu0 0.0
      %3974 = vmatprep.subr.mxu0 0.0
      %3975 = vmatpush1.msra.mxu0 0.0
      %3976 = vmatprep.subr.mxu0 0.0
      %3977 = vmatpush1.msra.mxu0 0.0
      %3978 = vmatprep.subr.mxu0 0.0
      %3979 = vmatpush1.msra.mxu0 0.0
      %3980 = vmatprep.subr.mxu0 0.0
      %3981 = vmatpush1.msra.mxu0 0.0
      %3982 = vmatprep.subr.mxu0 0.0
      %3983 = vmatpush1.msra.mxu0 0.0
      %3984 = vmatprep.subr.mxu0 0.0
      %3985 = vmatpush1.msra.mxu0 0.0
      %3986 = vmatprep.subr.mxu0 0.0
      %3987 = vmatpush1.msra.mxu0 0.0
      %3988 = vmatprep.subr.mxu0 0.0
      %3989 = vmatpush1.msra.mxu0 %v3123
      %3990 = vmatprep.subr.mxu0 0.0
      %3991 = vmatpush1.msra.mxu0 %v3122
      %3992 = vmatprep.subr.mxu0 0.0
      %3993 = vmatpush1.msra.mxu0 %v3121
      %3994 = vmatprep.subr.mxu0 0.0
      %3995 = vmatpush2.msra.mxu0 0.0
      %3996 = vmatprep.subr.mxu0 0.0
      %3997 = vmatpush2.msra.mxu0 0.0
      %3998 = vmatprep.subr.mxu0 0.0
      %3999 = vmatpush2.msra.mxu0 0.0
      %4000 = vmatprep.subr.mxu0 0.0
      %4001 = vmatpush2.msra.mxu0 0.0
      %4002 = vmatprep.subr.mxu0 0.0
      %4003 = vmatpush2.msra.mxu0 0.0
      %4004 = vmatprep.subr.mxu0 0.0
      %4005 = vmatpush2.msra.mxu0 0.0
      %4006 = vmatprep.subr.mxu0 0.0
      %4007 = vmatpush2.msra.mxu0 0.0
      %4008 = vmatprep.subr.mxu0 0.0
      %4009 = vmatpush2.msra.mxu0 0.0
      %4010 = vmatprep.subr.mxu0 0.0
      %4011 = vmatpush2.msra.mxu0 0.0
      %4012 = vmatprep.subr.mxu0 0.0
      %4013 = vmatpush2.msra.mxu0 0.0
      %4014 = vmatprep.subr.mxu0 0.0
      %4015 = vmatpush2.msra.mxu0 0.0
      %4016 = vmatprep.subr.mxu0 0.0
      %4017 = vmatpush2.msra.mxu0 0.0
      %4018 = vmatprep.subr.mxu0 0.0
      %4019 = vmatpush2.msra.mxu0 0.0
      %4020 = vmatprep.subr.mxu0 0.0
      %4021 = vmatpush2.msra.mxu0 0.0
      %4022 = vmatprep.subr.mxu0 0.0
      %4023 = vmatpush2.msra.mxu0 0.0
      %4024 = vmatprep.subr.mxu0 0.0
      %4025 = vmatpush2.msra.mxu0 0.0
      %4026 = vmatprep.mubr.f32.mxu0 0.0
      %4027 = vmatmul.mubr.f32.gmra.mxu0 %v3867
      %v4028 = vpop.f32.mrf.mxu0
      %v4029 = vadd.f32 %v3708, %v4028
      %v4030 = vpop.f32.mrf.mxu0
      %4031 = vmatprep.mubr.f32.mxu0 0.0
      %4032 = vmatmul.mubr.f32.gmra.mxu0 %v3870
      %v4033 = vpop.f32.mrf.mxu0
      %v4034 = vadd.f32 %v3713, %v4033
      %v4035 = vpop.f32.mrf.mxu0
      %4036 = vmatprep.mubr.f32.mxu0 0.0
      %4037 = vmatmul.mubr.f32.gmra.mxu0 %v3873
      %v4038 = vpop.f32.mrf.mxu0
      %v4039 = vadd.f32 %v3718, %v4038
      %v4040 = vpop.f32.mrf.mxu0
      %4041 = vmatprep.mubr.f32.mxu0 0.0
      %4042 = vmatmul.mubr.f32.gmra.mxu0 %v3876
      %v4043 = vpop.f32.mrf.mxu0
      %v4044 = vadd.f32 %v3723, %v4043
      %v4045 = vpop.f32.mrf.mxu0
      %4046 = vmatprep.mubr.f32.mxu0 0.0
      %4047 = vmatmul.mubr.f32.gmra.mxu0 %v3879
      %v4048 = vpop.f32.mrf.mxu0
      %v4049 = vadd.f32 %v3728, %v4048
      %v4050 = vpop.f32.mrf.mxu0
      %4051 = vmatprep.mubr.f32.mxu0 0.0
      %4052 = vmatmul.mubr.f32.gmra.mxu0 %v3882
      %v4053 = vpop.f32.mrf.mxu0
      %v4054 = vadd.f32 %v3733, %v4053
      %v4055 = vpop.f32.mrf.mxu0
      %4056 = vmatprep.mubr.f32.mxu0 0.0
      %4057 = vmatmul.mubr.f32.gmra.mxu0 %v3885
      %v4058 = vpop.f32.mrf.mxu0
      %v4059 = vadd.f32 %v3738, %v4058
      %v4060 = vpop.f32.mrf.mxu0
      %4061 = vmatprep.mubr.f32.mxu0 0.0
      %4062 = vmatmul.mubr.f32.gmra.mxu0 %v3888
      %v4063 = vpop.f32.mrf.mxu0
      %v4064 = vadd.f32 %v3743, %v4063
      %v4065 = vpop.f32.mrf.mxu0
      %4066 = vmatprep.mubr.f32.mxu0 0.0
      %4067 = vmatmul.mubr.f32.gmra.mxu0 %v3891
      %v4068 = vpop.f32.mrf.mxu0
      %v4069 = vadd.f32 %v3748, %v4068
      %v4070 = vpop.f32.mrf.mxu0
      %4071 = vmatprep.mubr.f32.mxu0 0.0
      %4072 = vmatmul.mubr.f32.gmra.mxu0 %v3894
      %v4073 = vpop.f32.mrf.mxu0
      %v4074 = vadd.f32 %v3753, %v4073
      %v4075 = vpop.f32.mrf.mxu0
      %4076 = vmatprep.mubr.f32.mxu0 0.0
      %4077 = vmatmul.mubr.f32.gmra.mxu0 %v3897
      %v4078 = vpop.f32.mrf.mxu0
      %v4079 = vadd.f32 %v3758, %v4078
      %v4080 = vpop.f32.mrf.mxu0
      %4081 = vmatprep.mubr.f32.mxu0 0.0
      %4082 = vmatmul.mubr.f32.gmra.mxu0 %v3900
      %v4083 = vpop.f32.mrf.mxu0
      %v4084 = vadd.f32 %v3763, %v4083
      %v4085 = vpop.f32.mrf.mxu0
      %4086 = vmatprep.mubr.f32.mxu0 0.0
      %4087 = vmatmul.mubr.f32.gmra.mxu0 %v3903
      %v4088 = vpop.f32.mrf.mxu0
      %v4089 = vadd.f32 %v3768, %v4088
      %v4090 = vpop.f32.mrf.mxu0
      %4091 = vmatprep.mubr.f32.mxu0 0.0
      %4092 = vmatmul.mubr.f32.gmra.mxu0 %v3906
      %v4093 = vpop.f32.mrf.mxu0
      %v4094 = vadd.f32 %v3773, %v4093
      %v4095 = vpop.f32.mrf.mxu0
      %4096 = vmatprep.mubr.f32.mxu0 0.0
      %4097 = vmatmul.mubr.f32.gmra.mxu0 %v3909
      %v4098 = vpop.f32.mrf.mxu0
      %v4099 = vadd.f32 %v3778, %v4098
      %v4100 = vpop.f32.mrf.mxu0
      %4101 = vmatprep.mubr.f32.mxu0 0.0
      %4102 = vmatmul.mubr.f32.gmra.mxu0 %v3912
      %v4103 = vpop.f32.mrf.mxu0
      %v4104 = vadd.f32 %v3783, %v4103
      %v4105 = vpop.f32.mrf.mxu0
      %4106 = vmatprep.mubr.f32.mxu0 0.0
      %4107 = vmatmul.mubr.f32.gmra.mxu0 %v3915
      %v4108 = vpop.f32.mrf.mxu0
      %v4109 = vadd.f32 %v3788, %v4108
      %v4110 = vpop.f32.mrf.mxu0
      %4111 = vmatprep.mubr.f32.mxu0 0.0
      %4112 = vmatmul.mubr.f32.gmra.mxu0 %v3918
      %v4113 = vpop.f32.mrf.mxu0
      %v4114 = vadd.f32 %v3793, %v4113
      %v4115 = vpop.f32.mrf.mxu0
      %4116 = vmatprep.mubr.f32.mxu0 0.0
      %4117 = vmatmul.mubr.f32.gmra.mxu0 %v3921
      %v4118 = vpop.f32.mrf.mxu0
      %v4119 = vadd.f32 %v3798, %v4118
      %v4120 = vpop.f32.mrf.mxu0
      %4121 = vmatprep.mubr.f32.mxu0 0.0
      %4122 = vmatmul.mubr.f32.gmra.mxu0 %v3924
      %v4123 = vpop.f32.mrf.mxu0
      %v4124 = vadd.f32 %v3803, %v4123
      %v4125 = vpop.f32.mrf.mxu0
      %4126 = vmatprep.mubr.f32.mxu0 0.0
      %4127 = vmatmul.mubr.f32.gmra.mxu0 %v3927
      %v4128 = vpop.f32.mrf.mxu0
      %v4129 = vadd.f32 %v3808, %v4128
      %v4130 = vpop.f32.mrf.mxu0
      %4131 = vmatprep.mubr.f32.mxu0 0.0
      %4132 = vmatmul.mubr.f32.gmra.mxu0 %v3930
      %v4133 = vpop.f32.mrf.mxu0
      %v4134 = vadd.f32 %v3813, %v4133
      %v4135 = vpop.f32.mrf.mxu0
      %4136 = vmatprep.mubr.f32.mxu0 0.0
      %4137 = vmatmul.mubr.f32.gmra.mxu0 %v3933
      %v4138 = vpop.f32.mrf.mxu0
      %v4139 = vadd.f32 %v3818, %v4138
      %v4140 = vpop.f32.mrf.mxu0
      %4141 = vmatprep.mubr.f32.mxu0 0.0
      %4142 = vmatmul.mubr.f32.gmra.mxu0 %v3936
      %v4143 = vpop.f32.mrf.mxu0
      %v4144 = vadd.f32 %v3823, %v4143
      %v4145 = vpop.f32.mrf.mxu0
      %4146 = vmatprep.mubr.f32.mxu0 0.0
      %4147 = vmatmul.mubr.f32.gmra.mxu0 %v3939
      %v4148 = vpop.f32.mrf.mxu0
      %v4149 = vadd.f32 %v3828, %v4148
      %v4150 = vpop.f32.mrf.mxu0
      %4151 = vmatprep.mubr.f32.mxu0 0.0
      %4152 = vmatmul.mubr.f32.gmra.mxu0 %v3942
      %v4153 = vpop.f32.mrf.mxu0
      %v4154 = vadd.f32 %v3833, %v4153
      %v4155 = vpop.f32.mrf.mxu0
      %4156 = vmatprep.mubr.f32.mxu0 0.0
      %4157 = vmatmul.mubr.f32.gmra.mxu0 %v3945
      %v4158 = vpop.f32.mrf.mxu0
      %v4159 = vadd.f32 %v3838, %v4158
      %v4160 = vpop.f32.mrf.mxu0
      %4161 = vmatprep.mubr.f32.mxu0 0.0
      %4162 = vmatmul.mubr.f32.gmra.mxu0 %v3948
      %v4163 = vpop.f32.mrf.mxu0
      %v4164 = vadd.f32 %v3843, %v4163
      %v4165 = vpop.f32.mrf.mxu0
      %4166 = vmatprep.mubr.f32.mxu0 0.0
      %4167 = vmatmul.mubr.f32.gmra.mxu0 %v3951
      %v4168 = vpop.f32.mrf.mxu0
      %v4169 = vadd.f32 %v3848, %v4168
      %v4170 = vpop.f32.mrf.mxu0
      %4171 = vmatprep.mubr.f32.mxu0 0.0
      %4172 = vmatmul.mubr.f32.gmra.mxu0 %v3954
      %v4173 = vpop.f32.mrf.mxu0
      %v4174 = vadd.f32 %v3853, %v4173
      %v4175 = vpop.f32.mrf.mxu0
      %4176 = vmatprep.mubr.f32.mxu0 0.0
      %4177 = vmatmul.mubr.f32.gmra.mxu0 %v3957
      %v4178 = vpop.f32.mrf.mxu0
      %v4179 = vadd.f32 %v3858, %v4178
      %v4180 = vpop.f32.mrf.mxu0
      %4181 = vmatprep.mubr.f32.mxu0 0.0
      %4182 = vmatmul.mubr.f32.gmra.mxu0 %v3960
      %v4183 = vpop.f32.mrf.mxu0
      %v4184 = vadd.f32 %v3863, %v4183
      %v4185 = vpop.f32.mrf.mxu0
      %4186 = vdwg.mxu0
      %s4187 = scalar_lea.vmem [#allocation2], 48
      %v4188 = vld [vmem:[%s4187] sm:$0xff]
      %v4189 = vld [vmem:[%s4187 + $0x8] sm:$0xff]
      %v4190 = vld [vmem:[%s4187 + $0x18] sm:$0xff]
      %v4191 = vld [vmem:[%s4187 + $0x20] sm:$0xff]
      %v4192 = vld [vmem:[%s4187 + $0x30] sm:$0xff]
      %v4193 = vld [vmem:[%s4187 + $0x38] sm:$0xff]
      %v4194 = vld [vmem:[%s4187 + $0x48] sm:$0xff]
      %v4195 = vld [vmem:[%s4187 + $0x50] sm:$0xff]
      %v4196 = vld [vmem:[%s4187 + $0x60] sm:$0xff]
      %v4197 = vld [vmem:[%s4187 + $0x68] sm:$0xff]
      %v4198 = vld [vmem:[%s4187 + $0x78] sm:$0xff]
      %v4199 = vld [vmem:[%s4187 + $0x80] sm:$0xff]
      %v4200 = vld [vmem:[%s4187 + $0x90] sm:$0xff]
      %v4201 = vld [vmem:[%s4187 + $0x98] sm:$0xff]
      %v4202 = vld [vmem:[%s4187 + $0xa8] sm:$0xff]
      %v4203 = vld [vmem:[%s4187 + $0xb0] sm:$0xff]
      %v4204 = vld [vmem:[%s4187 + $0xc0] sm:$0xff]
      %v4205 = vld [vmem:[%s4187 + $0xc8] sm:$0xff]
      %v4206 = vld [vmem:[%s4187 + $0xd8] sm:$0xff]
      %v4207 = vld [vmem:[%s4187 + $0xe0] sm:$0xff]
      %v4208 = vld [vmem:[%s4187 + $0xf0] sm:$0xff]
      %v4209 = vld [vmem:[%s4187 + $0xf8] sm:$0xff]
      %v4210 = vld [vmem:[%s4187 + $0x108] sm:$0xff]
      %v4211 = vld [vmem:[%s4187 + $0x110] sm:$0xff]
      %v4212 = vld [vmem:[%s4187 + $0x120] sm:$0xff]
      %v4213 = vld [vmem:[%s4187 + $0x128] sm:$0xff]
      %v4214 = vld [vmem:[%s4187 + $0x138] sm:$0xff]
      %v4215 = vld [vmem:[%s4187 + $0x140] sm:$0xff]
      %v4216 = vld [vmem:[%s4187 + $0x150] sm:$0xff]
      %v4217 = vld [vmem:[%s4187 + $0x158] sm:$0xff]
      %v4218 = vld [vmem:[%s4187 + $0x168] sm:$0xff]
      %v4219 = vld [vmem:[%s4187 + $0x170] sm:$0xff]
      %v4220 = vld [vmem:[%s4187 + $0x1] sm:$0xff]
      %v4221 = vld [vmem:[%s4187 + $0x9] sm:$0xff]
      %v4222 = vld [vmem:[%s4187 + $0x19] sm:$0xff]
      %v4223 = vld [vmem:[%s4187 + $0x21] sm:$0xff]
      %v4224 = vld [vmem:[%s4187 + $0x31] sm:$0xff]
      %v4225 = vld [vmem:[%s4187 + $0x39] sm:$0xff]
      %v4226 = vld [vmem:[%s4187 + $0x49] sm:$0xff]
      %v4227 = vld [vmem:[%s4187 + $0x51] sm:$0xff]
      %v4228 = vld [vmem:[%s4187 + $0x61] sm:$0xff]
      %v4229 = vld [vmem:[%s4187 + $0x69] sm:$0xff]
      %v4230 = vld [vmem:[%s4187 + $0x79] sm:$0xff]
      %v4231 = vld [vmem:[%s4187 + $0x81] sm:$0xff]
      %v4232 = vld [vmem:[%s4187 + $0x91] sm:$0xff]
      %v4233 = vld [vmem:[%s4187 + $0x99] sm:$0xff]
      %v4234 = vld [vmem:[%s4187 + $0xa9] sm:$0xff]
      %v4235 = vld [vmem:[%s4187 + $0xb1] sm:$0xff]
      %v4236 = vld [vmem:[%s4187 + $0xc1] sm:$0xff]
      %v4237 = vld [vmem:[%s4187 + $0xc9] sm:$0xff]
      %v4238 = vld [vmem:[%s4187 + $0xd9] sm:$0xff]
      %v4239 = vld [vmem:[%s4187 + $0xe1] sm:$0xff]
      %v4240 = vld [vmem:[%s4187 + $0xf1] sm:$0xff]
      %v4241 = vld [vmem:[%s4187 + $0xf9] sm:$0xff]
      %v4242 = vld [vmem:[%s4187 + $0x109] sm:$0xff]
      %v4243 = vld [vmem:[%s4187 + $0x111] sm:$0xff]
      %v4244 = vld [vmem:[%s4187 + $0x121] sm:$0xff]
      %v4245 = vld [vmem:[%s4187 + $0x129] sm:$0xff]
      %v4246 = vld [vmem:[%s4187 + $0x139] sm:$0xff]
      %v4247 = vld [vmem:[%s4187 + $0x141] sm:$0xff]
      %v4248 = vld [vmem:[%s4187 + $0x151] sm:$0xff]
      %v4249 = vld [vmem:[%s4187 + $0x159] sm:$0xff]
      %v4250 = vld [vmem:[%s4187 + $0x169] sm:$0xff]
      %v4251 = vld [vmem:[%s4187 + $0x171] sm:$0xff]
      %v4252 = vld [vmem:[%s4187 + $0x2] sm:$0xff]
      %v4253 = vld [vmem:[%s4187 + $0xa] sm:$0xff]
      %v4254 = vld [vmem:[%s4187 + $0x1a] sm:$0xff]
      %v4255 = vld [vmem:[%s4187 + $0x22] sm:$0xff]
      %v4256 = vld [vmem:[%s4187 + $0x32] sm:$0xff]
      %v4257 = vld [vmem:[%s4187 + $0x3a] sm:$0xff]
      %v4258 = vld [vmem:[%s4187 + $0x4a] sm:$0xff]
      %v4259 = vld [vmem:[%s4187 + $0x52] sm:$0xff]
      %v4260 = vld [vmem:[%s4187 + $0x62] sm:$0xff]
      %v4261 = vld [vmem:[%s4187 + $0x6a] sm:$0xff]
      %v4262 = vld [vmem:[%s4187 + $0x7a] sm:$0xff]
      %v4263 = vld [vmem:[%s4187 + $0x82] sm:$0xff]
      %v4264 = vld [vmem:[%s4187 + $0x92] sm:$0xff]
      %v4265 = vld [vmem:[%s4187 + $0x9a] sm:$0xff]
      %v4266 = vld [vmem:[%s4187 + $0xaa] sm:$0xff]
      %v4267 = vld [vmem:[%s4187 + $0xb2] sm:$0xff]
      %v4268 = vld [vmem:[%s4187 + $0xc2] sm:$0xff]
      %v4269 = vld [vmem:[%s4187 + $0xca] sm:$0xff]
      %v4270 = vld [vmem:[%s4187 + $0xda] sm:$0xff]
      %v4271 = vld [vmem:[%s4187 + $0xe2] sm:$0xff]
      %v4272 = vld [vmem:[%s4187 + $0xf2] sm:$0xff]
      %v4273 = vld [vmem:[%s4187 + $0xfa] sm:$0xff]
      %v4274 = vld [vmem:[%s4187 + $0x10a] sm:$0xff]
      %v4275 = vld [vmem:[%s4187 + $0x112] sm:$0xff]
      %v4276 = vld [vmem:[%s4187 + $0x122] sm:$0xff]
      %v4277 = vld [vmem:[%s4187 + $0x12a] sm:$0xff]
      %v4278 = vld [vmem:[%s4187 + $0x13a] sm:$0xff]
      %v4279 = vld [vmem:[%s4187 + $0x142] sm:$0xff]
      %v4280 = vld [vmem:[%s4187 + $0x152] sm:$0xff]
      %v4281 = vld [vmem:[%s4187 + $0x15a] sm:$0xff]
      %v4282 = vld [vmem:[%s4187 + $0x16a] sm:$0xff]
      %v4283 = vld [vmem:[%s4187 + $0x172] sm:$0xff]
      %4316 = vrot.lane.b32.xlu0 %v4220, 8
      %v4317 = vpop.permute.xlu0 %4316
      %4318 = vrot.lane.b32.xlu0 %v4221, 8
      %v4319 = vpop.permute.xlu0 %4318
      %4320 = vrot.lane.b32.xlu0 %v4222, 8
      %v4321 = vpop.permute.xlu0 %4320
      %4322 = vrot.lane.b32.xlu0 %v4223, 8
      %v4323 = vpop.permute.xlu0 %4322
      %4324 = vrot.lane.b32.xlu0 %v4224, 8
      %v4325 = vpop.permute.xlu0 %4324
      %4326 = vrot.lane.b32.xlu0 %v4225, 8
      %v4327 = vpop.permute.xlu0 %4326
      %4328 = vrot.lane.b32.xlu0 %v4226, 8
      %v4329 = vpop.permute.xlu0 %4328
      %4330 = vrot.lane.b32.xlu0 %v4227, 8
      %v4331 = vpop.permute.xlu0 %4330
      %4332 = vrot.lane.b32.xlu0 %v4228, 8
      %v4333 = vpop.permute.xlu0 %4332
      %4334 = vrot.lane.b32.xlu0 %v4229, 8
      %v4335 = vpop.permute.xlu0 %4334
      %4336 = vrot.lane.b32.xlu0 %v4230, 8
      %v4337 = vpop.permute.xlu0 %4336
      %4338 = vrot.lane.b32.xlu0 %v4231, 8
      %v4339 = vpop.permute.xlu0 %4338
      %4340 = vrot.lane.b32.xlu0 %v4232, 8
      %v4341 = vpop.permute.xlu0 %4340
      %4342 = vrot.lane.b32.xlu0 %v4233, 8
      %v4343 = vpop.permute.xlu0 %4342
      %4344 = vrot.lane.b32.xlu0 %v4234, 8
      %v4345 = vpop.permute.xlu0 %4344
      %4346 = vrot.lane.b32.xlu0 %v4235, 8
      %v4347 = vpop.permute.xlu0 %4346
      %4348 = vrot.lane.b32.xlu0 %v4236, 8
      %v4349 = vpop.permute.xlu0 %4348
      %4350 = vrot.lane.b32.xlu0 %v4237, 8
      %v4351 = vpop.permute.xlu0 %4350
      %4352 = vrot.lane.b32.xlu0 %v4238, 8
      %v4353 = vpop.permute.xlu0 %4352
      %4354 = vrot.lane.b32.xlu0 %v4239, 8
      %v4355 = vpop.permute.xlu0 %4354
      %4356 = vrot.lane.b32.xlu0 %v4240, 8
      %v4357 = vpop.permute.xlu0 %4356
      %4358 = vrot.lane.b32.xlu0 %v4241, 8
      %v4359 = vpop.permute.xlu0 %4358
      %4360 = vrot.lane.b32.xlu0 %v4242, 8
      %v4361 = vpop.permute.xlu0 %4360
      %4362 = vrot.lane.b32.xlu0 %v4243, 8
      %v4363 = vpop.permute.xlu0 %4362
      %4364 = vrot.lane.b32.xlu0 %v4244, 8
      %v4365 = vpop.permute.xlu0 %4364
      %4366 = vrot.lane.b32.xlu0 %v4245, 8
      %v4367 = vpop.permute.xlu0 %4366
      %4368 = vrot.lane.b32.xlu0 %v4246, 8
      %v4369 = vpop.permute.xlu0 %4368
      %4370 = vrot.lane.b32.xlu0 %v4247, 8
      %v4371 = vpop.permute.xlu0 %4370
      %4372 = vrot.lane.b32.xlu0 %v4248, 8
      %v4373 = vpop.permute.xlu0 %4372
      %4374 = vrot.lane.b32.xlu0 %v4249, 8
      %v4375 = vpop.permute.xlu0 %4374
      %4376 = vrot.lane.b32.xlu0 %v4250, 8
      %v4377 = vpop.permute.xlu0 %4376
      %4378 = vrot.lane.b32.xlu0 %v4251, 8
      %v4379 = vpop.permute.xlu0 %4378
      %4444 = vrot.lane.b32.xlu0 %v4252, 16
      %v4445 = vpop.permute.xlu0 %4444
      %4446 = vrot.lane.b32.xlu0 %v4253, 16
      %v4447 = vpop.permute.xlu0 %4446
      %4448 = vrot.lane.b32.xlu0 %v4254, 16
      %v4449 = vpop.permute.xlu0 %4448
      %4450 = vrot.lane.b32.xlu0 %v4255, 16
      %v4451 = vpop.permute.xlu0 %4450
      %4452 = vrot.lane.b32.xlu0 %v4256, 16
      %v4453 = vpop.permute.xlu0 %4452
      %4454 = vrot.lane.b32.xlu0 %v4257, 16
      %v4455 = vpop.permute.xlu0 %4454
      %4456 = vrot.lane.b32.xlu0 %v4258, 16
      %v4457 = vpop.permute.xlu0 %4456
      %4458 = vrot.lane.b32.xlu0 %v4259, 16
      %v4459 = vpop.permute.xlu0 %4458
      %4460 = vrot.lane.b32.xlu0 %v4260, 16
      %v4461 = vpop.permute.xlu0 %4460
      %4462 = vrot.lane.b32.xlu0 %v4261, 16
      %v4463 = vpop.permute.xlu0 %4462
      %4464 = vrot.lane.b32.xlu0 %v4262, 16
      %v4465 = vpop.permute.xlu0 %4464
      %4466 = vrot.lane.b32.xlu0 %v4263, 16
      %v4467 = vpop.permute.xlu0 %4466
      %4468 = vrot.lane.b32.xlu0 %v4264, 16
      %v4469 = vpop.permute.xlu0 %4468
      %4470 = vrot.lane.b32.xlu0 %v4265, 16
      %v4471 = vpop.permute.xlu0 %4470
      %4472 = vrot.lane.b32.xlu0 %v4266, 16
      %v4473 = vpop.permute.xlu0 %4472
      %4474 = vrot.lane.b32.xlu0 %v4267, 16
      %v4475 = vpop.permute.xlu0 %4474
      %4476 = vrot.lane.b32.xlu0 %v4268, 16
      %v4477 = vpop.permute.xlu0 %4476
      %4478 = vrot.lane.b32.xlu0 %v4269, 16
      %v4479 = vpop.permute.xlu0 %4478
      %4480 = vrot.lane.b32.xlu0 %v4270, 16
      %v4481 = vpop.permute.xlu0 %4480
      %4482 = vrot.lane.b32.xlu0 %v4271, 16
      %v4483 = vpop.permute.xlu0 %4482
      %4484 = vrot.lane.b32.xlu0 %v4272, 16
      %v4485 = vpop.permute.xlu0 %4484
      %4486 = vrot.lane.b32.xlu0 %v4273, 16
      %v4487 = vpop.permute.xlu0 %4486
      %4488 = vrot.lane.b32.xlu0 %v4274, 16
      %v4489 = vpop.permute.xlu0 %4488
      %4490 = vrot.lane.b32.xlu0 %v4275, 16
      %v4491 = vpop.permute.xlu0 %4490
      %4492 = vrot.lane.b32.xlu0 %v4276, 16
      %v4493 = vpop.permute.xlu0 %4492
      %4494 = vrot.lane.b32.xlu0 %v4277, 16
      %v4495 = vpop.permute.xlu0 %4494
      %4496 = vrot.lane.b32.xlu0 %v4278, 16
      %v4497 = vpop.permute.xlu0 %4496
      %4498 = vrot.lane.b32.xlu0 %v4279, 16
      %v4499 = vpop.permute.xlu0 %4498
      %4500 = vrot.lane.b32.xlu0 %v4280, 16
      %v4501 = vpop.permute.xlu0 %4500
      %4502 = vrot.lane.b32.xlu0 %v4281, 16
      %v4503 = vpop.permute.xlu0 %4502
      %4504 = vrot.lane.b32.xlu0 %v4282, 16
      %v4505 = vpop.permute.xlu0 %4504
      %4506 = vrot.lane.b32.xlu0 %v4283, 16
      %v4507 = vpop.permute.xlu0 %4506
      %v4540 = vsel %vm664, %v4188, %v4317
      %v4541 = vsel %vm664, %v4189, %v4319
      %v4542 = vsel %vm664, %v4190, %v4321
      %v4543 = vsel %vm664, %v4191, %v4323
      %v4544 = vsel %vm664, %v4192, %v4325
      %v4545 = vsel %vm664, %v4193, %v4327
      %v4546 = vsel %vm664, %v4194, %v4329
      %v4547 = vsel %vm664, %v4195, %v4331
      %v4548 = vsel %vm664, %v4196, %v4333
      %v4549 = vsel %vm664, %v4197, %v4335
      %v4550 = vsel %vm664, %v4198, %v4337
      %v4551 = vsel %vm664, %v4199, %v4339
      %v4552 = vsel %vm664, %v4200, %v4341
      %v4553 = vsel %vm664, %v4201, %v4343
      %v4554 = vsel %vm664, %v4202, %v4345
      %v4555 = vsel %vm664, %v4203, %v4347
      %v4556 = vsel %vm664, %v4204, %v4349
      %v4557 = vsel %vm664, %v4205, %v4351
      %v4558 = vsel %vm664, %v4206, %v4353
      %v4559 = vsel %vm664, %v4207, %v4355
      %v4560 = vsel %vm664, %v4208, %v4357
      %v4561 = vsel %vm664, %v4209, %v4359
      %v4562 = vsel %vm664, %v4210, %v4361
      %v4563 = vsel %vm664, %v4211, %v4363
      %v4564 = vsel %vm664, %v4212, %v4365
      %v4565 = vsel %vm664, %v4213, %v4367
      %v4566 = vsel %vm664, %v4214, %v4369
      %v4567 = vsel %vm664, %v4215, %v4371
      %v4568 = vsel %vm664, %v4216, %v4373
      %v4569 = vsel %vm664, %v4217, %v4375
      %v4570 = vsel %vm664, %v4218, %v4377
      %v4571 = vsel %vm664, %v4219, %v4379
      %v4572 = vsel %vm3088, %v4540, %v4445
      %v4573 = vsel %vm3088, %v4541, %v4447
      %v4574 = vsel %vm3088, %v4542, %v4449
      %v4575 = vsel %vm3088, %v4543, %v4451
      %v4576 = vsel %vm3088, %v4544, %v4453
      %v4577 = vsel %vm3088, %v4545, %v4455
      %v4578 = vsel %vm3088, %v4546, %v4457
      %v4579 = vsel %vm3088, %v4547, %v4459
      %v4580 = vsel %vm3088, %v4548, %v4461
      %v4581 = vsel %vm3088, %v4549, %v4463
      %v4582 = vsel %vm3088, %v4550, %v4465
      %v4583 = vsel %vm3088, %v4551, %v4467
      %v4584 = vsel %vm3088, %v4552, %v4469
      %v4585 = vsel %vm3088, %v4553, %v4471
      %v4586 = vsel %vm3088, %v4554, %v4473
      %v4587 = vsel %vm3088, %v4555, %v4475
      %v4588 = vsel %vm3088, %v4556, %v4477
      %v4589 = vsel %vm3088, %v4557, %v4479
      %v4590 = vsel %vm3088, %v4558, %v4481
      %v4591 = vsel %vm3088, %v4559, %v4483
      %v4592 = vsel %vm3088, %v4560, %v4485
      %v4593 = vsel %vm3088, %v4561, %v4487
      %v4594 = vsel %vm3088, %v4562, %v4489
      %v4595 = vsel %vm3088, %v4563, %v4491
      %v4596 = vsel %vm3088, %v4564, %v4493
      %v4597 = vsel %vm3088, %v4565, %v4495
      %v4598 = vsel %vm3088, %v4566, %v4497
      %v4599 = vsel %vm3088, %v4567, %v4499
      %v4600 = vsel %vm3088, %v4568, %v4501
      %v4601 = vsel %vm3088, %v4569, %v4503
      %v4602 = vsel %vm3088, %v4570, %v4505
      %v4603 = vsel %vm3088, %v4571, %v4507
      %s4604 = scalar_lea.vmem %s3, 48
      %v4605 = vld [vmem:[%s4604] sm:$0xff]
      %v4606 = vld [vmem:[%s4604 + $0x8] sm:$0xff]
      %v4607 = vld [vmem:[%s4604 + $0x10] sm:$0xff]
      %v4609 = vsel %vm3544, %v4572, 0
      %v4612 = vsel %vm3544, %v4573, 0
      %v4615 = vsel %vm3544, %v4574, 0
      %v4618 = vsel %vm3544, %v4575, 0
      %v4621 = vsel %vm3544, %v4576, 0
      %v4624 = vsel %vm3544, %v4577, 0
      %v4627 = vsel %vm3544, %v4578, 0
      %v4630 = vsel %vm3544, %v4579, 0
      %v4633 = vsel %vm3544, %v4580, 0
      %v4636 = vsel %vm3544, %v4581, 0
      %v4639 = vsel %vm3544, %v4582, 0
      %v4642 = vsel %vm3544, %v4583, 0
      %v4645 = vsel %vm3544, %v4584, 0
      %v4648 = vsel %vm3544, %v4585, 0
      %v4651 = vsel %vm3544, %v4586, 0
      %v4654 = vsel %vm3544, %v4587, 0
      %v4657 = vsel %vm3544, %v4588, 0
      %v4660 = vsel %vm3544, %v4589, 0
      %v4663 = vsel %vm3544, %v4590, 0
      %v4666 = vsel %vm3544, %v4591, 0
      %v4669 = vsel %vm3544, %v4592, 0
      %v4672 = vsel %vm3544, %v4593, 0
      %v4675 = vsel %vm3544, %v4594, 0
      %v4678 = vsel %vm3544, %v4595, 0
      %v4681 = vsel %vm3544, %v4596, 0
      %v4684 = vsel %vm3544, %v4597, 0
      %v4687 = vsel %vm3544, %v4598, 0
      %v4690 = vsel %vm3544, %v4599, 0
      %v4693 = vsel %vm3544, %v4600, 0
      %v4696 = vsel %vm3544, %v4601, 0
      %v4699 = vsel %vm3544, %v4602, 0
      %v4702 = vsel %vm3544, %v4603, 0
      %4704 = vmatprep.subr.mxu0 0.0
      %4705 = vmatpush1.msra.mxu0 0.0
      %4706 = vmatprep.subr.mxu0 0.0
      %4707 = vmatpush1.msra.mxu0 0.0
      %4708 = vmatprep.subr.mxu0 0.0
      %4709 = vmatpush1.msra.mxu0 0.0
      %4710 = vmatprep.subr.mxu0 0.0
      %4711 = vmatpush1.msra.mxu0 0.0
      %4712 = vmatprep.subr.mxu0 0.0
      %4713 = vmatpush1.msra.mxu0 0.0
      %4714 = vmatprep.subr.mxu0 0.0
      %4715 = vmatpush1.msra.mxu0 0.0
      %4716 = vmatprep.subr.mxu0 0.0
      %4717 = vmatpush1.msra.mxu0 0.0
      %4718 = vmatprep.subr.mxu0 0.0
      %4719 = vmatpush1.msra.mxu0 0.0
      %4720 = vmatprep.subr.mxu0 0.0
      %4721 = vmatpush1.msra.mxu0 0.0
      %4722 = vmatprep.subr.mxu0 0.0
      %4723 = vmatpush1.msra.mxu0 0.0
      %4724 = vmatprep.subr.mxu0 0.0
      %4725 = vmatpush1.msra.mxu0 0.0
      %4726 = vmatprep.subr.mxu0 0.0
      %4727 = vmatpush1.msra.mxu0 0.0
      %4728 = vmatprep.subr.mxu0 0.0
      %4729 = vmatpush1.msra.mxu0 0.0
      %4730 = vmatprep.subr.mxu0 0.0
      %4731 = vmatpush1.msra.mxu0 %v4607
      %4732 = vmatprep.subr.mxu0 0.0
      %4733 = vmatpush1.msra.mxu0 %v4606
      %4734 = vmatprep.subr.mxu0 0.0
      %4735 = vmatpush1.msra.mxu0 %v4605
      %4736 = vmatprep.subr.mxu0 0.0
      %4737 = vmatpush2.msra.mxu0 0.0
      %4738 = vmatprep.subr.mxu0 0.0
      %4739 = vmatpush2.msra.mxu0 0.0
      %4740 = vmatprep.subr.mxu0 0.0
      %4741 = vmatpush2.msra.mxu0 0.0
      %4742 = vmatprep.subr.mxu0 0.0
      %4743 = vmatpush2.msra.mxu0 0.0
      %4744 = vmatprep.subr.mxu0 0.0
      %4745 = vmatpush2.msra.mxu0 0.0
      %4746 = vmatprep.subr.mxu0 0.0
      %4747 = vmatpush2.msra.mxu0 0.0
      %4748 = vmatprep.subr.mxu0 0.0
      %4749 = vmatpush2.msra.mxu0 0.0
      %4750 = vmatprep.subr.mxu0 0.0
      %4751 = vmatpush2.msra.mxu0 0.0
      %4752 = vmatprep.subr.mxu0 0.0
      %4753 = vmatpush2.msra.mxu0 0.0
      %4754 = vmatprep.subr.mxu0 0.0
      %4755 = vmatpush2.msra.mxu0 0.0
      %4756 = vmatprep.subr.mxu0 0.0
      %4757 = vmatpush2.msra.mxu0 0.0
      %4758 = vmatprep.subr.mxu0 0.0
      %4759 = vmatpush2.msra.mxu0 0.0
      %4760 = vmatprep.subr.mxu0 0.0
      %4761 = vmatpush2.msra.mxu0 0.0
      %4762 = vmatprep.subr.mxu0 0.0
      %4763 = vmatpush2.msra.mxu0 0.0
      %4764 = vmatprep.subr.mxu0 0.0
      %4765 = vmatpush2.msra.mxu0 0.0
      %4766 = vmatprep.subr.mxu0 0.0
      %4767 = vmatpush2.msra.mxu0 0.0
      %4768 = vmatprep.mubr.f32.mxu0 0.0
      %4769 = vmatmul.mubr.f32.gmra.mxu0 %v4609
      %v4770 = vpop.f32.mrf.mxu0
      %v4771 = vadd.f32 0.0, %v4770
      %v4772 = vpop.f32.mrf.mxu0
      %4773 = vmatprep.mubr.f32.mxu0 0.0
      %4774 = vmatmul.mubr.f32.gmra.mxu0 %v4612
      %v4775 = vpop.f32.mrf.mxu0
      %v4776 = vadd.f32 0.0, %v4775
      %v4777 = vpop.f32.mrf.mxu0
      %4778 = vmatprep.mubr.f32.mxu0 0.0
      %4779 = vmatmul.mubr.f32.gmra.mxu0 %v4615
      %v4780 = vpop.f32.mrf.mxu0
      %v4781 = vadd.f32 0.0, %v4780
      %v4782 = vpop.f32.mrf.mxu0
      %4783 = vmatprep.mubr.f32.mxu0 0.0
      %4784 = vmatmul.mubr.f32.gmra.mxu0 %v4618
      %v4785 = vpop.f32.mrf.mxu0
      %v4786 = vadd.f32 0.0, %v4785
      %v4787 = vpop.f32.mrf.mxu0
      %4788 = vmatprep.mubr.f32.mxu0 0.0
      %4789 = vmatmul.mubr.f32.gmra.mxu0 %v4621
      %v4790 = vpop.f32.mrf.mxu0
      %v4791 = vadd.f32 0.0, %v4790
      %v4792 = vpop.f32.mrf.mxu0
      %4793 = vmatprep.mubr.f32.mxu0 0.0
      %4794 = vmatmul.mubr.f32.gmra.mxu0 %v4624
      %v4795 = vpop.f32.mrf.mxu0
      %v4796 = vadd.f32 0.0, %v4795
      %v4797 = vpop.f32.mrf.mxu0
      %4798 = vmatprep.mubr.f32.mxu0 0.0
      %4799 = vmatmul.mubr.f32.gmra.mxu0 %v4627
      %v4800 = vpop.f32.mrf.mxu0
      %v4801 = vadd.f32 0.0, %v4800
      %v4802 = vpop.f32.mrf.mxu0
      %4803 = vmatprep.mubr.f32.mxu0 0.0
      %4804 = vmatmul.mubr.f32.gmra.mxu0 %v4630
      %v4805 = vpop.f32.mrf.mxu0
      %v4806 = vadd.f32 0.0, %v4805
      %v4807 = vpop.f32.mrf.mxu0
      %4808 = vmatprep.mubr.f32.mxu0 0.0
      %4809 = vmatmul.mubr.f32.gmra.mxu0 %v4633
      %v4810 = vpop.f32.mrf.mxu0
      %v4811 = vadd.f32 0.0, %v4810
      %v4812 = vpop.f32.mrf.mxu0
      %4813 = vmatprep.mubr.f32.mxu0 0.0
      %4814 = vmatmul.mubr.f32.gmra.mxu0 %v4636
      %v4815 = vpop.f32.mrf.mxu0
      %v4816 = vadd.f32 0.0, %v4815
      %v4817 = vpop.f32.mrf.mxu0
      %4818 = vmatprep.mubr.f32.mxu0 0.0
      %4819 = vmatmul.mubr.f32.gmra.mxu0 %v4639
      %v4820 = vpop.f32.mrf.mxu0
      %v4821 = vadd.f32 0.0, %v4820
      %v4822 = vpop.f32.mrf.mxu0
      %4823 = vmatprep.mubr.f32.mxu0 0.0
      %4824 = vmatmul.mubr.f32.gmra.mxu0 %v4642
      %v4825 = vpop.f32.mrf.mxu0
      %v4826 = vadd.f32 0.0, %v4825
      %v4827 = vpop.f32.mrf.mxu0
      %4828 = vmatprep.mubr.f32.mxu0 0.0
      %4829 = vmatmul.mubr.f32.gmra.mxu0 %v4645
      %v4830 = vpop.f32.mrf.mxu0
      %v4831 = vadd.f32 0.0, %v4830
      %v4832 = vpop.f32.mrf.mxu0
      %4833 = vmatprep.mubr.f32.mxu0 0.0
      %4834 = vmatmul.mubr.f32.gmra.mxu0 %v4648
      %v4835 = vpop.f32.mrf.mxu0
      %v4836 = vadd.f32 0.0, %v4835
      %v4837 = vpop.f32.mrf.mxu0
      %4838 = vmatprep.mubr.f32.mxu0 0.0
      %4839 = vmatmul.mubr.f32.gmra.mxu0 %v4651
      %v4840 = vpop.f32.mrf.mxu0
      %v4841 = vadd.f32 0.0, %v4840
      %v4842 = vpop.f32.mrf.mxu0
      %4843 = vmatprep.mubr.f32.mxu0 0.0
      %4844 = vmatmul.mubr.f32.gmra.mxu0 %v4654
      %v4845 = vpop.f32.mrf.mxu0
      %v4846 = vadd.f32 0.0, %v4845
      %v4847 = vpop.f32.mrf.mxu0
      %4848 = vmatprep.mubr.f32.mxu0 0.0
      %4849 = vmatmul.mubr.f32.gmra.mxu0 %v4657
      %v4850 = vpop.f32.mrf.mxu0
      %v4851 = vadd.f32 0.0, %v4850
      %v4852 = vpop.f32.mrf.mxu0
      %4853 = vmatprep.mubr.f32.mxu0 0.0
      %4854 = vmatmul.mubr.f32.gmra.mxu0 %v4660
      %v4855 = vpop.f32.mrf.mxu0
      %v4856 = vadd.f32 0.0, %v4855
      %v4857 = vpop.f32.mrf.mxu0
      %4858 = vmatprep.mubr.f32.mxu0 0.0
      %4859 = vmatmul.mubr.f32.gmra.mxu0 %v4663
      %v4860 = vpop.f32.mrf.mxu0
      %v4861 = vadd.f32 0.0, %v4860
      %v4862 = vpop.f32.mrf.mxu0
      %4863 = vmatprep.mubr.f32.mxu0 0.0
      %4864 = vmatmul.mubr.f32.gmra.mxu0 %v4666
      %v4865 = vpop.f32.mrf.mxu0
      %v4866 = vadd.f32 0.0, %v4865
      %v4867 = vpop.f32.mrf.mxu0
      %4868 = vmatprep.mubr.f32.mxu0 0.0
      %4869 = vmatmul.mubr.f32.gmra.mxu0 %v4669
      %v4870 = vpop.f32.mrf.mxu0
      %v4871 = vadd.f32 0.0, %v4870
      %v4872 = vpop.f32.mrf.mxu0
      %4873 = vmatprep.mubr.f32.mxu0 0.0
      %4874 = vmatmul.mubr.f32.gmra.mxu0 %v4672
      %v4875 = vpop.f32.mrf.mxu0
      %v4876 = vadd.f32 0.0, %v4875
      %v4877 = vpop.f32.mrf.mxu0
      %4878 = vmatprep.mubr.f32.mxu0 0.0
      %4879 = vmatmul.mubr.f32.gmra.mxu0 %v4675
      %v4880 = vpop.f32.mrf.mxu0
      %v4881 = vadd.f32 0.0, %v4880
      %v4882 = vpop.f32.mrf.mxu0
      %4883 = vmatprep.mubr.f32.mxu0 0.0
      %4884 = vmatmul.mubr.f32.gmra.mxu0 %v4678
      %v4885 = vpop.f32.mrf.mxu0
      %v4886 = vadd.f32 0.0, %v4885
      %v4887 = vpop.f32.mrf.mxu0
      %4888 = vmatprep.mubr.f32.mxu0 0.0
      %4889 = vmatmul.mubr.f32.gmra.mxu0 %v4681
      %v4890 = vpop.f32.mrf.mxu0
      %v4891 = vadd.f32 0.0, %v4890
      %v4892 = vpop.f32.mrf.mxu0
      %4893 = vmatprep.mubr.f32.mxu0 0.0
      %4894 = vmatmul.mubr.f32.gmra.mxu0 %v4684
      %v4895 = vpop.f32.mrf.mxu0
      %v4896 = vadd.f32 0.0, %v4895
      %v4897 = vpop.f32.mrf.mxu0
      %4898 = vmatprep.mubr.f32.mxu0 0.0
      %4899 = vmatmul.mubr.f32.gmra.mxu0 %v4687
      %v4900 = vpop.f32.mrf.mxu0
      %v4901 = vadd.f32 0.0, %v4900
      %v4902 = vpop.f32.mrf.mxu0
      %4903 = vmatprep.mubr.f32.mxu0 0.0
      %4904 = vmatmul.mubr.f32.gmra.mxu0 %v4690
      %v4905 = vpop.f32.mrf.mxu0
      %v4906 = vadd.f32 0.0, %v4905
      %v4907 = vpop.f32.mrf.mxu0
      %4908 = vmatprep.mubr.f32.mxu0 0.0
      %4909 = vmatmul.mubr.f32.gmra.mxu0 %v4693
      %v4910 = vpop.f32.mrf.mxu0
      %v4911 = vadd.f32 0.0, %v4910
      %v4912 = vpop.f32.mrf.mxu0
      %4913 = vmatprep.mubr.f32.mxu0 0.0
      %4914 = vmatmul.mubr.f32.gmra.mxu0 %v4696
      %v4915 = vpop.f32.mrf.mxu0
      %v4916 = vadd.f32 0.0, %v4915
      %v4917 = vpop.f32.mrf.mxu0
      %4918 = vmatprep.mubr.f32.mxu0 0.0
      %4919 = vmatmul.mubr.f32.gmra.mxu0 %v4699
      %v4920 = vpop.f32.mrf.mxu0
      %v4921 = vadd.f32 0.0, %v4920
      %v4922 = vpop.f32.mrf.mxu0
      %4923 = vmatprep.mubr.f32.mxu0 0.0
      %4924 = vmatmul.mubr.f32.gmra.mxu0 %v4702
      %v4925 = vpop.f32.mrf.mxu0
      %v4926 = vadd.f32 0.0, %v4925
      %v4927 = vpop.f32.mrf.mxu0
      %4928 = vdwg.mxu0
      %v4929 = vadd.f32 %v4029, %v4771
      %v4930 = vadd.f32 %v4034, %v4776
      %v4931 = vadd.f32 %v4039, %v4781
      %v4932 = vadd.f32 %v4044, %v4786
      %v4933 = vadd.f32 %v4049, %v4791
      %v4934 = vadd.f32 %v4054, %v4796
      %v4935 = vadd.f32 %v4059, %v4801
      %v4936 = vadd.f32 %v4064, %v4806
      %v4937 = vadd.f32 %v4069, %v4811
      %v4938 = vadd.f32 %v4074, %v4816
      %v4939 = vadd.f32 %v4079, %v4821
      %v4940 = vadd.f32 %v4084, %v4826
      %v4941 = vadd.f32 %v4089, %v4831
      %v4942 = vadd.f32 %v4094, %v4836
      %v4943 = vadd.f32 %v4099, %v4841
      %v4944 = vadd.f32 %v4104, %v4846
      %v4945 = vadd.f32 %v4109, %v4851
      %v4946 = vadd.f32 %v4114, %v4856
      %v4947 = vadd.f32 %v4119, %v4861
      %v4948 = vadd.f32 %v4124, %v4866
      %v4949 = vadd.f32 %v4129, %v4871
      %v4950 = vadd.f32 %v4134, %v4876
      %v4951 = vadd.f32 %v4139, %v4881
      %v4952 = vadd.f32 %v4144, %v4886
      %v4953 = vadd.f32 %v4149, %v4891
      %v4954 = vadd.f32 %v4154, %v4896
      %v4955 = vadd.f32 %v4159, %v4901
      %v4956 = vadd.f32 %v4164, %v4906
      %v4957 = vadd.f32 %v4169, %v4911
      %v4958 = vadd.f32 %v4174, %v4916
      %v4959 = vadd.f32 %v4179, %v4921
      %v4960 = vadd.f32 %v4184, %v4926
      %v4961 = vld [vmem:[%s699 + $0x1] sm:$0xff]
      %v4962 = vld [vmem:[%s699 + $0x9] sm:$0xff]
      %v4963 = vld [vmem:[%s699 + $0x19] sm:$0xff]
      %v4964 = vld [vmem:[%s699 + $0x21] sm:$0xff]
      %v4965 = vld [vmem:[%s699 + $0x31] sm:$0xff]
      %v4966 = vld [vmem:[%s699 + $0x39] sm:$0xff]
      %v4967 = vld [vmem:[%s699 + $0x49] sm:$0xff]
      %v4968 = vld [vmem:[%s699 + $0x51] sm:$0xff]
      %v4969 = vld [vmem:[%s699 + $0x61] sm:$0xff]
      %v4970 = vld [vmem:[%s699 + $0x69] sm:$0xff]
      %v4971 = vld [vmem:[%s699 + $0x79] sm:$0xff]
      %v4972 = vld [vmem:[%s699 + $0x81] sm:$0xff]
      %v4973 = vld [vmem:[%s699 + $0x91] sm:$0xff]
      %v4974 = vld [vmem:[%s699 + $0x99] sm:$0xff]
      %v4975 = vld [vmem:[%s699 + $0xa9] sm:$0xff]
      %v4976 = vld [vmem:[%s699 + $0xb1] sm:$0xff]
      %v4977 = vld [vmem:[%s699 + $0xc1] sm:$0xff]
      %v4978 = vld [vmem:[%s699 + $0xc9] sm:$0xff]
      %v4979 = vld [vmem:[%s699 + $0xd9] sm:$0xff]
      %v4980 = vld [vmem:[%s699 + $0xe1] sm:$0xff]
      %v4981 = vld [vmem:[%s699 + $0xf1] sm:$0xff]
      %v4982 = vld [vmem:[%s699 + $0xf9] sm:$0xff]
      %v4983 = vld [vmem:[%s699 + $0x109] sm:$0xff]
      %v4984 = vld [vmem:[%s699 + $0x111] sm:$0xff]
      %v4985 = vld [vmem:[%s699 + $0x121] sm:$0xff]
      %v4986 = vld [vmem:[%s699 + $0x129] sm:$0xff]
      %v4987 = vld [vmem:[%s699 + $0x139] sm:$0xff]
      %v4988 = vld [vmem:[%s699 + $0x141] sm:$0xff]
      %v4989 = vld [vmem:[%s699 + $0x151] sm:$0xff]
      %v4990 = vld [vmem:[%s699 + $0x159] sm:$0xff]
      %v4991 = vld [vmem:[%s699 + $0x169] sm:$0xff]
      %v4992 = vld [vmem:[%s699 + $0x171] sm:$0xff]
      %v4993 = vld [vmem:[%s5] sm:$0xf]
      %v4994 = vld [vmem:[%s6] sm:$0x1]
      %v4996 = vlaneseq
      %v4997 = vshrl.u32 %v4996, 7
      %v4998 = vsub.s32 0, %v4997
      %v4999 = vrot.slane %v4994, %v4998
      %v5002 = vsel %vm631, %v4961, 0
      %v5005 = vsel %vm631, %v4962, 0
      %v5008 = vsel %vm631, %v4963, 0
      %v5011 = vsel %vm631, %v4964, 0
      %v5014 = vsel %vm631, %v4965, 0
      %v5017 = vsel %vm631, %v4966, 0
      %v5020 = vsel %vm631, %v4967, 0
      %v5023 = vsel %vm631, %v4968, 0
      %v5026 = vsel %vm631, %v4969, 0
      %v5029 = vsel %vm631, %v4970, 0
      %v5032 = vsel %vm631, %v4971, 0
      %v5035 = vsel %vm631, %v4972, 0
      %v5038 = vsel %vm631, %v4973, 0
      %v5041 = vsel %vm631, %v4974, 0
      %v5044 = vsel %vm631, %v4975, 0
      %v5047 = vsel %vm631, %v4976, 0
      %v5050 = vsel %vm631, %v4977, 0
      %v5053 = vsel %vm631, %v4978, 0
      %v5056 = vsel %vm631, %v4979, 0
      %v5059 = vsel %vm631, %v4980, 0
      %v5062 = vsel %vm631, %v4981, 0
      %v5065 = vsel %vm631, %v4982, 0
      %v5068 = vsel %vm631, %v4983, 0
      %v5071 = vsel %vm631, %v4984, 0
      %v5074 = vsel %vm631, %v4985, 0
      %v5077 = vsel %vm631, %v4986, 0
      %v5080 = vsel %vm631, %v4987, 0
      %v5083 = vsel %vm631, %v4988, 0
      %v5086 = vsel %vm631, %v4989, 0
      %v5089 = vsel %vm631, %v4990, 0
      %v5092 = vsel %vm631, %v4991, 0
      %v5095 = vsel %vm631, %v4992, 0
      %v5098 = vsel %vm1216, %v4993, 0
      %5100 = vmatprep.subr.mxu0 0.0
      %5101 = vmatpush1.msra.mxu0 0.0
      %5102 = vmatprep.subr.mxu0 0.0
      %5103 = vmatpush1.msra.mxu0 0.0
      %5104 = vmatprep.subr.mxu0 0.0
      %5105 = vmatpush1.msra.mxu0 0.0
      %5106 = vmatprep.subr.mxu0 0.0
      %5107 = vmatpush1.msra.mxu0 0.0
      %5108 = vmatprep.subr.mxu0 0.0
      %5109 = vmatpush1.msra.mxu0 0.0
      %5110 = vmatprep.subr.mxu0 0.0
      %5111 = vmatpush1.msra.mxu0 0.0
      %5112 = vmatprep.subr.mxu0 0.0
      %5113 = vmatpush1.msra.mxu0 0.0
      %5114 = vmatprep.subr.mxu0 0.0
      %5115 = vmatpush1.msra.mxu0 0.0
      %5116 = vmatprep.subr.mxu0 0.0
      %5117 = vmatpush1.msra.mxu0 0.0
      %5118 = vmatprep.subr.mxu0 0.0
      %5119 = vmatpush1.msra.mxu0 0.0
      %5120 = vmatprep.subr.mxu0 0.0
      %5121 = vmatpush1.msra.mxu0 0.0
      %5122 = vmatprep.subr.mxu0 0.0
      %5123 = vmatpush1.msra.mxu0 0.0
      %5124 = vmatprep.subr.mxu0 0.0
      %5125 = vmatpush1.msra.mxu0 0.0
      %5126 = vmatprep.subr.mxu0 0.0
      %5127 = vmatpush1.msra.mxu0 0.0
      %5128 = vmatprep.subr.mxu0 0.0
      %5129 = vmatpush1.msra.mxu0 0.0
      %5130 = vmatprep.subr.mxu0 0.0
      %5131 = vmatpush1.msra.mxu0 %v5098
      %5132 = vmatprep.subr.mxu0 0.0
      %5133 = vmatpush2.msra.mxu0 0.0
      %5134 = vmatprep.subr.mxu0 0.0
      %5135 = vmatpush2.msra.mxu0 0.0
      %5136 = vmatprep.subr.mxu0 0.0
      %5137 = vmatpush2.msra.mxu0 0.0
      %5138 = vmatprep.subr.mxu0 0.0
      %5139 = vmatpush2.msra.mxu0 0.0
      %5140 = vmatprep.subr.mxu0 0.0
      %5141 = vmatpush2.msra.mxu0 0.0
      %5142 = vmatprep.subr.mxu0 0.0
      %5143 = vmatpush2.msra.mxu0 0.0
      %5144 = vmatprep.subr.mxu0 0.0
      %5145 = vmatpush2.msra.mxu0 0.0
      %5146 = vmatprep.subr.mxu0 0.0
      %5147 = vmatpush2.msra.mxu0 0.0
      %5148 = vmatprep.subr.mxu0 0.0
      %5149 = vmatpush2.msra.mxu0 0.0
      %5150 = vmatprep.subr.mxu0 0.0
      %5151 = vmatpush2.msra.mxu0 0.0
      %5152 = vmatprep.subr.mxu0 0.0
      %5153 = vmatpush2.msra.mxu0 0.0
      %5154 = vmatprep.subr.mxu0 0.0
      %5155 = vmatpush2.msra.mxu0 0.0
      %5156 = vmatprep.subr.mxu0 0.0
      %5157 = vmatpush2.msra.mxu0 0.0
      %5158 = vmatprep.subr.mxu0 0.0
      %5159 = vmatpush2.msra.mxu0 0.0
      %5160 = vmatprep.subr.mxu0 0.0
      %5161 = vmatpush2.msra.mxu0 0.0
      %5162 = vmatprep.subr.mxu0 0.0
      %5163 = vmatpush2.msra.mxu0 0.0
      %5164 = vmatprep.mubr.f32.mxu0 0.0
      %5165 = vmatmul.mubr.f32.gmra.mxu0 %v5002
      %v5166 = vpop.f32.mrf.mxu0
      %v5167 = vadd.f32 %v4999, %v5166
      %v5168 = vpop.f32.mrf.mxu0
      %5169 = vmatprep.mubr.f32.mxu0 0.0
      %5170 = vmatmul.mubr.f32.gmra.mxu0 %v5005
      %v5171 = vpop.f32.mrf.mxu0
      %v5172 = vadd.f32 %v4999, %v5171
      %v5173 = vpop.f32.mrf.mxu0
      %5174 = vmatprep.mubr.f32.mxu0 0.0
      %5175 = vmatmul.mubr.f32.gmra.mxu0 %v5008
      %v5176 = vpop.f32.mrf.mxu0
      %v5177 = vadd.f32 %v4999, %v5176
      %v5178 = vpop.f32.mrf.mxu0
      %5179 = vmatprep.mubr.f32.mxu0 0.0
      %5180 = vmatmul.mubr.f32.gmra.mxu0 %v5011
      %v5181 = vpop.f32.mrf.mxu0
      %v5182 = vadd.f32 %v4999, %v5181
      %v5183 = vpop.f32.mrf.mxu0
      %5184 = vmatprep.mubr.f32.mxu0 0.0
      %5185 = vmatmul.mubr.f32.gmra.mxu0 %v5014
      %v5186 = vpop.f32.mrf.mxu0
      %v5187 = vadd.f32 %v4999, %v5186
      %v5188 = vpop.f32.mrf.mxu0
      %5189 = vmatprep.mubr.f32.mxu0 0.0
      %5190 = vmatmul.mubr.f32.gmra.mxu0 %v5017
      %v5191 = vpop.f32.mrf.mxu0
      %v5192 = vadd.f32 %v4999, %v5191
      %v5193 = vpop.f32.mrf.mxu0
      %5194 = vmatprep.mubr.f32.mxu0 0.0
      %5195 = vmatmul.mubr.f32.gmra.mxu0 %v5020
      %v5196 = vpop.f32.mrf.mxu0
      %v5197 = vadd.f32 %v4999, %v5196
      %v5198 = vpop.f32.mrf.mxu0
      %5199 = vmatprep.mubr.f32.mxu0 0.0
      %5200 = vmatmul.mubr.f32.gmra.mxu0 %v5023
      %v5201 = vpop.f32.mrf.mxu0
      %v5202 = vadd.f32 %v4999, %v5201
      %v5203 = vpop.f32.mrf.mxu0
      %5204 = vmatprep.mubr.f32.mxu0 0.0
      %5205 = vmatmul.mubr.f32.gmra.mxu0 %v5026
      %v5206 = vpop.f32.mrf.mxu0
      %v5207 = vadd.f32 %v4999, %v5206
      %v5208 = vpop.f32.mrf.mxu0
      %5209 = vmatprep.mubr.f32.mxu0 0.0
      %5210 = vmatmul.mubr.f32.gmra.mxu0 %v5029
      %v5211 = vpop.f32.mrf.mxu0
      %v5212 = vadd.f32 %v4999, %v5211
      %v5213 = vpop.f32.mrf.mxu0
      %5214 = vmatprep.mubr.f32.mxu0 0.0
      %5215 = vmatmul.mubr.f32.gmra.mxu0 %v5032
      %v5216 = vpop.f32.mrf.mxu0
      %v5217 = vadd.f32 %v4999, %v5216
      %v5218 = vpop.f32.mrf.mxu0
      %5219 = vmatprep.mubr.f32.mxu0 0.0
      %5220 = vmatmul.mubr.f32.gmra.mxu0 %v5035
      %v5221 = vpop.f32.mrf.mxu0
      %v5222 = vadd.f32 %v4999, %v5221
      %v5223 = vpop.f32.mrf.mxu0
      %5224 = vmatprep.mubr.f32.mxu0 0.0
      %5225 = vmatmul.mubr.f32.gmra.mxu0 %v5038
      %v5226 = vpop.f32.mrf.mxu0
      %v5227 = vadd.f32 %v4999, %v5226
      %v5228 = vpop.f32.mrf.mxu0
      %5229 = vmatprep.mubr.f32.mxu0 0.0
      %5230 = vmatmul.mubr.f32.gmra.mxu0 %v5041
      %v5231 = vpop.f32.mrf.mxu0
      %v5232 = vadd.f32 %v4999, %v5231
      %v5233 = vpop.f32.mrf.mxu0
      %5234 = vmatprep.mubr.f32.mxu0 0.0
      %5235 = vmatmul.mubr.f32.gmra.mxu0 %v5044
      %v5236 = vpop.f32.mrf.mxu0
      %v5237 = vadd.f32 %v4999, %v5236
      %v5238 = vpop.f32.mrf.mxu0
      %5239 = vmatprep.mubr.f32.mxu0 0.0
      %5240 = vmatmul.mubr.f32.gmra.mxu0 %v5047
      %v5241 = vpop.f32.mrf.mxu0
      %v5242 = vadd.f32 %v4999, %v5241
      %v5243 = vpop.f32.mrf.mxu0
      %5244 = vmatprep.mubr.f32.mxu0 0.0
      %5245 = vmatmul.mubr.f32.gmra.mxu0 %v5050
      %v5246 = vpop.f32.mrf.mxu0
      %v5247 = vadd.f32 %v4999, %v5246
      %v5248 = vpop.f32.mrf.mxu0
      %5249 = vmatprep.mubr.f32.mxu0 0.0
      %5250 = vmatmul.mubr.f32.gmra.mxu0 %v5053
      %v5251 = vpop.f32.mrf.mxu0
      %v5252 = vadd.f32 %v4999, %v5251
      %v5253 = vpop.f32.mrf.mxu0
      %5254 = vmatprep.mubr.f32.mxu0 0.0
      %5255 = vmatmul.mubr.f32.gmra.mxu0 %v5056
      %v5256 = vpop.f32.mrf.mxu0
      %v5257 = vadd.f32 %v4999, %v5256
      %v5258 = vpop.f32.mrf.mxu0
      %5259 = vmatprep.mubr.f32.mxu0 0.0
      %5260 = vmatmul.mubr.f32.gmra.mxu0 %v5059
      %v5261 = vpop.f32.mrf.mxu0
      %v5262 = vadd.f32 %v4999, %v5261
      %v5263 = vpop.f32.mrf.mxu0
      %5264 = vmatprep.mubr.f32.mxu0 0.0
      %5265 = vmatmul.mubr.f32.gmra.mxu0 %v5062
      %v5266 = vpop.f32.mrf.mxu0
      %v5267 = vadd.f32 %v4999, %v5266
      %v5268 = vpop.f32.mrf.mxu0
      %5269 = vmatprep.mubr.f32.mxu0 0.0
      %5270 = vmatmul.mubr.f32.gmra.mxu0 %v5065
      %v5271 = vpop.f32.mrf.mxu0
      %v5272 = vadd.f32 %v4999, %v5271
      %v5273 = vpop.f32.mrf.mxu0
      %5274 = vmatprep.mubr.f32.mxu0 0.0
      %5275 = vmatmul.mubr.f32.gmra.mxu0 %v5068
      %v5276 = vpop.f32.mrf.mxu0
      %v5277 = vadd.f32 %v4999, %v5276
      %v5278 = vpop.f32.mrf.mxu0
      %5279 = vmatprep.mubr.f32.mxu0 0.0
      %5280 = vmatmul.mubr.f32.gmra.mxu0 %v5071
      %v5281 = vpop.f32.mrf.mxu0
      %v5282 = vadd.f32 %v4999, %v5281
      %v5283 = vpop.f32.mrf.mxu0
      %5284 = vmatprep.mubr.f32.mxu0 0.0
      %5285 = vmatmul.mubr.f32.gmra.mxu0 %v5074
      %v5286 = vpop.f32.mrf.mxu0
      %v5287 = vadd.f32 %v4999, %v5286
      %v5288 = vpop.f32.mrf.mxu0
      %5289 = vmatprep.mubr.f32.mxu0 0.0
      %5290 = vmatmul.mubr.f32.gmra.mxu0 %v5077
      %v5291 = vpop.f32.mrf.mxu0
      %v5292 = vadd.f32 %v4999, %v5291
      %v5293 = vpop.f32.mrf.mxu0
      %5294 = vmatprep.mubr.f32.mxu0 0.0
      %5295 = vmatmul.mubr.f32.gmra.mxu0 %v5080
      %v5296 = vpop.f32.mrf.mxu0
      %v5297 = vadd.f32 %v4999, %v5296
      %v5298 = vpop.f32.mrf.mxu0
      %5299 = vmatprep.mubr.f32.mxu0 0.0
      %5300 = vmatmul.mubr.f32.gmra.mxu0 %v5083
      %v5301 = vpop.f32.mrf.mxu0
      %v5302 = vadd.f32 %v4999, %v5301
      %v5303 = vpop.f32.mrf.mxu0
      %5304 = vmatprep.mubr.f32.mxu0 0.0
      %5305 = vmatmul.mubr.f32.gmra.mxu0 %v5086
      %v5306 = vpop.f32.mrf.mxu0
      %v5307 = vadd.f32 %v4999, %v5306
      %v5308 = vpop.f32.mrf.mxu0
      %5309 = vmatprep.mubr.f32.mxu0 0.0
      %5310 = vmatmul.mubr.f32.gmra.mxu0 %v5089
      %v5311 = vpop.f32.mrf.mxu0
      %v5312 = vadd.f32 %v4999, %v5311
      %v5313 = vpop.f32.mrf.mxu0
      %5314 = vmatprep.mubr.f32.mxu0 0.0
      %5315 = vmatmul.mubr.f32.gmra.mxu0 %v5092
      %v5316 = vpop.f32.mrf.mxu0
      %v5317 = vadd.f32 %v4999, %v5316
      %v5318 = vpop.f32.mrf.mxu0
      %5319 = vmatprep.mubr.f32.mxu0 0.0
      %5320 = vmatmul.mubr.f32.gmra.mxu0 %v5095
      %v5321 = vpop.f32.mrf.mxu0
      %v5322 = vadd.f32 %v4999, %v5321
      %v5323 = vpop.f32.mrf.mxu0
      %5324 = vdwg.mxu0
      %v5325 = vld [vmem:[%s4] sm:$0x1]
      %v5327 = vlaneseq
      %v5328 = vshrl.u32 %v5327, 7
      %v5329 = vsub.s32 0, %v5328
      %v5330 = vrot.slane %v5325, %v5329
      %v5332 = vadd.f32 %v4929, %v5330
      %v5333 = vadd.f32 %v4930, %v5330
      %v5334 = vadd.f32 %v4931, %v5330
      %v5335 = vadd.f32 %v4932, %v5330
      %v5336 = vadd.f32 %v4933, %v5330
      %v5337 = vadd.f32 %v4934, %v5330
      %v5338 = vadd.f32 %v4935, %v5330
      %v5339 = vadd.f32 %v4936, %v5330
      %v5340 = vadd.f32 %v4937, %v5330
      %v5341 = vadd.f32 %v4938, %v5330
      %v5342 = vadd.f32 %v4939, %v5330
      %v5343 = vadd.f32 %v4940, %v5330
      %v5344 = vadd.f32 %v4941, %v5330
      %v5345 = vadd.f32 %v4942, %v5330
      %v5346 = vadd.f32 %v4943, %v5330
      %v5347 = vadd.f32 %v4944, %v5330
      %v5348 = vadd.f32 %v4945, %v5330
      %v5349 = vadd.f32 %v4946, %v5330
      %v5350 = vadd.f32 %v4947, %v5330
      %v5351 = vadd.f32 %v4948, %v5330
      %v5352 = vadd.f32 %v4949, %v5330
      %v5353 = vadd.f32 %v4950, %v5330
      %v5354 = vadd.f32 %v4951, %v5330
      %v5355 = vadd.f32 %v4952, %v5330
      %v5356 = vadd.f32 %v4953, %v5330
      %v5357 = vadd.f32 %v4954, %v5330
      %v5358 = vadd.f32 %v4955, %v5330
      %v5359 = vadd.f32 %v4956, %v5330
      %v5360 = vadd.f32 %v4957, %v5330
      %v5361 = vadd.f32 %v4958, %v5330
      %v5362 = vadd.f32 %v4959, %v5330
      %v5363 = vadd.f32 %v4960, %v5330
      %v5364 = vadd.f32 %v5332, %v5167
      %v5365 = vadd.f32 %v5333, %v5172
      %v5366 = vadd.f32 %v5334, %v5177
      %v5367 = vadd.f32 %v5335, %v5182
      %v5368 = vadd.f32 %v5336, %v5187
      %v5369 = vadd.f32 %v5337, %v5192
      %v5370 = vadd.f32 %v5338, %v5197
      %v5371 = vadd.f32 %v5339, %v5202
      %v5372 = vadd.f32 %v5340, %v5207
      %v5373 = vadd.f32 %v5341, %v5212
      %v5374 = vadd.f32 %v5342, %v5217
      %v5375 = vadd.f32 %v5343, %v5222
      %v5376 = vadd.f32 %v5344, %v5227
      %v5377 = vadd.f32 %v5345, %v5232
      %v5378 = vadd.f32 %v5346, %v5237
      %v5379 = vadd.f32 %v5347, %v5242
      %v5380 = vadd.f32 %v5348, %v5247
      %v5381 = vadd.f32 %v5349, %v5252
      %v5382 = vadd.f32 %v5350, %v5257
      %v5383 = vadd.f32 %v5351, %v5262
      %v5384 = vadd.f32 %v5352, %v5267
      %v5385 = vadd.f32 %v5353, %v5272
      %v5386 = vadd.f32 %v5354, %v5277
      %v5387 = vadd.f32 %v5355, %v5282
      %v5388 = vadd.f32 %v5356, %v5287
      %v5389 = vadd.f32 %v5357, %v5292
      %v5390 = vadd.f32 %v5358, %v5297
      %v5391 = vadd.f32 %v5359, %v5302
      %v5392 = vadd.f32 %v5360, %v5307
      %v5393 = vadd.f32 %v5361, %v5312
      %v5394 = vadd.f32 %v5362, %v5317
      %v5395 = vadd.f32 %v5363, %v5322
      %v5396 = vmax.f32 %v5364, 0.0
      %v5397 = vmax.f32 %v5365, 0.0
      %v5398 = vmax.f32 %v5366, 0.0
      %v5399 = vmax.f32 %v5367, 0.0
      %v5400 = vmax.f32 %v5368, 0.0
      %v5401 = vmax.f32 %v5369, 0.0
      %v5402 = vmax.f32 %v5370, 0.0
      %v5403 = vmax.f32 %v5371, 0.0
      %v5404 = vmax.f32 %v5372, 0.0
      %v5405 = vmax.f32 %v5373, 0.0
      %v5406 = vmax.f32 %v5374, 0.0
      %v5407 = vmax.f32 %v5375, 0.0
      %v5408 = vmax.f32 %v5376, 0.0
      %v5409 = vmax.f32 %v5377, 0.0
      %v5410 = vmax.f32 %v5378, 0.0
      %v5411 = vmax.f32 %v5379, 0.0
      %v5412 = vmax.f32 %v5380, 0.0
      %v5413 = vmax.f32 %v5381, 0.0
      %v5414 = vmax.f32 %v5382, 0.0
      %v5415 = vmax.f32 %v5383, 0.0
      %v5416 = vmax.f32 %v5384, 0.0
      %v5417 = vmax.f32 %v5385, 0.0
      %v5418 = vmax.f32 %v5386, 0.0
      %v5419 = vmax.f32 %v5387, 0.0
      %v5420 = vmax.f32 %v5388, 0.0
      %v5421 = vmax.f32 %v5389, 0.0
      %v5422 = vmax.f32 %v5390, 0.0
      %v5423 = vmax.f32 %v5391, 0.0
      %v5424 = vmax.f32 %v5392, 0.0
      %v5425 = vmax.f32 %v5393, 0.0
      %v5426 = vmax.f32 %v5394, 0.0
      %v5427 = vmax.f32 %v5395, 0.0
      %5428 = vst.msk [vmem:[%s278] sm:$0xff] %vm664, %v5396
      %5429 = vst.msk [vmem:[%s278 + $0x8] sm:$0xff] %vm664, %v5397
      %5430 = vst.msk [vmem:[%s278 + $0x10] sm:$0xff] %vm664, %v5398
      %5431 = vst.msk [vmem:[%s278 + $0x18] sm:$0xff] %vm664, %v5399
      %5432 = vst.msk [vmem:[%s278 + $0x20] sm:$0xff] %vm664, %v5400
      %5433 = vst.msk [vmem:[%s278 + $0x28] sm:$0xff] %vm664, %v5401
      %5434 = vst.msk [vmem:[%s278 + $0x30] sm:$0xff] %vm664, %v5402
      %5435 = vst.msk [vmem:[%s278 + $0x38] sm:$0xff] %vm664, %v5403
      %5436 = vst.msk [vmem:[%s278 + $0x40] sm:$0xff] %vm664, %v5404
      %5437 = vst.msk [vmem:[%s278 + $0x48] sm:$0xff] %vm664, %v5405
      %5438 = vst.msk [vmem:[%s278 + $0x50] sm:$0xff] %vm664, %v5406
      %5439 = vst.msk [vmem:[%s278 + $0x58] sm:$0xff] %vm664, %v5407
      %5440 = vst.msk [vmem:[%s278 + $0x60] sm:$0xff] %vm664, %v5408
      %5441 = vst.msk [vmem:[%s278 + $0x68] sm:$0xff] %vm664, %v5409
      %5442 = vst.msk [vmem:[%s278 + $0x70] sm:$0xff] %vm664, %v5410
      %5443 = vst.msk [vmem:[%s278 + $0x78] sm:$0xff] %vm664, %v5411
      %5444 = vst.msk [vmem:[%s278 + $0x80] sm:$0xff] %vm664, %v5412
      %5445 = vst.msk [vmem:[%s278 + $0x88] sm:$0xff] %vm664, %v5413
      %5446 = vst.msk [vmem:[%s278 + $0x90] sm:$0xff] %vm664, %v5414
      %5447 = vst.msk [vmem:[%s278 + $0x98] sm:$0xff] %vm664, %v5415
      %5448 = vst.msk [vmem:[%s278 + $0xa0] sm:$0xff] %vm664, %v5416
      %5449 = vst.msk [vmem:[%s278 + $0xa8] sm:$0xff] %vm664, %v5417
      %5450 = vst.msk [vmem:[%s278 + $0xb0] sm:$0xff] %vm664, %v5418
      %5451 = vst.msk [vmem:[%s278 + $0xb8] sm:$0xff] %vm664, %v5419
      %5452 = vst.msk [vmem:[%s278 + $0xc0] sm:$0xff] %vm664, %v5420
      %5453 = vst.msk [vmem:[%s278 + $0xc8] sm:$0xff] %vm664, %v5421
      %5454 = vst.msk [vmem:[%s278 + $0xd0] sm:$0xff] %vm664, %v5422
      %5455 = vst.msk [vmem:[%s278 + $0xd8] sm:$0xff] %vm664, %v5423
      %5456 = vst.msk [vmem:[%s278 + $0xe0] sm:$0xff] %vm664, %v5424
      %5457 = vst.msk [vmem:[%s278 + $0xe8] sm:$0xff] %vm664, %v5425
      %5458 = vst.msk [vmem:[%s278 + $0xf0] sm:$0xff] %vm664, %v5426
      %5459 = vst.msk [vmem:[%s278 + $0xf8] sm:$0xff] %vm664, %v5427
      %p5460 = scmp.lt.s32.totalorder %s18, 1
      %s5461 = scalar_select %p5460, %s18, 1
      %s5462 = smul.addr %s5461, 32
      %s5463 = smul.addr %s5462, 8
      %s5464 = scalar_lea.vmem %s7, %s5463
      // Predicated region
      $region49: #{tpu_custom_call.1} parent=47 // pred_check
        %p5465 = pneg %p188
      $region50: #{tpu_custom_call.1} parent=47 // pred_check_branch
        %5467 = sbr.rel (%p5465) target = $region52
      $region51: #{tpu_custom_call.1} parent=47 // pred_region
        _
      $region52: #{tpu_custom_call.1} parent=47 // pred_fallthru
        _
    $region48: #{tpu_custom_call.1} parent=5 // pred_fallthru
      _
    %p5468 = scmp.le.s32.totalorder 2, %s13
    // Predicated region
    $region53: #{tpu_custom_call.1} parent=5 // pred_check
      %p5469 = pneg %p5468
    $region54: #{tpu_custom_call.1} parent=5 // pred_check_branch
      %5471 = sbr.rel (%p5469) target = $region56
    $region55: #{tpu_custom_call.1} parent=5 // pred_region
      %s5472 = ssub.s32 %s13, 2
      // Predicated region
      $region57: #{tpu_custom_call.1} parent=55 // pred_check
        %p5473 = pneg %p194
      $region58: #{tpu_custom_call.1} parent=55 // pred_check_branch
        %5475 = sbr.rel (%p5473) target = $region60
      $region59: #{tpu_custom_call.1} parent=55 // pred_region
        %p5476 = scmp.lt.s32.totalorder %s19, 1
        %s5477 = scalar_select %p5476, %s19, 1
        %s5478 = smul.addr %s5477, 32
        %s5479 = smul.addr %s5478, 8
        %s5480 = scalar_lea.vmem %s7, %s5479
      $region60: #{tpu_custom_call.1} parent=55 // pred_fallthru
        _
    $region56: #{tpu_custom_call.1} parent=5 // pred_fallthru
      _
  $region6: #{tpu_custom_call.1} parent=0 // loop_footer
    %s17 = sadd.s32 1, %s13
  $region7: #{tpu_custom_call.1} parent=0 // loop_footer_branch
    %12 = sbr.rel target = $region3
  $region8: #{tpu_custom_call.1} parent=0 // loop_exit
    _

</llo_original>
